<compile_context>
chip_gen: v5e
topology: v5e:2x2
jax: 0.10.0
libtpu: 0.0.40
codegen_flags: <defaults>
</compile_context>

<pallas_src>
import numpy as np
import jax
import jax.numpy as jnp
from jax.experimental import pallas as pl
from jax.experimental.pallas import tpu as pltpu

C = 64      # channels
K = 3       # conv kernel size
R = 5       # number of residual blocks
NC = 2      # num classes
EPS = 1e-5  # BatchNorm eps


# ----------------------------- Pallas kernel --------------------------------
def _rawnet_kernel(x_ref,        # (BT, T, K)      f32   stem im2col, BT sequences
                   stem_w_ref,   # (K, C)          f32   BN-folded stem taps
                   stem_b_ref,   # (1, C)          f32
                   res_w_ref,    # (R, 2, K*C, C)  bf16  input-side fused + BN-folded
                   res_b_ref,    # (R, 2, 1, C)    f32
                   pooled_ref):  # (BT, C)         f32   per-sequence time averages
    BT, T, _ = x_ref.shape
    rows = BT * T

    # --- stem: Conv1d(1->64, k=3, stride=3, pad=1) + BN(folded) + ReLU -------
    # Three VPU broadcast FMAs on the flattened (rows, K) im2col.
    x = x_ref[...].reshape(rows, K)
    sw = stem_w_ref[...]
    h = (x[:, 0:1] * sw[0:1, :]
         + x[:, 1:2] * sw[1:2, :]
         + x[:, 2:3] * sw[2:3, :]
         + stem_b_ref[...])
    h = jnp.maximum(h, 0.0)                                   # (rows, C) f32

    # Loop-invariant sequence-boundary masks (hoisted out of the conv loop):
    # row i belongs to sequence i // T; shifts must not leak across sequences.
    t_in_seq = jax.lax.broadcasted_iota(jnp.int32, (rows, 1), 0) % T
    m_prev = (t_in_seq != 0).astype(jnp.float32)              # zero h[t-1] at t == 0
    m_next = (t_in_seq != T - 1).astype(jnp.float32)          # zero h[t+1] at t == T-1
    zero_row = jnp.zeros((1, C), jnp.float32)

    def conv3(h_in, w_cat, bias):
        # y[t] = [h[t-1] | h[t] | h[t+1]] @ [w0; w1; w2]   ("same" padding)
        # Single 192-deep bf16 MXU matmul with a lane-dense (rows, 64) output.
        hp = jnp.concatenate([zero_row, h_in[:-1, :]], axis=0) * m_prev
        hn = jnp.concatenate([h_in[1:, :], zero_row], axis=0) * m_next
        h_cat = jnp.concatenate([hp, h_in, hn], axis=1).astype(jnp.bfloat16)
        return jnp.dot(h_cat, w_cat, preferred_element_type=jnp.float32) + bias

    # --- body: 5 residual blocks (residual path kept in f32) -----------------
    for r in range(R):
        y = jnp.maximum(conv3(h, res_w_ref[r, 0], res_b_ref[r, 0]), 0.0)
        y = conv3(y, res_w_ref[r, 1], res_b_ref[r, 1])
        h = jnp.maximum(y + h, 0.0)

    # --- AdaptiveAvgPool1d(1): per-sequence time reduction -------------------
    pooled_ref[...] = jnp.sum(h.reshape(BT, T, C), axis=1) * (1.0 / T)

    # TODO(synk): Dropout(p=0.3) omitted — identity in eval/inference mode.
    # The final Linear(64 -> 2) is done outside the kernel (denser output slab).


# ------------------------------ parameters ----------------------------------
def _init_bn(key, c):
    k = jax.random.split(key, 4)
    gamma = jax.random.uniform(k[0], (c,), jnp.float32, 0.8, 1.2)
    beta = 0.1 * jax.random.normal(k[1], (c,), jnp.float32)
    mean = 0.1 * jax.random.normal(k[2], (c,), jnp.float32)
    var = jax.random.uniform(k[3], (c,), jnp.float32, 0.5, 1.5)
    return gamma, beta, mean, var


def init_params(key):
    keys = jax.random.split(key, 3 + R)
    p = {}
    kw, kb = jax.random.split(keys[0])
    bound = float(1.0 / np.sqrt(1 * K))
    p['stem_w'] = jax.random.uniform(kw, (C, 1, K), jnp.float32, -bound, bound)
    p['stem_b'] = jax.random.uniform(kb, (C,), jnp.float32, -bound, bound)
    p['stem_bn'] = _init_bn(keys[1], C)
    p['blocks'] = []
    for r in range(R):
        bk = jax.random.split(keys[2 + r], 6)
        bound = float(1.0 / np.sqrt(C * K))
        p['blocks'].append(dict(
            w1=jax.random.uniform(bk[0], (C, C, K), jnp.float32, -bound, bound),
            b1=jax.random.uniform(bk[1], (C,), jnp.float32, -bound, bound),
            bn1=_init_bn(bk[2], C),
            w2=jax.random.uniform(bk[3], (C, C, K), jnp.float32, -bound, bound),
            b2=jax.random.uniform(bk[4], (C,), jnp.float32, -bound, bound),
            bn2=_init_bn(bk[5], C),
        ))
    kw, kb = jax.random.split(keys[2 + R])
    bound = float(1.0 / np.sqrt(C))
    p['fc_w'] = jax.random.uniform(kw, (NC, C), jnp.float32, -bound, bound)
    p['fc_b'] = jax.random.uniform(kb, (NC,), jnp.float32, -bound, bound)
    return p


def pack_params(p):
    """Fold eval-mode BatchNorm into the convs and pack the fused conv weights
    for INPUT-side fusion: W_cat[k*C + ci, co] = w[co, ci, k] * bn_scale[co],
    so  y = [h[t-1] | h[t] | h[t+1]] @ W_cat.  Conv weights are cast to bf16."""
    def fold(w_t, b, bn):   # w_t has Cout on the last axis
        gamma, beta, mean, var = bn
        scale = gamma / jnp.sqrt(var + EPS)
        return w_t * scale, scale * (b - mean) + beta

    stem_w_t = jnp.transpose(p['stem_w'][:, 0, :], (1, 0))           # (K, C)
    stem_w_f, stem_b_f = fold(stem_w_t, p['stem_b'], p['stem_bn'])

    res_w, res_b = [], []
    for blk in p['blocks']:
        ws, bs = [], []
        for w, b, bn in ((blk['w1'], blk['b1'], blk['bn1']),
                         (blk['w2'], blk['b2'], blk['bn2'])):
            w_t = jnp.transpose(w, (2, 1, 0))                        # (K, Cin, Cout)
            w_f, b_f = fold(w_t, b, bn)
            ws.append(w_f.reshape(K * C, C))                         # rows: k-major, Cin minor
            bs.append(b_f.reshape(1, C))
        res_w.append(jnp.stack(ws))                                  # (2, K*C, C)
        res_b.append(jnp.stack(bs))                                  # (2, 1, C)

    return dict(
        stem_w=stem_w_f,                                             # (K, C)        f32
        stem_b=stem_b_f.reshape(1, C),                               # (1, C)        f32
        res_w=jnp.stack(res_w).astype(jnp.bfloat16),                 # (R, 2, K*C, C) bf16
        res_b=jnp.stack(res_b),                                      # (R, 2, 1, C)  f32
        fc_w=jnp.transpose(p['fc_w']),                               # (C, NC)       f32
        fc_b=p['fc_b'].reshape(1, NC))                               # (1, NC)       f32


# ------------------------------ wrapper --------------------------------------
def _pick_block_batch(B, T):
    """Sequences per grid step: multiple of 8, aiming for ~2K flattened rows."""
    target = (2048 + T - 1) // T
    bt = max(8, min(64, target))
    bt = ((bt + 7) // 8) * 8
    b_pad8 = ((B + 7) // 8) * 8
    return max(8, min(bt, b_pad8))


def rawnet_forward_pallas(x, packed, block_batch=None):
    # x: (B, 1, L)  — PyTorch NCL
    B, cin, L = x.shape
    assert cin == 1
    T = (L + 2 - K) // 3 + 1                 # stem output length (stride 3, pad 1)
    assert 3 * T <= L + 2

    BT = block_batch if block_batch is not None else _pick_block_batch(B, T)
    Bp = ((B + BT - 1) // BT) * BT           # pad batch to a multiple of BT

    # stride-3 / pad-1 stem im2col: non-overlapping width-3 windows of padded x.
    # NOTE: for very long T this (.., T, 3) block is the dominant VMEM consumer
    # (lane padding); fine at these shapes.  TODO(synk): lane-dense stem layout
    # + time tiling for long sequences.
    xpad = jnp.pad(x[:, 0, :], ((0, Bp - B), (1, 1)))
    x_cols = xpad[:, :3 * T].reshape(Bp, T, K).astype(jnp.float32)   # (Bp, T, K)

    pooled = pl.pallas_call(
        _rawnet_kernel,
        out_shape=jax.ShapeDtypeStruct((Bp, C), jnp.float32),
        grid=(Bp // BT,),
        in_specs=[
            pl.BlockSpec((BT, T, K), lambda b: (b, 0, 0)),           # BT sequences / step
            pl.BlockSpec((K, C), lambda b: (0, 0)),                  # weights stay resident
            pl.BlockSpec((1, C), lambda b: (0, 0)),
            pl.BlockSpec((R, 2, K * C, C), lambda b: (0, 0, 0, 0)),
            pl.BlockSpec((R, 2, 1, C), lambda b: (0, 0, 0, 0)),
        ],
        out_specs=pl.BlockSpec((BT, C), lambda b: (b, 0)),
        compiler_params=pltpu.CompilerParams(
            dimension_semantics=("parallel",)),                      # megacore on v7x
    )(x_cols,
      packed['stem_w'], packed['stem_b'],
      packed['res_w'], packed['res_b'])

    # Final Linear(64 -> num_classes) as one XLA matmul outside the kernel.
    return pooled[:B] @ packed['fc_w'] + packed['fc_b']


# --------------------------- pure-JAX reference ------------------------------
def _conv1d(x, w, b, stride, pad):
    y = jax.lax.conv_general_dilated(
        x, w, window_strides=(stride,), padding=[(pad, pad)],
        dimension_numbers=('NCH', 'OIH', 'NCH'))
    return y + b[None, :, None]


def _bn_eval(x, bn):
    gamma, beta, mean, var = bn
    return ((x - mean[None, :, None]) / jnp.sqrt(var[None, :, None] + EPS)
            * gamma[None, :, None] + beta[None, :, None])


def rawnet_forward_ref(x, p):
    h = jax.nn.relu(_bn_eval(_conv1d(x, p['stem_w'], p['stem_b'], 3, 1), p['stem_bn']))
    for blk in p['blocks']:
        y = jax.nn.relu(_bn_eval(_conv1d(h, blk['w1'], blk['b1'], 1, 1), blk['bn1']))
        y = _bn_eval(_conv1d(y, blk['w2'], blk['b2'], 1, 1), blk['bn2'])
        h = jax.nn.relu(y + h)
    pooled = h.mean(axis=2)                                  # AdaptiveAvgPool1d(1) + squeeze
    return pooled @ p['fc_w'].T + p['fc_b']                  # Dropout is identity in eval


# --------------------------------- main ---------------------------------------
if __name__ == "__main__":
    key = jax.random.PRNGKey(0)
    k_param, k_x = jax.random.split(key)

    params = init_params(k_param)
    packed = pack_params(params)

    B, L = 2, 48                       # stem (stride 3) -> T = 16 timesteps
    x = jax.random.normal(k_x, (B, 1, L), jnp.float32)

    out = rawnet_forward_pallas(x, packed)
    out = jax.block_until_ready(out)

    ref = rawnet_forward_ref(x, params)
    np.testing.assert_allclose(np.asarray(out), np.asarray(ref), rtol=2e-2, atol=2e-2)

    print("KERNEL_OK")
</pallas_src>

<mosaic_0001>
module attributes {stable_mosaic.version = 11 : i64} {
  func.func @_rawnet_kernel(%arg0: i32, %arg1: memref<8x16x3xf32, #tpu.memory_space<vmem>>, %arg2: memref<3x64xf32, #tpu.memory_space<vmem>>, %arg3: memref<1x64xf32, #tpu.memory_space<vmem>>, %arg4: memref<5x2x192x64xbf16, #tpu.memory_space<vmem>>, %arg5: memref<5x2x1x64xf32, #tpu.memory_space<vmem>>, %arg6: memref<8x64xf32, #tpu.memory_space<vmem>>) attributes {dimension_semantics = [#tpu.dimension_semantics<parallel>], iteration_bounds = array<i64: 1>, scalar_prefetch = 0 : i64, scratch_operands = 0 : i64, tpu.core_type = #tpu.core_type<tc>, window_params = [{transform_indices = @transform_0, window_bounds = array<i64: 8, 16, 3>}, {pipeline_mode = #tpu.pipeline_mode<synchronous>, transform_indices = @transform_1, window_bounds = array<i64: 3, 64>}, {pipeline_mode = #tpu.pipeline_mode<synchronous>, transform_indices = @transform_2, window_bounds = array<i64: 1, 64>}, {pipeline_mode = #tpu.pipeline_mode<synchronous>, transform_indices = @transform_3, window_bounds = array<i64: 5, 2, 192, 64>}, {pipeline_mode = #tpu.pipeline_mode<synchronous>, transform_indices = @transform_4, window_bounds = array<i64: 5, 2, 1, 64>}, {transform_indices = @transform_5, window_bounds = array<i64: 8, 64>}]} {
    %c0 = arith.constant 0 : index
    %c0_0 = arith.constant 0 : index
    %c0_1 = arith.constant 0 : index
    %0 = vector.load %arg1[%c0, %c0_0, %c0_1] : memref<8x16x3xf32, #tpu.memory_space<vmem>>, vector<8x16x3xf32>
    %1 = vector.shape_cast %0 : vector<8x16x3xf32> to vector<128x3xf32>
    %c0_2 = arith.constant 0 : index
    %c0_3 = arith.constant 0 : index
    %2 = vector.load %arg2[%c0_2, %c0_3] : memref<3x64xf32, #tpu.memory_space<vmem>>, vector<3x64xf32>
    %3 = vector.extract_strided_slice %1 {offsets = [0, 0], sizes = [128, 1], strides = [1, 1]} : vector<128x3xf32> to vector<128x1xf32>
    %4 = vector.extract_strided_slice %2 {offsets = [0, 0], sizes = [1, 64], strides = [1, 1]} : vector<3x64xf32> to vector<1x64xf32>
    %5 = vector.broadcast %3 : vector<128x1xf32> to vector<128x64xf32>
    %6 = vector.broadcast %4 : vector<1x64xf32> to vector<128x64xf32>
    %7 = arith.mulf %5, %6 : vector<128x64xf32>
    %8 = vector.extract_strided_slice %1 {offsets = [0, 1], sizes = [128, 1], strides = [1, 1]} : vector<128x3xf32> to vector<128x1xf32>
    %9 = vector.extract_strided_slice %2 {offsets = [1, 0], sizes = [1, 64], strides = [1, 1]} : vector<3x64xf32> to vector<1x64xf32>
    %10 = vector.broadcast %8 : vector<128x1xf32> to vector<128x64xf32>
    %11 = vector.broadcast %9 : vector<1x64xf32> to vector<128x64xf32>
    %12 = arith.mulf %10, %11 : vector<128x64xf32>
    %13 = arith.addf %7, %12 : vector<128x64xf32>
    %14 = vector.extract_strided_slice %1 {offsets = [0, 2], sizes = [128, 1], strides = [1, 1]} : vector<128x3xf32> to vector<128x1xf32>
    %15 = vector.extract_strided_slice %2 {offsets = [2, 0], sizes = [1, 64], strides = [1, 1]} : vector<3x64xf32> to vector<1x64xf32>
    %16 = vector.broadcast %14 : vector<128x1xf32> to vector<128x64xf32>
    %17 = vector.broadcast %15 : vector<1x64xf32> to vector<128x64xf32>
    %18 = arith.mulf %16, %17 : vector<128x64xf32>
    %19 = arith.addf %13, %18 : vector<128x64xf32>
    %c0_4 = arith.constant 0 : index
    %c0_5 = arith.constant 0 : index
    %20 = vector.load %arg3[%c0_4, %c0_5] : memref<1x64xf32, #tpu.memory_space<vmem>>, vector<1x64xf32>
    %21 = vector.broadcast %20 : vector<1x64xf32> to vector<128x64xf32>
    %22 = arith.addf %19, %21 : vector<128x64xf32>
    %cst = arith.constant 0.000000e+00 : f32
    %23 = vector.broadcast %cst : f32 to vector<128x64xf32>
    %24 = arith.maximumf %22, %23 : vector<128x64xf32>
    %25 = tpu.iota {dimensions = array<i32: 0>} : vector<128x1xi32>
    %c16_i32 = arith.constant 16 : i32
    %c0_i32 = arith.constant 0 : i32
    %26 = arith.cmpi eq, %c16_i32, %c0_i32 : i32
    %c1_i32 = arith.constant 1 : i32
    %27 = arith.select %26, %c1_i32, %c16_i32 : i32
    %28 = vector.broadcast %27 : i32 to vector<128x1xi32>
    %29 = arith.remsi %25, %28 : vector<128x1xi32>
    %c0_i32_6 = arith.constant 0 : i32
    %30 = vector.broadcast %c0_i32_6 : i32 to vector<128x1xi32>
    %31 = arith.cmpi ne, %29, %30 : vector<128x1xi32>
    %c0_i32_7 = arith.constant 0 : i32
    %32 = vector.broadcast %c0_i32_7 : i32 to vector<128x1xi32>
    %33 = arith.cmpi slt, %29, %32 : vector<128x1xi32>
    %c0_i32_8 = arith.constant 0 : i32
    %34 = arith.cmpi slt, %27, %c0_i32_8 : i32
    %35 = vector.broadcast %34 : i1 to vector<128x1xi1>
    %36 = vector.broadcast %35 : vector<128x1xi1> to vector<128x1xi1>
    %37 = arith.xori %33, %36 : vector<128x1xi1>
    %38 = arith.andi %37, %31 : vector<128x1xi1>
    %39 = vector.broadcast %27 : i32 to vector<128x1xi32>
    %40 = arith.addi %29, %39 : vector<128x1xi32>
    %41 = arith.select %38, %40, %29 : vector<128x1xi1>, vector<128x1xi32>
    %c0_i32_9 = arith.constant 0 : i32
    %42 = vector.broadcast %c0_i32_9 : i32 to vector<128x1xi32>
    %43 = arith.cmpi ne, %41, %42 : vector<128x1xi32>
    %44 = arith.extui %43 : vector<128x1xi1> to vector<128x1xi32>
    %45 = arith.sitofp %44 : vector<128x1xi32> to vector<128x1xf32>
    %c15_i32 = arith.constant 15 : i32
    %46 = vector.broadcast %c15_i32 : i32 to vector<128x1xi32>
    %47 = arith.cmpi ne, %41, %46 : vector<128x1xi32>
    %48 = arith.extui %47 : vector<128x1xi1> to vector<128x1xi32>
    %49 = arith.sitofp %48 : vector<128x1xi32> to vector<128x1xf32>
    %cst_10 = arith.constant 0.000000e+00 : f32
    %50 = vector.broadcast %cst_10 : f32 to vector<1x64xf32>
    %c0_11 = arith.constant 0 : index
    %c0_12 = arith.constant 0 : index
    %c0_13 = arith.constant 0 : index
    %c0_14 = arith.constant 0 : index
    %51 = vector.load %arg4[%c0_11, %c0_12, %c0_13, %c0_14] : memref<5x2x192x64xbf16, #tpu.memory_space<vmem>>, vector<1x1x192x64xbf16>
    %52 = vector.shape_cast %51 : vector<1x1x192x64xbf16> to vector<192x64xbf16>
    %c0_15 = arith.constant 0 : index
    %c0_16 = arith.constant 0 : index
    %c0_17 = arith.constant 0 : index
    %c0_18 = arith.constant 0 : index
    %53 = vector.load %arg5[%c0_15, %c0_16, %c0_17, %c0_18] : memref<5x2x1x64xf32, #tpu.memory_space<vmem>>, vector<1x1x1x64xf32>
    %54 = vector.shape_cast %53 : vector<1x1x1x64xf32> to vector<1x64xf32>
    %55 = vector.extract_strided_slice %24 {offsets = [0, 0], sizes = [127, 64], strides = [1, 1]} : vector<128x64xf32> to vector<127x64xf32>
    %56 = tpu.concatenate %50, %55 in 0 : vector<1x64xf32>, vector<127x64xf32> -> vector<128x64xf32>
    %57 = vector.broadcast %45 : vector<128x1xf32> to vector<128x64xf32>
    %58 = arith.mulf %56, %57 : vector<128x64xf32>
    %59 = vector.extract_strided_slice %24 {offsets = [1, 0], sizes = [127, 64], strides = [1, 1]} : vector<128x64xf32> to vector<127x64xf32>
    %60 = tpu.concatenate %59, %50 in 0 : vector<127x64xf32>, vector<1x64xf32> -> vector<128x64xf32>
    %61 = vector.broadcast %49 : vector<128x1xf32> to vector<128x64xf32>
    %62 = arith.mulf %60, %61 : vector<128x64xf32>
    %63 = tpu.concatenate %58, %24, %62 in 1 : vector<128x64xf32>, vector<128x64xf32>, vector<128x64xf32> -> vector<128x192xf32>
    %64 = arith.truncf %63 : vector<128x192xf32> to vector<128x192xbf16>
    %cst_19 = arith.constant dense<0.000000e+00> : vector<128x64xf32>
    %65 = tpu.matmul %64, %52, %cst_19 {dimension_numbers = #tpu.dot_dimension_numbers<[1], [0], [0], [1], [0, 0, 1, 1], [], []>} : vector<128x192xbf16>, vector<192x64xbf16>, vector<128x64xf32> -> vector<128x64xf32>
    %66 = vector.broadcast %54 : vector<1x64xf32> to vector<128x64xf32>
    %67 = arith.addf %65, %66 : vector<128x64xf32>
    %cst_20 = arith.constant 0.000000e+00 : f32
    %68 = vector.broadcast %cst_20 : f32 to vector<128x64xf32>
    %69 = arith.maximumf %67, %68 : vector<128x64xf32>
    %c0_21 = arith.constant 0 : index
    %c1 = arith.constant 1 : index
    %c0_22 = arith.constant 0 : index
    %c0_23 = arith.constant 0 : index
    %70 = vector.load %arg4[%c0_21, %c1, %c0_22, %c0_23] : memref<5x2x192x64xbf16, #tpu.memory_space<vmem>>, vector<1x1x192x64xbf16>
    %71 = vector.shape_cast %70 : vector<1x1x192x64xbf16> to vector<192x64xbf16>
    %c0_24 = arith.constant 0 : index
    %c1_25 = arith.constant 1 : index
    %c0_26 = arith.constant 0 : index
    %c0_27 = arith.constant 0 : index
    %72 = vector.load %arg5[%c0_24, %c1_25, %c0_26, %c0_27] : memref<5x2x1x64xf32, #tpu.memory_space<vmem>>, vector<1x1x1x64xf32>
    %73 = vector.shape_cast %72 : vector<1x1x1x64xf32> to vector<1x64xf32>
    %74 = vector.extract_strided_slice %69 {offsets = [0, 0], sizes = [127, 64], strides = [1, 1]} : vector<128x64xf32> to vector<127x64xf32>
    %75 = tpu.concatenate %50, %74 in 0 : vector<1x64xf32>, vector<127x64xf32> -> vector<128x64xf32>
    %76 = vector.broadcast %45 : vector<128x1xf32> to vector<128x64xf32>
    %77 = arith.mulf %75, %76 : vector<128x64xf32>
    %78 = vector.extract_strided_slice %69 {offsets = [1, 0], sizes = [127, 64], strides = [1, 1]} : vector<128x64xf32> to vector<127x64xf32>
    %79 = tpu.concatenate %78, %50 in 0 : vector<127x64xf32>, vector<1x64xf32> -> vector<128x64xf32>
    %80 = vector.broadcast %49 : vector<128x1xf32> to vector<128x64xf32>
    %81 = arith.mulf %79, %80 : vector<128x64xf32>
    %82 = tpu.concatenate %77, %69, %81 in 1 : vector<128x64xf32>, vector<128x64xf32>, vector<128x64xf32> -> vector<128x192xf32>
    %83 = arith.truncf %82 : vector<128x192xf32> to vector<128x192xbf16>
    %cst_28 = arith.constant dense<0.000000e+00> : vector<128x64xf32>
    %84 = tpu.matmul %83, %71, %cst_28 {dimension_numbers = #tpu.dot_dimension_numbers<[1], [0], [0], [1], [0, 0, 1, 1], [], []>} : vector<128x192xbf16>, vector<192x64xbf16>, vector<128x64xf32> -> vector<128x64xf32>
    %85 = vector.broadcast %73 : vector<1x64xf32> to vector<128x64xf32>
    %86 = arith.addf %84, %85 : vector<128x64xf32>
    %87 = arith.addf %86, %24 : vector<128x64xf32>
    %cst_29 = arith.constant 0.000000e+00 : f32
    %88 = vector.broadcast %cst_29 : f32 to vector<128x64xf32>
    %89 = arith.maximumf %87, %88 : vector<128x64xf32>
    %c1_30 = arith.constant 1 : index
    %c0_31 = arith.constant 0 : index
    %c0_32 = arith.constant 0 : index
    %c0_33 = arith.constant 0 : index
    %90 = vector.load %arg4[%c1_30, %c0_31, %c0_32, %c0_33] : memref<5x2x192x64xbf16, #tpu.memory_space<vmem>>, vector<1x1x192x64xbf16>
    %91 = vector.shape_cast %90 : vector<1x1x192x64xbf16> to vector<192x64xbf16>
    %c1_34 = arith.constant 1 : index
    %c0_35 = arith.constant 0 : index
    %c0_36 = arith.constant 0 : index
    %c0_37 = arith.constant 0 : index
    %92 = vector.load %arg5[%c1_34, %c0_35, %c0_36, %c0_37] : memref<5x2x1x64xf32, #tpu.memory_space<vmem>>, vector<1x1x1x64xf32>
    %93 = vector.shape_cast %92 : vector<1x1x1x64xf32> to vector<1x64xf32>
    %94 = vector.extract_strided_slice %89 {offsets = [0, 0], sizes = [127, 64], strides = [1, 1]} : vector<128x64xf32> to vector<127x64xf32>
    %95 = tpu.concatenate %50, %94 in 0 : vector<1x64xf32>, vector<127x64xf32> -> vector<128x64xf32>
    %96 = vector.broadcast %45 : vector<128x1xf32> to vector<128x64xf32>
    %97 = arith.mulf %95, %96 : vector<128x64xf32>
    %98 = vector.extract_strided_slice %89 {offsets = [1, 0], sizes = [127, 64], strides = [1, 1]} : vector<128x64xf32> to vector<127x64xf32>
    %99 = tpu.concatenate %98, %50 in 0 : vector<127x64xf32>, vector<1x64xf32> -> vector<128x64xf32>
    %100 = vector.broadcast %49 : vector<128x1xf32> to vector<128x64xf32>
    %101 = arith.mulf %99, %100 : vector<128x64xf32>
    %102 = tpu.concatenate %97, %89, %101 in 1 : vector<128x64xf32>, vector<128x64xf32>, vector<128x64xf32> -> vector<128x192xf32>
    %103 = arith.truncf %102 : vector<128x192xf32> to vector<128x192xbf16>
    %cst_38 = arith.constant dense<0.000000e+00> : vector<128x64xf32>
    %104 = tpu.matmul %103, %91, %cst_38 {dimension_numbers = #tpu.dot_dimension_numbers<[1], [0], [0], [1], [0, 0, 1, 1], [], []>} : vector<128x192xbf16>, vector<192x64xbf16>, vector<128x64xf32> -> vector<128x64xf32>
    %105 = vector.broadcast %93 : vector<1x64xf32> to vector<128x64xf32>
    %106 = arith.addf %104, %105 : vector<128x64xf32>
    %cst_39 = arith.constant 0.000000e+00 : f32
    %107 = vector.broadcast %cst_39 : f32 to vector<128x64xf32>
    %108 = arith.maximumf %106, %107 : vector<128x64xf32>
    %c1_40 = arith.constant 1 : index
    %c1_41 = arith.constant 1 : index
    %c0_42 = arith.constant 0 : index
    %c0_43 = arith.constant 0 : index
    %109 = vector.load %arg4[%c1_40, %c1_41, %c0_42, %c0_43] : memref<5x2x192x64xbf16, #tpu.memory_space<vmem>>, vector<1x1x192x64xbf16>
    %110 = vector.shape_cast %109 : vector<1x1x192x64xbf16> to vector<192x64xbf16>
    %c1_44 = arith.constant 1 : index
    %c1_45 = arith.constant 1 : index
    %c0_46 = arith.constant 0 : index
    %c0_47 = arith.constant 0 : index
    %111 = vector.load %arg5[%c1_44, %c1_45, %c0_46, %c0_47] : memref<5x2x1x64xf32, #tpu.memory_space<vmem>>, vector<1x1x1x64xf32>
    %112 = vector.shape_cast %111 : vector<1x1x1x64xf32> to vector<1x64xf32>
    %113 = vector.extract_strided_slice %108 {offsets = [0, 0], sizes = [127, 64], strides = [1, 1]} : vector<128x64xf32> to vector<127x64xf32>
    %114 = tpu.concatenate %50, %113 in 0 : vector<1x64xf32>, vector<127x64xf32> -> vector<128x64xf32>
    %115 = vector.broadcast %45 : vector<128x1xf32> to vector<128x64xf32>
    %116 = arith.mulf %114, %115 : vector<128x64xf32>
    %117 = vector.extract_strided_slice %108 {offsets = [1, 0], sizes = [127, 64], strides = [1, 1]} : vector<128x64xf32> to vector<127x64xf32>
    %118 = tpu.concatenate %117, %50 in 0 : vector<127x64xf32>, vector<1x64xf32> -> vector<128x64xf32>
    %119 = vector.broadcast %49 : vector<128x1xf32> to vector<128x64xf32>
    %120 = arith.mulf %118, %119 : vector<128x64xf32>
    %121 = tpu.concatenate %116, %108, %120 in 1 : vector<128x64xf32>, vector<128x64xf32>, vector<128x64xf32> -> vector<128x192xf32>
    %122 = arith.truncf %121 : vector<128x192xf32> to vector<128x192xbf16>
    %cst_48 = arith.constant dense<0.000000e+00> : vector<128x64xf32>
    %123 = tpu.matmul %122, %110, %cst_48 {dimension_numbers = #tpu.dot_dimension_numbers<[1], [0], [0], [1], [0, 0, 1, 1], [], []>} : vector<128x192xbf16>, vector<192x64xbf16>, vector<128x64xf32> -> vector<128x64xf32>
    %124 = vector.broadcast %112 : vector<1x64xf32> to vector<128x64xf32>
    %125 = arith.addf %123, %124 : vector<128x64xf32>
    %126 = arith.addf %125, %89 : vector<128x64xf32>
    %cst_49 = arith.constant 0.000000e+00 : f32
    %127 = vector.broadcast %cst_49 : f32 to vector<128x64xf32>
    %128 = arith.maximumf %126, %127 : vector<128x64xf32>
    %c2 = arith.constant 2 : index
    %c0_50 = arith.constant 0 : index
    %c0_51 = arith.constant 0 : index
    %c0_52 = arith.constant 0 : index
    %129 = vector.load %arg4[%c2, %c0_50, %c0_51, %c0_52] : memref<5x2x192x64xbf16, #tpu.memory_space<vmem>>, vector<1x1x192x64xbf16>
    %130 = vector.shape_cast %129 : vector<1x1x192x64xbf16> to vector<192x64xbf16>
    %c2_53 = arith.constant 2 : index
    %c0_54 = arith.constant 0 : index
    %c0_55 = arith.constant 0 : index
    %c0_56 = arith.constant 0 : index
    %131 = vector.load %arg5[%c2_53, %c0_54, %c0_55, %c0_56] : memref<5x2x1x64xf32, #tpu.memory_space<vmem>>, vector<1x1x1x64xf32>
    %132 = vector.shape_cast %131 : vector<1x1x1x64xf32> to vector<1x64xf32>
    %133 = vector.extract_strided_slice %128 {offsets = [0, 0], sizes = [127, 64], strides = [1, 1]} : vector<128x64xf32> to vector<127x64xf32>
    %134 = tpu.concatenate %50, %133 in 0 : vector<1x64xf32>, vector<127x64xf32> -> vector<128x64xf32>
    %135 = vector.broadcast %45 : vector<128x1xf32> to vector<128x64xf32>
    %136 = arith.mulf %134, %135 : vector<128x64xf32>
    %137 = vector.extract_strided_slice %128 {offsets = [1, 0], sizes = [127, 64], strides = [1, 1]} : vector<128x64xf32> to vector<127x64xf32>
    %138 = tpu.concatenate %137, %50 in 0 : vector<127x64xf32>, vector<1x64xf32> -> vector<128x64xf32>
    %139 = vector.broadcast %49 : vector<128x1xf32> to vector<128x64xf32>
    %140 = arith.mulf %138, %139 : vector<128x64xf32>
    %141 = tpu.concatenate %136, %128, %140 in 1 : vector<128x64xf32>, vector<128x64xf32>, vector<128x64xf32> -> vector<128x192xf32>
    %142 = arith.truncf %141 : vector<128x192xf32> to vector<128x192xbf16>
    %cst_57 = arith.constant dense<0.000000e+00> : vector<128x64xf32>
    %143 = tpu.matmul %142, %130, %cst_57 {dimension_numbers = #tpu.dot_dimension_numbers<[1], [0], [0], [1], [0, 0, 1, 1], [], []>} : vector<128x192xbf16>, vector<192x64xbf16>, vector<128x64xf32> -> vector<128x64xf32>
    %144 = vector.broadcast %132 : vector<1x64xf32> to vector<128x64xf32>
    %145 = arith.addf %143, %144 : vector<128x64xf32>
    %cst_58 = arith.constant 0.000000e+00 : f32
    %146 = vector.broadcast %cst_58 : f32 to vector<128x64xf32>
    %147 = arith.maximumf %145, %146 : vector<128x64xf32>
    %c2_59 = arith.constant 2 : index
    %c1_60 = arith.constant 1 : index
    %c0_61 = arith.constant 0 : index
    %c0_62 = arith.constant 0 : index
    %148 = vector.load %arg4[%c2_59, %c1_60, %c0_61, %c0_62] : memref<5x2x192x64xbf16, #tpu.memory_space<vmem>>, vector<1x1x192x64xbf16>
    %149 = vector.shape_cast %148 : vector<1x1x192x64xbf16> to vector<192x64xbf16>
    %c2_63 = arith.constant 2 : index
    %c1_64 = arith.constant 1 : index
    %c0_65 = arith.constant 0 : index
    %c0_66 = arith.constant 0 : index
    %150 = vector.load %arg5[%c2_63, %c1_64, %c0_65, %c0_66] : memref<5x2x1x64xf32, #tpu.memory_space<vmem>>, vector<1x1x1x64xf32>
    %151 = vector.shape_cast %150 : vector<1x1x1x64xf32> to vector<1x64xf32>
    %152 = vector.extract_strided_slice %147 {offsets = [0, 0], sizes = [127, 64], strides = [1, 1]} : vector<128x64xf32> to vector<127x64xf32>
    %153 = tpu.concatenate %50, %152 in 0 : vector<1x64xf32>, vector<127x64xf32> -> vector<128x64xf32>
    %154 = vector.broadcast %45 : vector<128x1xf32> to vector<128x64xf32>
    %155 = arith.mulf %153, %154 : vector<128x64xf32>
    %156 = vector.extract_strided_slice %147 {offsets = [1, 0], sizes = [127, 64], strides = [1, 1]} : vector<128x64xf32> to vector<127x64xf32>
    %157 = tpu.concatenate %156, %50 in 0 : vector<127x64xf32>, vector<1x64xf32> -> vector<128x64xf32>
    %158 = vector.broadcast %49 : vector<128x1xf32> to vector<128x64xf32>
    %159 = arith.mulf %157, %158 : vector<128x64xf32>
    %160 = tpu.concatenate %155, %147, %159 in 1 : vector<128x64xf32>, vector<128x64xf32>, vector<128x64xf32> -> vector<128x192xf32>
    %161 = arith.truncf %160 : vector<128x192xf32> to vector<128x192xbf16>
    %cst_67 = arith.constant dense<0.000000e+00> : vector<128x64xf32>
    %162 = tpu.matmul %161, %149, %cst_67 {dimension_numbers = #tpu.dot_dimension_numbers<[1], [0], [0], [1], [0, 0, 1, 1], [], []>} : vector<128x192xbf16>, vector<192x64xbf16>, vector<128x64xf32> -> vector<128x64xf32>
    %163 = vector.broadcast %151 : vector<1x64xf32> to vector<128x64xf32>
    %164 = arith.addf %162, %163 : vector<128x64xf32>
    %165 = arith.addf %164, %128 : vector<128x64xf32>
    %cst_68 = arith.constant 0.000000e+00 : f32
    %166 = vector.broadcast %cst_68 : f32 to vector<128x64xf32>
    %167 = arith.maximumf %165, %166 : vector<128x64xf32>
    %c3 = arith.constant 3 : index
    %c0_69 = arith.constant 0 : index
    %c0_70 = arith.constant 0 : index
    %c0_71 = arith.constant 0 : index
    %168 = vector.load %arg4[%c3, %c0_69, %c0_70, %c0_71] : memref<5x2x192x64xbf16, #tpu.memory_space<vmem>>, vector<1x1x192x64xbf16>
    %169 = vector.shape_cast %168 : vector<1x1x192x64xbf16> to vector<192x64xbf16>
    %c3_72 = arith.constant 3 : index
    %c0_73 = arith.constant 0 : index
    %c0_74 = arith.constant 0 : index
    %c0_75 = arith.constant 0 : index
    %170 = vector.load %arg5[%c3_72, %c0_73, %c0_74, %c0_75] : memref<5x2x1x64xf32, #tpu.memory_space<vmem>>, vector<1x1x1x64xf32>
    %171 = vector.shape_cast %170 : vector<1x1x1x64xf32> to vector<1x64xf32>
    %172 = vector.extract_strided_slice %167 {offsets = [0, 0], sizes = [127, 64], strides = [1, 1]} : vector<128x64xf32> to vector<127x64xf32>
    %173 = tpu.concatenate %50, %172 in 0 : vector<1x64xf32>, vector<127x64xf32> -> vector<128x64xf32>
    %174 = vector.broadcast %45 : vector<128x1xf32> to vector<128x64xf32>
    %175 = arith.mulf %173, %174 : vector<128x64xf32>
    %176 = vector.extract_strided_slice %167 {offsets = [1, 0], sizes = [127, 64], strides = [1, 1]} : vector<128x64xf32> to vector<127x64xf32>
    %177 = tpu.concatenate %176, %50 in 0 : vector<127x64xf32>, vector<1x64xf32> -> vector<128x64xf32>
    %178 = vector.broadcast %49 : vector<128x1xf32> to vector<128x64xf32>
    %179 = arith.mulf %177, %178 : vector<128x64xf32>
    %180 = tpu.concatenate %175, %167, %179 in 1 : vector<128x64xf32>, vector<128x64xf32>, vector<128x64xf32> -> vector<128x192xf32>
    %181 = arith.truncf %180 : vector<128x192xf32> to vector<128x192xbf16>
    %cst_76 = arith.constant dense<0.000000e+00> : vector<128x64xf32>
    %182 = tpu.matmul %181, %169, %cst_76 {dimension_numbers = #tpu.dot_dimension_numbers<[1], [0], [0], [1], [0, 0, 1, 1], [], []>} : vector<128x192xbf16>, vector<192x64xbf16>, vector<128x64xf32> -> vector<128x64xf32>
    %183 = vector.broadcast %171 : vector<1x64xf32> to vector<128x64xf32>
    %184 = arith.addf %182, %183 : vector<128x64xf32>
    %cst_77 = arith.constant 0.000000e+00 : f32
    %185 = vector.broadcast %cst_77 : f32 to vector<128x64xf32>
    %186 = arith.maximumf %184, %185 : vector<128x64xf32>
    %c3_78 = arith.constant 3 : index
    %c1_79 = arith.constant 1 : index
    %c0_80 = arith.constant 0 : index
    %c0_81 = arith.constant 0 : index
    %187 = vector.load %arg4[%c3_78, %c1_79, %c0_80, %c0_81] : memref<5x2x192x64xbf16, #tpu.memory_space<vmem>>, vector<1x1x192x64xbf16>
    %188 = vector.shape_cast %187 : vector<1x1x192x64xbf16> to vector<192x64xbf16>
    %c3_82 = arith.constant 3 : index
    %c1_83 = arith.constant 1 : index
    %c0_84 = arith.constant 0 : index
    %c0_85 = arith.constant 0 : index
    %189 = vector.load %arg5[%c3_82, %c1_83, %c0_84, %c0_85] : memref<5x2x1x64xf32, #tpu.memory_space<vmem>>, vector<1x1x1x64xf32>
    %190 = vector.shape_cast %189 : vector<1x1x1x64xf32> to vector<1x64xf32>
    %191 = vector.extract_strided_slice %186 {offsets = [0, 0], sizes = [127, 64], strides = [1, 1]} : vector<128x64xf32> to vector<127x64xf32>
    %192 = tpu.concatenate %50, %191 in 0 : vector<1x64xf32>, vector<127x64xf32> -> vector<128x64xf32>
    %193 = vector.broadcast %45 : vector<128x1xf32> to vector<128x64xf32>
    %194 = arith.mulf %192, %193 : vector<128x64xf32>
    %195 = vector.extract_strided_slice %186 {offsets = [1, 0], sizes = [127, 64], strides = [1, 1]} : vector<128x64xf32> to vector<127x64xf32>
    %196 = tpu.concatenate %195, %50 in 0 : vector<127x64xf32>, vector<1x64xf32> -> vector<128x64xf32>
    %197 = vector.broadcast %49 : vector<128x1xf32> to vector<128x64xf32>
    %198 = arith.mulf %196, %197 : vector<128x64xf32>
    %199 = tpu.concatenate %194, %186, %198 in 1 : vector<128x64xf32>, vector<128x64xf32>, vector<128x64xf32> -> vector<128x192xf32>
    %200 = arith.truncf %199 : vector<128x192xf32> to vector<128x192xbf16>
    %cst_86 = arith.constant dense<0.000000e+00> : vector<128x64xf32>
    %201 = tpu.matmul %200, %188, %cst_86 {dimension_numbers = #tpu.dot_dimension_numbers<[1], [0], [0], [1], [0, 0, 1, 1], [], []>} : vector<128x192xbf16>, vector<192x64xbf16>, vector<128x64xf32> -> vector<128x64xf32>
    %202 = vector.broadcast %190 : vector<1x64xf32> to vector<128x64xf32>
    %203 = arith.addf %201, %202 : vector<128x64xf32>
    %204 = arith.addf %203, %167 : vector<128x64xf32>
    %cst_87 = arith.constant 0.000000e+00 : f32
    %205 = vector.broadcast %cst_87 : f32 to vector<128x64xf32>
    %206 = arith.maximumf %204, %205 : vector<128x64xf32>
    %c4 = arith.constant 4 : index
    %c0_88 = arith.constant 0 : index
    %c0_89 = arith.constant 0 : index
    %c0_90 = arith.constant 0 : index
    %207 = vector.load %arg4[%c4, %c0_88, %c0_89, %c0_90] : memref<5x2x192x64xbf16, #tpu.memory_space<vmem>>, vector<1x1x192x64xbf16>
    %208 = vector.shape_cast %207 : vector<1x1x192x64xbf16> to vector<192x64xbf16>
    %c4_91 = arith.constant 4 : index
    %c0_92 = arith.constant 0 : index
    %c0_93 = arith.constant 0 : index
    %c0_94 = arith.constant 0 : index
    %209 = vector.load %arg5[%c4_91, %c0_92, %c0_93, %c0_94] : memref<5x2x1x64xf32, #tpu.memory_space<vmem>>, vector<1x1x1x64xf32>
    %210 = vector.shape_cast %209 : vector<1x1x1x64xf32> to vector<1x64xf32>
    %211 = vector.extract_strided_slice %206 {offsets = [0, 0], sizes = [127, 64], strides = [1, 1]} : vector<128x64xf32> to vector<127x64xf32>
    %212 = tpu.concatenate %50, %211 in 0 : vector<1x64xf32>, vector<127x64xf32> -> vector<128x64xf32>
    %213 = vector.broadcast %45 : vector<128x1xf32> to vector<128x64xf32>
    %214 = arith.mulf %212, %213 : vector<128x64xf32>
    %215 = vector.extract_strided_slice %206 {offsets = [1, 0], sizes = [127, 64], strides = [1, 1]} : vector<128x64xf32> to vector<127x64xf32>
    %216 = tpu.concatenate %215, %50 in 0 : vector<127x64xf32>, vector<1x64xf32> -> vector<128x64xf32>
    %217 = vector.broadcast %49 : vector<128x1xf32> to vector<128x64xf32>
    %218 = arith.mulf %216, %217 : vector<128x64xf32>
    %219 = tpu.concatenate %214, %206, %218 in 1 : vector<128x64xf32>, vector<128x64xf32>, vector<128x64xf32> -> vector<128x192xf32>
    %220 = arith.truncf %219 : vector<128x192xf32> to vector<128x192xbf16>
    %cst_95 = arith.constant dense<0.000000e+00> : vector<128x64xf32>
    %221 = tpu.matmul %220, %208, %cst_95 {dimension_numbers = #tpu.dot_dimension_numbers<[1], [0], [0], [1], [0, 0, 1, 1], [], []>} : vector<128x192xbf16>, vector<192x64xbf16>, vector<128x64xf32> -> vector<128x64xf32>
    %222 = vector.broadcast %210 : vector<1x64xf32> to vector<128x64xf32>
    %223 = arith.addf %221, %222 : vector<128x64xf32>
    %cst_96 = arith.constant 0.000000e+00 : f32
    %224 = vector.broadcast %cst_96 : f32 to vector<128x64xf32>
    %225 = arith.maximumf %223, %224 : vector<128x64xf32>
    %c4_97 = arith.constant 4 : index
    %c1_98 = arith.constant 1 : index
    %c0_99 = arith.constant 0 : index
    %c0_100 = arith.constant 0 : index
    %226 = vector.load %arg4[%c4_97, %c1_98, %c0_99, %c0_100] : memref<5x2x192x64xbf16, #tpu.memory_space<vmem>>, vector<1x1x192x64xbf16>
    %227 = vector.shape_cast %226 : vector<1x1x192x64xbf16> to vector<192x64xbf16>
    %c4_101 = arith.constant 4 : index
    %c1_102 = arith.constant 1 : index
    %c0_103 = arith.constant 0 : index
    %c0_104 = arith.constant 0 : index
    %228 = vector.load %arg5[%c4_101, %c1_102, %c0_103, %c0_104] : memref<5x2x1x64xf32, #tpu.memory_space<vmem>>, vector<1x1x1x64xf32>
    %229 = vector.shape_cast %228 : vector<1x1x1x64xf32> to vector<1x64xf32>
    %230 = vector.extract_strided_slice %225 {offsets = [0, 0], sizes = [127, 64], strides = [1, 1]} : vector<128x64xf32> to vector<127x64xf32>
    %231 = tpu.concatenate %50, %230 in 0 : vector<1x64xf32>, vector<127x64xf32> -> vector<128x64xf32>
    %232 = vector.broadcast %45 : vector<128x1xf32> to vector<128x64xf32>
    %233 = arith.mulf %231, %232 : vector<128x64xf32>
    %234 = vector.extract_strided_slice %225 {offsets = [1, 0], sizes = [127, 64], strides = [1, 1]} : vector<128x64xf32> to vector<127x64xf32>
    %235 = tpu.concatenate %234, %50 in 0 : vector<127x64xf32>, vector<1x64xf32> -> vector<128x64xf32>
    %236 = vector.broadcast %49 : vector<128x1xf32> to vector<128x64xf32>
    %237 = arith.mulf %235, %236 : vector<128x64xf32>
    %238 = tpu.concatenate %233, %225, %237 in 1 : vector<128x64xf32>, vector<128x64xf32>, vector<128x64xf32> -> vector<128x192xf32>
    %239 = arith.truncf %238 : vector<128x192xf32> to vector<128x192xbf16>
    %cst_105 = arith.constant dense<0.000000e+00> : vector<128x64xf32>
    %240 = tpu.matmul %239, %227, %cst_105 {dimension_numbers = #tpu.dot_dimension_numbers<[1], [0], [0], [1], [0, 0, 1, 1], [], []>} : vector<128x192xbf16>, vector<192x64xbf16>, vector<128x64xf32> -> vector<128x64xf32>
    %241 = vector.broadcast %229 : vector<1x64xf32> to vector<128x64xf32>
    %242 = arith.addf %240, %241 : vector<128x64xf32>
    %243 = arith.addf %242, %206 : vector<128x64xf32>
    %cst_106 = arith.constant 0.000000e+00 : f32
    %244 = vector.broadcast %cst_106 : f32 to vector<128x64xf32>
    %245 = arith.maximumf %243, %244 : vector<128x64xf32>
    %246 = vector.shape_cast %245 : vector<128x64xf32> to vector<8x16x64xf32>
    %cst_107 = arith.constant dense<0.000000e+00> : vector<8x64xf32>
    %247 = vector.multi_reduction <add>, %246, %cst_107 [1] : vector<8x16x64xf32> to vector<8x64xf32>
    %cst_108 = arith.constant 6.250000e-02 : f32
    %248 = vector.broadcast %cst_108 : f32 to vector<8x64xf32>
    %249 = arith.mulf %247, %248 : vector<8x64xf32>
    %c0_109 = arith.constant 0 : index
    %c0_110 = arith.constant 0 : index
    %250 = vector.load %arg6[%c0_109, %c0_110] : memref<8x64xf32, #tpu.memory_space<vmem>>, vector<8x64xf32>
    tpu.vector_store %arg6[%c0_109, %c0_110], %249 {strides = array<i32>} : memref<8x64xf32, #tpu.memory_space<vmem>>, vector<8x64xf32>,
    return
  }
  func.func @transform_0(%arg0: i32) -> (i32, i32, i32) {
    %c0_i32 = arith.constant 0 : i32
    %c0_i32_0 = arith.constant 0 : i32
    %c0_i32_1 = arith.constant 0 : i32
    return %arg0, %c0_i32, %c0_i32_0 : i32, i32, i32
  }
  func.func @transform_1(%arg0: i32) -> (i32, i32) {
    %c0_i32 = arith.constant 0 : i32
    %c0_i32_0 = arith.constant 0 : i32
    %c0_i32_1 = arith.constant 0 : i32
    return %c0_i32, %c0_i32_0 : i32, i32
  }
  func.func @transform_2(%arg0: i32) -> (i32, i32) {
    %c0_i32 = arith.constant 0 : i32
    %c0_i32_0 = arith.constant 0 : i32
    %c0_i32_1 = arith.constant 0 : i32
    return %c0_i32, %c0_i32_0 : i32, i32
  }
  func.func @transform_3(%arg0: i32) -> (i32, i32, i32, i32) {
    %c0_i32 = arith.constant 0 : i32
    %c0_i32_0 = arith.constant 0 : i32
    %c0_i32_1 = arith.constant 0 : i32
    %c0_i32_2 = arith.constant 0 : i32
    %c0_i32_3 = arith.constant 0 : i32
    return %c0_i32, %c0_i32_0, %c0_i32_1, %c0_i32_2 : i32, i32, i32, i32
  }
  func.func @transform_4(%arg0: i32) -> (i32, i32, i32, i32) {
    %c0_i32 = arith.constant 0 : i32
    %c0_i32_0 = arith.constant 0 : i32
    %c0_i32_1 = arith.constant 0 : i32
    %c0_i32_2 = arith.constant 0 : i32
    %c0_i32_3 = arith.constant 0 : i32
    return %c0_i32, %c0_i32_0, %c0_i32_1, %c0_i32_2 : i32, i32, i32, i32
  }
  func.func @transform_5(%arg0: i32) -> (i32, i32) {
    %c0_i32 = arith.constant 0 : i32
    %c0_i32_0 = arith.constant 0 : i32
    return %arg0, %c0_i32 : i32, i32
  }
}

</mosaic_0001>

<llo_original>
// kernel: tpu_custom_call.1
$region0: #{tpu_custom_call.1}
  #allocation0 [shape = 'u32[]', space=smem, size = 0x4, offset = 0x4, fixed_abs, tag = 'smem constant byte address 0x4 - core index']
  #allocation1 [shape = 'u32[72,128]{1,0:T(1,128)}', space=vmem, size = 0x9000, scoped, tag = 'internal scratch']
  %s0 = inlined_call_operand.vmem [shape: f32[8,16,3], index: 0, kind: input, shape index: {}]
  %s1 = inlined_call_operand.vmem [shape: f32[3,64], index: 1, kind: input, shape index: {}]
  %s2 = inlined_call_operand.vmem [shape: f32[1,64], index: 2, kind: input, shape index: {}]
  %s3 = inlined_call_operand.vmem [shape: bf16[5,2,192,64], index: 3, kind: input, shape index: {}]
  %s4 = inlined_call_operand.vmem [shape: f32[5,2,1,64], index: 4, kind: input, shape index: {}]
  %s5 = inlined_call_operand.hbm [shape: f32[8,64], index: 5, kind: output, shape index: {}]
  %s6 = sld [smem:[#allocation0]]
  $region30: #{tpu_custom_call.1} parent=0
    _
  %s8 = ssub.s32 1, %s6
  %s9 = scalar_select 0, %s8, %s6
  $region1: #{tpu_custom_call.1} parent=0
    #allocation2 [shape = 'u8[4096]{0}', space=vmem, size = 0x1000, scoped, tag = 'output window, operand 0, single buffered']
    #allocation3 [shape = 's32[1]{0}', space=sflag, size = 0x4, scoped, tag = 'scoped memory for tpu_custom_call.1']
    %10 = vsyncpa [#allocation3], 0
    // Predicated region
    $region2: #{tpu_custom_call.1} parent=1 // pred_check
      _
    $region3: #{tpu_custom_call.1} parent=1 // pred_check_branch
      %12 = sbr.rel (0) target = $region5
    $region4: #{tpu_custom_call.1} parent=1 // pred_region
      _
    $region5: #{tpu_custom_call.1} parent=1 // pred_fallthru
      _
    // Predicated region
    $region6: #{tpu_custom_call.1} parent=1 // pred_check
      _
    $region7: #{tpu_custom_call.1} parent=1 // pred_check_branch
      %14 = sbr.rel (0) target = $region9
    $region8: #{tpu_custom_call.1} parent=1 // pred_region
      _
    $region9: #{tpu_custom_call.1} parent=1 // pred_fallthru
      _
    // Predicated region
    $region10: #{tpu_custom_call.1} parent=1 // pred_check
      _
    $region11: #{tpu_custom_call.1} parent=1 // pred_check_branch
      %16 = sbr.rel (0) target = $region13
    $region12: #{tpu_custom_call.1} parent=1 // pred_region
      _
    $region13: #{tpu_custom_call.1} parent=1 // pred_fallthru
      _
    // Predicated region
    $region14: #{tpu_custom_call.1} parent=1 // pred_check
      _
    $region15: #{tpu_custom_call.1} parent=1 // pred_check_branch
      %18 = sbr.rel (0) target = $region17
    $region16: #{tpu_custom_call.1} parent=1 // pred_region
      _
    $region17: #{tpu_custom_call.1} parent=1 // pred_fallthru
      _
    // Predicated region
    $region18: #{tpu_custom_call.1} parent=1 // pred_check
      _
    $region19: #{tpu_custom_call.1} parent=1 // pred_check_branch
      %20 = sbr.rel (0) target = $region21
    $region20: #{tpu_custom_call.1} parent=1 // pred_region
      _
    $region21: #{tpu_custom_call.1} parent=1 // pred_fallthru
      _
    %v22 = vld [vmem:[%s0] sm:$0xff]
    %v23 = vld [vmem:[%s0 + $0x8] sm:$0xff]
    %v24 = vld [vmem:[%s0 + $0x10] sm:$0xff]
    %v25 = vld [vmem:[%s0 + $0x18] sm:$0xff]
    %v26 = vld [vmem:[%s0 + $0x20] sm:$0xff]
    %v27 = vld [vmem:[%s0 + $0x28] sm:$0xff]
    %v28 = vld [vmem:[%s0 + $0x30] sm:$0xff]
    %v29 = vld [vmem:[%s0 + $0x38] sm:$0xff]
    %v30 = vld [vmem:[%s0 + $0x40] sm:$0xff]
    %v31 = vld [vmem:[%s0 + $0x48] sm:$0xff]
    %v32 = vld [vmem:[%s0 + $0x50] sm:$0xff]
    %v33 = vld [vmem:[%s0 + $0x58] sm:$0xff]
    %v34 = vld [vmem:[%s0 + $0x60] sm:$0xff]
    %v35 = vld [vmem:[%s0 + $0x68] sm:$0xff]
    %v36 = vld [vmem:[%s0 + $0x70] sm:$0xff]
    %v37 = vld [vmem:[%s0 + $0x78] sm:$0xff]
    %v38 = vld [vmem:[%s1] sm:$0x7]
    %40 = vset.pattern.permute.xlu0 0
    %41 = vperm.xlu0 %40, %v22
    %v42 = vpop.permute.xlu0 %41
    %45 = vset.pattern.permute.xlu0 0
    %46 = vperm.xlu0 %45, %v23
    %v47 = vpop.permute.xlu0 %46
    %50 = vset.pattern.permute.xlu0 0
    %51 = vperm.xlu0 %50, %v24
    %v52 = vpop.permute.xlu0 %51
    %55 = vset.pattern.permute.xlu0 0
    %56 = vperm.xlu0 %55, %v25
    %v57 = vpop.permute.xlu0 %56
    %60 = vset.pattern.permute.xlu0 0
    %61 = vperm.xlu0 %60, %v26
    %v62 = vpop.permute.xlu0 %61
    %65 = vset.pattern.permute.xlu0 0
    %66 = vperm.xlu0 %65, %v27
    %v67 = vpop.permute.xlu0 %66
    %70 = vset.pattern.permute.xlu0 0
    %71 = vperm.xlu0 %70, %v28
    %v72 = vpop.permute.xlu0 %71
    %75 = vset.pattern.permute.xlu0 0
    %76 = vperm.xlu0 %75, %v29
    %v77 = vpop.permute.xlu0 %76
    %80 = vset.pattern.permute.xlu0 0
    %81 = vperm.xlu0 %80, %v30
    %v82 = vpop.permute.xlu0 %81
    %85 = vset.pattern.permute.xlu0 0
    %86 = vperm.xlu0 %85, %v31
    %v87 = vpop.permute.xlu0 %86
    %90 = vset.pattern.permute.xlu0 0
    %91 = vperm.xlu0 %90, %v32
    %v92 = vpop.permute.xlu0 %91
    %95 = vset.pattern.permute.xlu0 0
    %96 = vperm.xlu0 %95, %v33
    %v97 = vpop.permute.xlu0 %96
    %100 = vset.pattern.permute.xlu0 0
    %101 = vperm.xlu0 %100, %v34
    %v102 = vpop.permute.xlu0 %101
    %105 = vset.pattern.permute.xlu0 0
    %106 = vperm.xlu0 %105, %v35
    %v107 = vpop.permute.xlu0 %106
    %110 = vset.pattern.permute.xlu0 0
    %111 = vperm.xlu0 %110, %v36
    %v112 = vpop.permute.xlu0 %111
    %115 = vset.pattern.permute.xlu0 0
    %116 = vperm.xlu0 %115, %v37
    %v117 = vpop.permute.xlu0 %116
    %v119 = vperm.slane %v38, 0
    %v120 = vmul.f32 %v42, %v119
    %v121 = vmul.f32 %v47, %v119
    %v122 = vmul.f32 %v52, %v119
    %v123 = vmul.f32 %v57, %v119
    %v124 = vmul.f32 %v62, %v119
    %v125 = vmul.f32 %v67, %v119
    %v126 = vmul.f32 %v72, %v119
    %v127 = vmul.f32 %v77, %v119
    %v128 = vmul.f32 %v82, %v119
    %v129 = vmul.f32 %v87, %v119
    %v130 = vmul.f32 %v92, %v119
    %v131 = vmul.f32 %v97, %v119
    %v132 = vmul.f32 %v102, %v119
    %v133 = vmul.f32 %v107, %v119
    %v134 = vmul.f32 %v112, %v119
    %v135 = vmul.f32 %v117, %v119
    %136 = vset.pattern.permute.xlu0 1
    %137 = vperm.xlu0 %136, %v22
    %v138 = vpop.permute.xlu0 %137
    %140 = vset.pattern.permute.xlu0 1
    %141 = vperm.xlu0 %140, %v23
    %v142 = vpop.permute.xlu0 %141
    %144 = vset.pattern.permute.xlu0 1
    %145 = vperm.xlu0 %144, %v24
    %v146 = vpop.permute.xlu0 %145
    %148 = vset.pattern.permute.xlu0 1
    %149 = vperm.xlu0 %148, %v25
    %v150 = vpop.permute.xlu0 %149
    %152 = vset.pattern.permute.xlu0 1
    %153 = vperm.xlu0 %152, %v26
    %v154 = vpop.permute.xlu0 %153
    %156 = vset.pattern.permute.xlu0 1
    %157 = vperm.xlu0 %156, %v27
    %v158 = vpop.permute.xlu0 %157
    %160 = vset.pattern.permute.xlu0 1
    %161 = vperm.xlu0 %160, %v28
    %v162 = vpop.permute.xlu0 %161
    %164 = vset.pattern.permute.xlu0 1
    %165 = vperm.xlu0 %164, %v29
    %v166 = vpop.permute.xlu0 %165
    %168 = vset.pattern.permute.xlu0 1
    %169 = vperm.xlu0 %168, %v30
    %v170 = vpop.permute.xlu0 %169
    %172 = vset.pattern.permute.xlu0 1
    %173 = vperm.xlu0 %172, %v31
    %v174 = vpop.permute.xlu0 %173
    %176 = vset.pattern.permute.xlu0 1
    %177 = vperm.xlu0 %176, %v32
    %v178 = vpop.permute.xlu0 %177
    %180 = vset.pattern.permute.xlu0 1
    %181 = vperm.xlu0 %180, %v33
    %v182 = vpop.permute.xlu0 %181
    %184 = vset.pattern.permute.xlu0 1
    %185 = vperm.xlu0 %184, %v34
    %v186 = vpop.permute.xlu0 %185
    %188 = vset.pattern.permute.xlu0 1
    %189 = vperm.xlu0 %188, %v35
    %v190 = vpop.permute.xlu0 %189
    %192 = vset.pattern.permute.xlu0 1
    %193 = vperm.xlu0 %192, %v36
    %v194 = vpop.permute.xlu0 %193
    %196 = vset.pattern.permute.xlu0 1
    %197 = vperm.xlu0 %196, %v37
    %v198 = vpop.permute.xlu0 %197
    %v200 = vperm.slane %v38, 1
    %v201 = vmul.f32 %v138, %v200
    %v202 = vmul.f32 %v142, %v200
    %v203 = vmul.f32 %v146, %v200
    %v204 = vmul.f32 %v150, %v200
    %v205 = vmul.f32 %v154, %v200
    %v206 = vmul.f32 %v158, %v200
    %v207 = vmul.f32 %v162, %v200
    %v208 = vmul.f32 %v166, %v200
    %v209 = vmul.f32 %v170, %v200
    %v210 = vmul.f32 %v174, %v200
    %v211 = vmul.f32 %v178, %v200
    %v212 = vmul.f32 %v182, %v200
    %v213 = vmul.f32 %v186, %v200
    %v214 = vmul.f32 %v190, %v200
    %v215 = vmul.f32 %v194, %v200
    %v216 = vmul.f32 %v198, %v200
    %v217 = vadd.f32 %v120, %v201
    %v218 = vadd.f32 %v121, %v202
    %v219 = vadd.f32 %v122, %v203
    %v220 = vadd.f32 %v123, %v204
    %v221 = vadd.f32 %v124, %v205
    %v222 = vadd.f32 %v125, %v206
    %v223 = vadd.f32 %v126, %v207
    %v224 = vadd.f32 %v127, %v208
    %v225 = vadd.f32 %v128, %v209
    %v226 = vadd.f32 %v129, %v210
    %v227 = vadd.f32 %v130, %v211
    %v228 = vadd.f32 %v131, %v212
    %v229 = vadd.f32 %v132, %v213
    %v230 = vadd.f32 %v133, %v214
    %v231 = vadd.f32 %v134, %v215
    %v232 = vadd.f32 %v135, %v216
    %233 = vset.pattern.permute.xlu0 2
    %234 = vperm.xlu0 %233, %v22
    %v235 = vpop.permute.xlu0 %234
    %237 = vset.pattern.permute.xlu0 2
    %238 = vperm.xlu0 %237, %v23
    %v239 = vpop.permute.xlu0 %238
    %241 = vset.pattern.permute.xlu0 2
    %242 = vperm.xlu0 %241, %v24
    %v243 = vpop.permute.xlu0 %242
    %245 = vset.pattern.permute.xlu0 2
    %246 = vperm.xlu0 %245, %v25
    %v247 = vpop.permute.xlu0 %246
    %249 = vset.pattern.permute.xlu0 2
    %250 = vperm.xlu0 %249, %v26
    %v251 = vpop.permute.xlu0 %250
    %253 = vset.pattern.permute.xlu0 2
    %254 = vperm.xlu0 %253, %v27
    %v255 = vpop.permute.xlu0 %254
    %257 = vset.pattern.permute.xlu0 2
    %258 = vperm.xlu0 %257, %v28
    %v259 = vpop.permute.xlu0 %258
    %261 = vset.pattern.permute.xlu0 2
    %262 = vperm.xlu0 %261, %v29
    %v263 = vpop.permute.xlu0 %262
    %265 = vset.pattern.permute.xlu0 2
    %266 = vperm.xlu0 %265, %v30
    %v267 = vpop.permute.xlu0 %266
    %269 = vset.pattern.permute.xlu0 2
    %270 = vperm.xlu0 %269, %v31
    %v271 = vpop.permute.xlu0 %270
    %273 = vset.pattern.permute.xlu0 2
    %274 = vperm.xlu0 %273, %v32
    %v275 = vpop.permute.xlu0 %274
    %277 = vset.pattern.permute.xlu0 2
    %278 = vperm.xlu0 %277, %v33
    %v279 = vpop.permute.xlu0 %278
    %281 = vset.pattern.permute.xlu0 2
    %282 = vperm.xlu0 %281, %v34
    %v283 = vpop.permute.xlu0 %282
    %285 = vset.pattern.permute.xlu0 2
    %286 = vperm.xlu0 %285, %v35
    %v287 = vpop.permute.xlu0 %286
    %289 = vset.pattern.permute.xlu0 2
    %290 = vperm.xlu0 %289, %v36
    %v291 = vpop.permute.xlu0 %290
    %293 = vset.pattern.permute.xlu0 2
    %294 = vperm.xlu0 %293, %v37
    %v295 = vpop.permute.xlu0 %294
    %v297 = vperm.slane %v38, 2
    %v298 = vmul.f32 %v235, %v297
    %v299 = vmul.f32 %v239, %v297
    %v300 = vmul.f32 %v243, %v297
    %v301 = vmul.f32 %v247, %v297
    %v302 = vmul.f32 %v251, %v297
    %v303 = vmul.f32 %v255, %v297
    %v304 = vmul.f32 %v259, %v297
    %v305 = vmul.f32 %v263, %v297
    %v306 = vmul.f32 %v267, %v297
    %v307 = vmul.f32 %v271, %v297
    %v308 = vmul.f32 %v275, %v297
    %v309 = vmul.f32 %v279, %v297
    %v310 = vmul.f32 %v283, %v297
    %v311 = vmul.f32 %v287, %v297
    %v312 = vmul.f32 %v291, %v297
    %v313 = vmul.f32 %v295, %v297
    %v314 = vadd.f32 %v217, %v298
    %v315 = vadd.f32 %v218, %v299
    %v316 = vadd.f32 %v219, %v300
    %v317 = vadd.f32 %v220, %v301
    %v318 = vadd.f32 %v221, %v302
    %v319 = vadd.f32 %v222, %v303
    %v320 = vadd.f32 %v223, %v304
    %v321 = vadd.f32 %v224, %v305
    %v322 = vadd.f32 %v225, %v306
    %v323 = vadd.f32 %v226, %v307
    %v324 = vadd.f32 %v227, %v308
    %v325 = vadd.f32 %v228, %v309
    %v326 = vadd.f32 %v229, %v310
    %v327 = vadd.f32 %v230, %v311
    %v328 = vadd.f32 %v231, %v312
    %v329 = vadd.f32 %v232, %v313
    %v330 = vld [vmem:[%s2] sm:$0x1]
    %v332 = vperm.slane %v330, 0
    %v334 = vadd.f32 %v314, %v332
    %v335 = vadd.f32 %v315, %v332
    %v336 = vadd.f32 %v316, %v332
    %v337 = vadd.f32 %v317, %v332
    %v338 = vadd.f32 %v318, %v332
    %v339 = vadd.f32 %v319, %v332
    %v340 = vadd.f32 %v320, %v332
    %v341 = vadd.f32 %v321, %v332
    %v342 = vadd.f32 %v322, %v332
    %v343 = vadd.f32 %v323, %v332
    %v344 = vadd.f32 %v324, %v332
    %v345 = vadd.f32 %v325, %v332
    %v346 = vadd.f32 %v326, %v332
    %v347 = vadd.f32 %v327, %v332
    %v348 = vadd.f32 %v328, %v332
    %v349 = vadd.f32 %v329, %v332
    %v350 = vmax.f32 %v334, 0.0
    %v351 = vmax.f32 %v335, 0.0
    %v352 = vmax.f32 %v336, 0.0
    %v353 = vmax.f32 %v337, 0.0
    %v354 = vmax.f32 %v338, 0.0
    %v355 = vmax.f32 %v339, 0.0
    %v356 = vmax.f32 %v340, 0.0
    %v357 = vmax.f32 %v341, 0.0
    %v358 = vmax.f32 %v342, 0.0
    %v359 = vmax.f32 %v343, 0.0
    %v360 = vmax.f32 %v344, 0.0
    %v361 = vmax.f32 %v345, 0.0
    %v362 = vmax.f32 %v346, 0.0
    %v363 = vmax.f32 %v347, 0.0
    %v364 = vmax.f32 %v348, 0.0
    %v365 = vmax.f32 %v349, 0.0
    %v366 = vlaneseq
    %v367 = vshrl.u32 %v366, 7
    %v368 = vadd.s32 %v367, 8
    %v369 = vadd.s32 %v367, 16
    %v370 = vadd.s32 %v367, 24
    %v371 = vadd.s32 %v367, 32
    %v372 = vadd.s32 %v367, 40
    %v373 = vadd.s32 %v367, 48
    %v374 = vadd.s32 %v367, 56
    %v375 = vadd.s32 %v367, 64
    %v376 = vadd.s32 %v367, 72
    %v377 = vadd.s32 %v367, 80
    %v378 = vadd.s32 %v367, 88
    %v379 = vadd.s32 %v367, 96
    %v380 = vadd.s32 %v367, 104
    %v381 = vadd.s32 %v367, 112
    %v382 = vadd.s32 %v367, 120
    %vm383 = vcmp.lt.s32.totalorder %v367, 0
    %v384 = vsub.s32 0, %v367
    %v385 = vsel %vm383, %v384, %v367
    %v386 = vshrl.u32 %v385, 4
    %v387 = vand.u32 %v385, 15
    %v388 = vsub.s32 0, %v387
    %v389 = vsel %vm383, %v388, %v387
    %vm390 = vcmp.lt.s32.totalorder %v368, 0
    %v391 = vsub.s32 0, %v368
    %v392 = vsel %vm390, %v391, %v368
    %v393 = vshrl.u32 %v392, 4
    %v394 = vand.u32 %v392, 15
    %v395 = vsub.s32 0, %v394
    %v396 = vsel %vm390, %v395, %v394
    %vm397 = vcmp.lt.s32.totalorder %v369, 0
    %v398 = vsub.s32 0, %v369
    %v399 = vsel %vm397, %v398, %v369
    %v400 = vshrl.u32 %v399, 4
    %v401 = vand.u32 %v399, 15
    %v402 = vsub.s32 0, %v401
    %v403 = vsel %vm397, %v402, %v401
    %vm404 = vcmp.lt.s32.totalorder %v370, 0
    %v405 = vsub.s32 0, %v370
    %v406 = vsel %vm404, %v405, %v370
    %v407 = vshrl.u32 %v406, 4
    %v408 = vand.u32 %v406, 15
    %v409 = vsub.s32 0, %v408
    %v410 = vsel %vm404, %v409, %v408
    %vm411 = vcmp.lt.s32.totalorder %v371, 0
    %v412 = vsub.s32 0, %v371
    %v413 = vsel %vm411, %v412, %v371
    %v414 = vshrl.u32 %v413, 4
    %v415 = vand.u32 %v413, 15
    %v416 = vsub.s32 0, %v415
    %v417 = vsel %vm411, %v416, %v415
    %vm418 = vcmp.lt.s32.totalorder %v372, 0
    %v419 = vsub.s32 0, %v372
    %v420 = vsel %vm418, %v419, %v372
    %v421 = vshrl.u32 %v420, 4
    %v422 = vand.u32 %v420, 15
    %v423 = vsub.s32 0, %v422
    %v424 = vsel %vm418, %v423, %v422
    %vm425 = vcmp.lt.s32.totalorder %v373, 0
    %v426 = vsub.s32 0, %v373
    %v427 = vsel %vm425, %v426, %v373
    %v428 = vshrl.u32 %v427, 4
    %v429 = vand.u32 %v427, 15
    %v430 = vsub.s32 0, %v429
    %v431 = vsel %vm425, %v430, %v429
    %vm432 = vcmp.lt.s32.totalorder %v374, 0
    %v433 = vsub.s32 0, %v374
    %v434 = vsel %vm432, %v433, %v374
    %v435 = vshrl.u32 %v434, 4
    %v436 = vand.u32 %v434, 15
    %v437 = vsub.s32 0, %v436
    %v438 = vsel %vm432, %v437, %v436
    %vm439 = vcmp.lt.s32.totalorder %v375, 0
    %v440 = vsub.s32 0, %v375
    %v441 = vsel %vm439, %v440, %v375
    %v442 = vshrl.u32 %v441, 4
    %v443 = vand.u32 %v441, 15
    %v444 = vsub.s32 0, %v443
    %v445 = vsel %vm439, %v444, %v443
    %vm446 = vcmp.lt.s32.totalorder %v376, 0
    %v447 = vsub.s32 0, %v376
    %v448 = vsel %vm446, %v447, %v376
    %v449 = vshrl.u32 %v448, 4
    %v450 = vand.u32 %v448, 15
    %v451 = vsub.s32 0, %v450
    %v452 = vsel %vm446, %v451, %v450
    %vm453 = vcmp.lt.s32.totalorder %v377, 0
    %v454 = vsub.s32 0, %v377
    %v455 = vsel %vm453, %v454, %v377
    %v456 = vshrl.u32 %v455, 4
    %v457 = vand.u32 %v455, 15
    %v458 = vsub.s32 0, %v457
    %v459 = vsel %vm453, %v458, %v457
    %vm460 = vcmp.lt.s32.totalorder %v378, 0
    %v461 = vsub.s32 0, %v378
    %v462 = vsel %vm460, %v461, %v378
    %v463 = vshrl.u32 %v462, 4
    %v464 = vand.u32 %v462, 15
    %v465 = vsub.s32 0, %v464
    %v466 = vsel %vm460, %v465, %v464
    %vm467 = vcmp.lt.s32.totalorder %v379, 0
    %v468 = vsub.s32 0, %v379
    %v469 = vsel %vm467, %v468, %v379
    %v470 = vshrl.u32 %v469, 4
    %v471 = vand.u32 %v469, 15
    %v472 = vsub.s32 0, %v471
    %v473 = vsel %vm467, %v472, %v471
    %vm474 = vcmp.lt.s32.totalorder %v380, 0
    %v475 = vsub.s32 0, %v380
    %v476 = vsel %vm474, %v475, %v380
    %v477 = vshrl.u32 %v476, 4
    %v478 = vand.u32 %v476, 15
    %v479 = vsub.s32 0, %v478
    %v480 = vsel %vm474, %v479, %v478
    %vm481 = vcmp.lt.s32.totalorder %v381, 0
    %v482 = vsub.s32 0, %v381
    %v483 = vsel %vm481, %v482, %v381
    %v484 = vshrl.u32 %v483, 4
    %v485 = vand.u32 %v483, 15
    %v486 = vsub.s32 0, %v485
    %v487 = vsel %vm481, %v486, %v485
    %vm488 = vcmp.lt.s32.totalorder %v382, 0
    %v489 = vsub.s32 0, %v382
    %v490 = vsel %vm488, %v489, %v382
    %v491 = vshrl.u32 %v490, 4
    %v492 = vand.u32 %v490, 15
    %v493 = vsub.s32 0, %v492
    %v494 = vsel %vm488, %v493, %v492
    %vm495 = vcmp.ne.s32.totalorder %v389, 0
    %vm496 = vcmp.ne.s32.totalorder %v396, 0
    %vm497 = vcmp.ne.s32.totalorder %v403, 0
    %vm498 = vcmp.ne.s32.totalorder %v410, 0
    %vm499 = vcmp.ne.s32.totalorder %v417, 0
    %vm500 = vcmp.ne.s32.totalorder %v424, 0
    %vm501 = vcmp.ne.s32.totalorder %v431, 0
    %vm502 = vcmp.ne.s32.totalorder %v438, 0
    %vm503 = vcmp.ne.s32.totalorder %v445, 0
    %vm504 = vcmp.ne.s32.totalorder %v452, 0
    %vm505 = vcmp.ne.s32.totalorder %v459, 0
    %vm506 = vcmp.ne.s32.totalorder %v466, 0
    %vm507 = vcmp.ne.s32.totalorder %v473, 0
    %vm508 = vcmp.ne.s32.totalorder %v480, 0
    %vm509 = vcmp.ne.s32.totalorder %v487, 0
    %vm510 = vcmp.ne.s32.totalorder %v494, 0
    %vm511 = vcmp.lt.s32.totalorder %v389, 0
    %vm512 = vcmp.lt.s32.totalorder %v396, 0
    %vm513 = vcmp.lt.s32.totalorder %v403, 0
    %vm514 = vcmp.lt.s32.totalorder %v410, 0
    %vm515 = vcmp.lt.s32.totalorder %v417, 0
    %vm516 = vcmp.lt.s32.totalorder %v424, 0
    %vm517 = vcmp.lt.s32.totalorder %v431, 0
    %vm518 = vcmp.lt.s32.totalorder %v438, 0
    %vm519 = vcmp.lt.s32.totalorder %v445, 0
    %vm520 = vcmp.lt.s32.totalorder %v452, 0
    %vm521 = vcmp.lt.s32.totalorder %v459, 0
    %vm522 = vcmp.lt.s32.totalorder %v466, 0
    %vm523 = vcmp.lt.s32.totalorder %v473, 0
    %vm524 = vcmp.lt.s32.totalorder %v480, 0
    %vm525 = vcmp.lt.s32.totalorder %v487, 0
    %vm526 = vcmp.lt.s32.totalorder %v494, 0
    %vm527 = vmand %vm511, %vm495
    %vm528 = vmand %vm512, %vm496
    %vm529 = vmand %vm513, %vm497
    %vm530 = vmand %vm514, %vm498
    %vm531 = vmand %vm515, %vm499
    %vm532 = vmand %vm516, %vm500
    %vm533 = vmand %vm517, %vm501
    %vm534 = vmand %vm518, %vm502
    %vm535 = vmand %vm519, %vm503
    %vm536 = vmand %vm520, %vm504
    %vm537 = vmand %vm521, %vm505
    %vm538 = vmand %vm522, %vm506
    %vm539 = vmand %vm523, %vm507
    %vm540 = vmand %vm524, %vm508
    %vm541 = vmand %vm525, %vm509
    %vm542 = vmand %vm526, %vm510
    %v543 = vadd.s32 %v389, 16
    %v544 = vadd.s32 %v396, 16
    %v545 = vadd.s32 %v403, 16
    %v546 = vadd.s32 %v410, 16
    %v547 = vadd.s32 %v417, 16
    %v548 = vadd.s32 %v424, 16
    %v549 = vadd.s32 %v431, 16
    %v550 = vadd.s32 %v438, 16
    %v551 = vadd.s32 %v445, 16
    %v552 = vadd.s32 %v452, 16
    %v553 = vadd.s32 %v459, 16
    %v554 = vadd.s32 %v466, 16
    %v555 = vadd.s32 %v473, 16
    %v556 = vadd.s32 %v480, 16
    %v557 = vadd.s32 %v487, 16
    %v558 = vadd.s32 %v494, 16
    %v559 = vsel %vm527, %v543, %v389
    %v560 = vsel %vm528, %v544, %v396
    %v561 = vsel %vm529, %v545, %v403
    %v562 = vsel %vm530, %v546, %v410
    %v563 = vsel %vm531, %v547, %v417
    %v564 = vsel %vm532, %v548, %v424
    %v565 = vsel %vm533, %v549, %v431
    %v566 = vsel %vm534, %v550, %v438
    %v567 = vsel %vm535, %v551, %v445
    %v568 = vsel %vm536, %v552, %v452
    %v569 = vsel %vm537, %v553, %v459
    %v570 = vsel %vm538, %v554, %v466
    %v571 = vsel %vm539, %v555, %v473
    %v572 = vsel %vm540, %v556, %v480
    %v573 = vsel %vm541, %v557, %v487
    %v574 = vsel %vm542, %v558, %v494
    %vm575 = vcmp.ne.s32.totalorder %v559, 0
    %vm576 = vcmp.ne.s32.totalorder %v560, 0
    %vm577 = vcmp.ne.s32.totalorder %v561, 0
    %vm578 = vcmp.ne.s32.totalorder %v562, 0
    %vm579 = vcmp.ne.s32.totalorder %v563, 0
    %vm580 = vcmp.ne.s32.totalorder %v564, 0
    %vm581 = vcmp.ne.s32.totalorder %v565, 0
    %vm582 = vcmp.ne.s32.totalorder %v566, 0
    %vm583 = vcmp.ne.s32.totalorder %v567, 0
    %vm584 = vcmp.ne.s32.totalorder %v568, 0
    %vm585 = vcmp.ne.s32.totalorder %v569, 0
    %vm586 = vcmp.ne.s32.totalorder %v570, 0
    %vm587 = vcmp.ne.s32.totalorder %v571, 0
    %vm588 = vcmp.ne.s32.totalorder %v572, 0
    %vm589 = vcmp.ne.s32.totalorder %v573, 0
    %vm590 = vcmp.ne.s32.totalorder %v574, 0
    %v591 = vsel %vm575, 1, 0
    %v592 = vsel %vm576, 1, 0
    %v593 = vsel %vm577, 1, 0
    %v594 = vsel %vm578, 1, 0
    %v595 = vsel %vm579, 1, 0
    %v596 = vsel %vm580, 1, 0
    %v597 = vsel %vm581, 1, 0
    %v598 = vsel %vm582, 1, 0
    %v599 = vsel %vm583, 1, 0
    %v600 = vsel %vm584, 1, 0
    %v601 = vsel %vm585, 1, 0
    %v602 = vsel %vm586, 1, 0
    %v603 = vsel %vm587, 1, 0
    %v604 = vsel %vm588, 1, 0
    %v605 = vsel %vm589, 1, 0
    %v606 = vsel %vm590, 1, 0
    %v607 = vcvt.s32.f32 %v591
    %v608 = vcvt.s32.f32 %v592
    %v609 = vcvt.s32.f32 %v593
    %v610 = vcvt.s32.f32 %v594
    %v611 = vcvt.s32.f32 %v595
    %v612 = vcvt.s32.f32 %v596
    %v613 = vcvt.s32.f32 %v597
    %v614 = vcvt.s32.f32 %v598
    %v615 = vcvt.s32.f32 %v599
    %v616 = vcvt.s32.f32 %v600
    %v617 = vcvt.s32.f32 %v601
    %v618 = vcvt.s32.f32 %v602
    %v619 = vcvt.s32.f32 %v603
    %v620 = vcvt.s32.f32 %v604
    %v621 = vcvt.s32.f32 %v605
    %v622 = vcvt.s32.f32 %v606
    %vm623 = vcmp.ne.s32.totalorder %v559, 15
    %vm624 = vcmp.ne.s32.totalorder %v560, 15
    %vm625 = vcmp.ne.s32.totalorder %v561, 15
    %vm626 = vcmp.ne.s32.totalorder %v562, 15
    %vm627 = vcmp.ne.s32.totalorder %v563, 15
    %vm628 = vcmp.ne.s32.totalorder %v564, 15
    %vm629 = vcmp.ne.s32.totalorder %v565, 15
    %vm630 = vcmp.ne.s32.totalorder %v566, 15
    %vm631 = vcmp.ne.s32.totalorder %v567, 15
    %vm632 = vcmp.ne.s32.totalorder %v568, 15
    %vm633 = vcmp.ne.s32.totalorder %v569, 15
    %vm634 = vcmp.ne.s32.totalorder %v570, 15
    %vm635 = vcmp.ne.s32.totalorder %v571, 15
    %vm636 = vcmp.ne.s32.totalorder %v572, 15
    %vm637 = vcmp.ne.s32.totalorder %v573, 15
    %vm638 = vcmp.ne.s32.totalorder %v574, 15
    %v639 = vsel %vm623, 1, 0
    %v640 = vsel %vm624, 1, 0
    %v641 = vsel %vm625, 1, 0
    %v642 = vsel %vm626, 1, 0
    %v643 = vsel %vm627, 1, 0
    %v644 = vsel %vm628, 1, 0
    %v645 = vsel %vm629, 1, 0
    %v646 = vsel %vm630, 1, 0
    %v647 = vsel %vm631, 1, 0
    %v648 = vsel %vm632, 1, 0
    %v649 = vsel %vm633, 1, 0
    %v650 = vsel %vm634, 1, 0
    %v651 = vsel %vm635, 1, 0
    %v652 = vsel %vm636, 1, 0
    %v653 = vsel %vm637, 1, 0
    %v654 = vsel %vm638, 1, 0
    %v655 = vcvt.s32.f32 %v639
    %v656 = vcvt.s32.f32 %v640
    %v657 = vcvt.s32.f32 %v641
    %v658 = vcvt.s32.f32 %v642
    %v659 = vcvt.s32.f32 %v643
    %v660 = vcvt.s32.f32 %v644
    %v661 = vcvt.s32.f32 %v645
    %v662 = vcvt.s32.f32 %v646
    %v663 = vcvt.s32.f32 %v647
    %v664 = vcvt.s32.f32 %v648
    %v665 = vcvt.s32.f32 %v649
    %v666 = vcvt.s32.f32 %v650
    %v667 = vcvt.s32.f32 %v651
    %v668 = vcvt.s32.f32 %v652
    %v669 = vcvt.s32.f32 %v653
    %v670 = vcvt.s32.f32 %v654
    %v671 = vld [vmem:[%s3] sm:$0xf]
    %v672 = vld [vmem:[%s3 + $0x4] sm:$0xf]
    %v673 = vld [vmem:[%s3 + $0x8] sm:$0xf]
    %v674 = vld [vmem:[%s3 + $0xc] sm:$0xf]
    %v675 = vld [vmem:[%s3 + $0x10] sm:$0xf]
    %v676 = vld [vmem:[%s3 + $0x14] sm:$0xf]
    %v677 = vld [vmem:[%s3 + $0x18] sm:$0xf]
    %v678 = vld [vmem:[%s3 + $0x1c] sm:$0xf]
    %v679 = vld [vmem:[%s3 + $0x20] sm:$0xf]
    %v680 = vld [vmem:[%s3 + $0x24] sm:$0xf]
    %v681 = vld [vmem:[%s3 + $0x28] sm:$0xf]
    %v682 = vld [vmem:[%s3 + $0x2c] sm:$0xf]
    %v683 = vld [vmem:[%s3 + $0x30] sm:$0xf]
    %v684 = vld [vmem:[%s3 + $0x34] sm:$0xf]
    %v685 = vld [vmem:[%s3 + $0x38] sm:$0xf]
    %v686 = vld [vmem:[%s3 + $0x3c] sm:$0xf]
    %v687 = vld [vmem:[%s3 + $0x40] sm:$0xf]
    %v688 = vld [vmem:[%s3 + $0x44] sm:$0xf]
    %v689 = vld [vmem:[%s3 + $0x48] sm:$0xf]
    %v690 = vld [vmem:[%s3 + $0x4c] sm:$0xf]
    %v691 = vld [vmem:[%s3 + $0x50] sm:$0xf]
    %v692 = vld [vmem:[%s3 + $0x54] sm:$0xf]
    %v693 = vld [vmem:[%s3 + $0x58] sm:$0xf]
    %v694 = vld [vmem:[%s3 + $0x5c] sm:$0xf]
    %v695 = vld [vmem:[%s4] sm:$0x1]
    %vm712 = vcmask 1040384
    %v713 = vrot.slane %v350, 7
    %v714 = vrot.slane %v351, 7
    %v715 = vsel %vm712, %v713, %v714
    %v716 = vrot.slane %v352, 7
    %v717 = vsel %vm712, %v714, %v716
    %v718 = vrot.slane %v353, 7
    %v719 = vsel %vm712, %v716, %v718
    %v720 = vrot.slane %v354, 7
    %v721 = vsel %vm712, %v718, %v720
    %v722 = vrot.slane %v355, 7
    %v723 = vsel %vm712, %v720, %v722
    %v724 = vrot.slane %v356, 7
    %v725 = vsel %vm712, %v722, %v724
    %v726 = vrot.slane %v357, 7
    %v727 = vsel %vm712, %v724, %v726
    %v728 = vrot.slane %v358, 7
    %v729 = vsel %vm712, %v726, %v728
    %v730 = vrot.slane %v359, 7
    %v731 = vsel %vm712, %v728, %v730
    %v732 = vrot.slane %v360, 7
    %v733 = vsel %vm712, %v730, %v732
    %v734 = vrot.slane %v361, 7
    %v735 = vsel %vm712, %v732, %v734
    %v736 = vrot.slane %v362, 7
    %v737 = vsel %vm712, %v734, %v736
    %v738 = vrot.slane %v363, 7
    %v739 = vsel %vm712, %v736, %v738
    %v740 = vrot.slane %v364, 7
    %v741 = vsel %vm712, %v738, %v740
    %v742 = vrot.slane %v365, 7
    %v743 = vsel %vm712, %v740, %v742
    %v760 = vsel %vm712, 0.0, %v713
    %v761 = vmul.f32 %v760, %v607
    %v762 = vmul.f32 %v715, %v608
    %v763 = vmul.f32 %v717, %v609
    %v764 = vmul.f32 %v719, %v610
    %v765 = vmul.f32 %v721, %v611
    %v766 = vmul.f32 %v723, %v612
    %v767 = vmul.f32 %v725, %v613
    %v768 = vmul.f32 %v727, %v614
    %v769 = vmul.f32 %v729, %v615
    %v770 = vmul.f32 %v731, %v616
    %v771 = vmul.f32 %v733, %v617
    %v772 = vmul.f32 %v735, %v618
    %v773 = vmul.f32 %v737, %v619
    %v774 = vmul.f32 %v739, %v620
    %v775 = vmul.f32 %v741, %v621
    %v776 = vmul.f32 %v743, %v622
    %vm777 = vcmask 1046528
    %v778 = vrot.slane %v350, 1
    %v779 = vrot.slane %v351, 1
    %v780 = vsel %vm777, %v778, %v779
    %v781 = vrot.slane %v352, 1
    %v782 = vsel %vm777, %v779, %v781
    %v783 = vrot.slane %v353, 1
    %v784 = vsel %vm777, %v781, %v783
    %v785 = vrot.slane %v354, 1
    %v786 = vsel %vm777, %v783, %v785
    %v787 = vrot.slane %v355, 1
    %v788 = vsel %vm777, %v785, %v787
    %v789 = vrot.slane %v356, 1
    %v790 = vsel %vm777, %v787, %v789
    %v791 = vrot.slane %v357, 1
    %v792 = vsel %vm777, %v789, %v791
    %v793 = vrot.slane %v358, 1
    %v794 = vsel %vm777, %v791, %v793
    %v795 = vrot.slane %v359, 1
    %v796 = vsel %vm777, %v793, %v795
    %v797 = vrot.slane %v360, 1
    %v798 = vsel %vm777, %v795, %v797
    %v799 = vrot.slane %v361, 1
    %v800 = vsel %vm777, %v797, %v799
    %v801 = vrot.slane %v362, 1
    %v802 = vsel %vm777, %v799, %v801
    %v803 = vrot.slane %v363, 1
    %v804 = vsel %vm777, %v801, %v803
    %v805 = vrot.slane %v364, 1
    %v806 = vsel %vm777, %v803, %v805
    %v807 = vrot.slane %v365, 1
    %v808 = vsel %vm777, %v805, %v807
    %v825 = vsel %vm777, %v807, 0.0
    %v826 = vmul.f32 %v780, %v655
    %v827 = vmul.f32 %v782, %v656
    %v828 = vmul.f32 %v784, %v657
    %v829 = vmul.f32 %v786, %v658
    %v830 = vmul.f32 %v788, %v659
    %v831 = vmul.f32 %v790, %v660
    %v832 = vmul.f32 %v792, %v661
    %v833 = vmul.f32 %v794, %v662
    %v834 = vmul.f32 %v796, %v663
    %v835 = vmul.f32 %v798, %v664
    %v836 = vmul.f32 %v800, %v665
    %v837 = vmul.f32 %v802, %v666
    %v838 = vmul.f32 %v804, %v667
    %v839 = vmul.f32 %v806, %v668
    %v840 = vmul.f32 %v808, %v669
    %v841 = vmul.f32 %v825, %v670
    %842 = vrot.lane.b32.xlu0 %v350, 64
    %v843 = vpop.permute.xlu0 %842
    %844 = vrot.lane.b32.xlu0 %v351, 64
    %v845 = vpop.permute.xlu0 %844
    %846 = vrot.lane.b32.xlu0 %v352, 64
    %v847 = vpop.permute.xlu0 %846
    %848 = vrot.lane.b32.xlu0 %v353, 64
    %v849 = vpop.permute.xlu0 %848
    %850 = vrot.lane.b32.xlu0 %v354, 64
    %v851 = vpop.permute.xlu0 %850
    %852 = vrot.lane.b32.xlu0 %v355, 64
    %v853 = vpop.permute.xlu0 %852
    %854 = vrot.lane.b32.xlu0 %v356, 64
    %v855 = vpop.permute.xlu0 %854
    %856 = vrot.lane.b32.xlu0 %v357, 64
    %v857 = vpop.permute.xlu0 %856
    %858 = vrot.lane.b32.xlu0 %v358, 64
    %v859 = vpop.permute.xlu0 %858
    %860 = vrot.lane.b32.xlu0 %v359, 64
    %v861 = vpop.permute.xlu0 %860
    %862 = vrot.lane.b32.xlu0 %v360, 64
    %v863 = vpop.permute.xlu0 %862
    %864 = vrot.lane.b32.xlu0 %v361, 64
    %v865 = vpop.permute.xlu0 %864
    %866 = vrot.lane.b32.xlu0 %v362, 64
    %v867 = vpop.permute.xlu0 %866
    %868 = vrot.lane.b32.xlu0 %v363, 64
    %v869 = vpop.permute.xlu0 %868
    %870 = vrot.lane.b32.xlu0 %v364, 64
    %v871 = vpop.permute.xlu0 %870
    %872 = vrot.lane.b32.xlu0 %v365, 64
    %v873 = vpop.permute.xlu0 %872
    %vm890 = vcmask 523264
    %v891 = vsel %vm890, %v761, %v843
    %v892 = vsel %vm890, %v762, %v845
    %v893 = vsel %vm890, %v763, %v847
    %v894 = vsel %vm890, %v764, %v849
    %v895 = vsel %vm890, %v765, %v851
    %v896 = vsel %vm890, %v766, %v853
    %v897 = vsel %vm890, %v767, %v855
    %v898 = vsel %vm890, %v768, %v857
    %v899 = vsel %vm890, %v769, %v859
    %v900 = vsel %vm890, %v770, %v861
    %v901 = vsel %vm890, %v771, %v863
    %v902 = vsel %vm890, %v772, %v865
    %v903 = vsel %vm890, %v773, %v867
    %v904 = vsel %vm890, %v774, %v869
    %v905 = vsel %vm890, %v775, %v871
    %v906 = vsel %vm890, %v776, %v873
    %v907 = vpack.c.bf16 %v892, %v891
    %v908 = vpack.c.bf16 %v827, %v826
    %v909 = vpack.c.bf16 %v894, %v893
    %v910 = vpack.c.bf16 %v829, %v828
    %v911 = vpack.c.bf16 %v896, %v895
    %v912 = vpack.c.bf16 %v831, %v830
    %v913 = vpack.c.bf16 %v898, %v897
    %v914 = vpack.c.bf16 %v833, %v832
    %v915 = vpack.c.bf16 %v900, %v899
    %v916 = vpack.c.bf16 %v835, %v834
    %v917 = vpack.c.bf16 %v902, %v901
    %v918 = vpack.c.bf16 %v837, %v836
    %v919 = vpack.c.bf16 %v904, %v903
    %v920 = vpack.c.bf16 %v839, %v838
    %v921 = vpack.c.bf16 %v906, %v905
    %v922 = vpack.c.bf16 %v841, %v840
    %v924 = vperm.slane %v695, 0
    %v950 = vunpack.c.l.b16 %v671
    %v951 = vunpack.c.l.b16 %v672
    %v952 = vunpack.c.l.b16 %v673
    %v953 = vunpack.c.l.b16 %v674
    %v954 = vunpack.c.l.b16 %v675
    %v955 = vunpack.c.l.b16 %v676
    %v956 = vunpack.c.l.b16 %v677
    %v957 = vunpack.c.l.b16 %v678
    %v958 = vunpack.c.l.b16 %v679
    %v959 = vunpack.c.l.b16 %v680
    %v960 = vunpack.c.l.b16 %v681
    %v961 = vunpack.c.l.b16 %v682
    %v962 = vunpack.c.l.b16 %v683
    %v963 = vunpack.c.l.b16 %v684
    %v964 = vunpack.c.l.b16 %v685
    %v965 = vunpack.c.l.b16 %v686
    %v966 = vunpack.c.l.b16 %v687
    %v967 = vunpack.c.l.b16 %v688
    %v968 = vunpack.c.l.b16 %v689
    %v969 = vunpack.c.l.b16 %v690
    %v970 = vunpack.c.l.b16 %v691
    %v971 = vunpack.c.l.b16 %v692
    %v972 = vunpack.c.l.b16 %v693
    %v973 = vunpack.c.l.b16 %v694
    %v974 = vpack.c.b16 %v951, %v950
    %v975 = vpack.c.b16 %v953, %v952
    %v976 = vpack.c.b16 %v955, %v954
    %v977 = vpack.c.b16 %v957, %v956
    %v978 = vpack.c.b16 %v959, %v958
    %v979 = vpack.c.b16 %v961, %v960
    %v980 = vpack.c.b16 %v963, %v962
    %v981 = vpack.c.b16 %v965, %v964
    %v982 = vpack.c.b16 %v967, %v966
    %v983 = vpack.c.b16 %v969, %v968
    %v984 = vpack.c.b16 %v971, %v970
    %v985 = vpack.c.b16 %v973, %v972
    %v999 = vsel %vm890, %v908, 0
    %v1002 = vsel %vm890, %v910, 0
    %v1005 = vsel %vm890, %v912, 0
    %v1008 = vsel %vm890, %v914, 0
    %v1011 = vsel %vm890, %v916, 0
    %v1014 = vsel %vm890, %v918, 0
    %v1017 = vsel %vm890, %v920, 0
    %v1020 = vsel %vm890, %v922, 0
    %1022 = vmatpush.bf16.msra.mxu0 %v981
    %1023 = vmatpush.bf16.msra.mxu0 %v980
    %1024 = vmatpush.bf16.msra.mxu0 %v979
    %1025 = vmatpush.bf16.msra.mxu0 %v978
    %1026 = vmatpush.bf16.msra.mxu0 %v977
    %1027 = vmatpush.bf16.msra.mxu0 %v976
    %1028 = vmatpush.bf16.msra.mxu0 %v975
    %1029 = vmatpush.bf16.msra.mxu0 %v974
    %1030 = vmatmul.bf16.gmra.mxu0 %v907
    %v1031 = vpop.f32.mrf.mxu0
    %v1032 = vadd.f32 %v924, %v1031
    %v1033 = vpop.f32.mrf.mxu0
    %v1034 = vadd.f32 %v924, %v1033
    %1035 = vmatmul.bf16.gmra.mxu0 %v909
    %v1036 = vpop.f32.mrf.mxu0
    %v1037 = vadd.f32 %v924, %v1036
    %v1038 = vpop.f32.mrf.mxu0
    %v1039 = vadd.f32 %v924, %v1038
    %1040 = vmatmul.bf16.gmra.mxu0 %v911
    %v1041 = vpop.f32.mrf.mxu0
    %v1042 = vadd.f32 %v924, %v1041
    %v1043 = vpop.f32.mrf.mxu0
    %v1044 = vadd.f32 %v924, %v1043
    %1045 = vmatmul.bf16.gmra.mxu0 %v913
    %v1046 = vpop.f32.mrf.mxu0
    %v1047 = vadd.f32 %v924, %v1046
    %v1048 = vpop.f32.mrf.mxu0
    %v1049 = vadd.f32 %v924, %v1048
    %1050 = vmatmul.bf16.gmra.mxu0 %v915
    %v1051 = vpop.f32.mrf.mxu0
    %v1052 = vadd.f32 %v924, %v1051
    %v1053 = vpop.f32.mrf.mxu0
    %v1054 = vadd.f32 %v924, %v1053
    %1055 = vmatmul.bf16.gmra.mxu0 %v917
    %v1056 = vpop.f32.mrf.mxu0
    %v1057 = vadd.f32 %v924, %v1056
    %v1058 = vpop.f32.mrf.mxu0
    %v1059 = vadd.f32 %v924, %v1058
    %1060 = vmatmul.bf16.gmra.mxu0 %v919
    %v1061 = vpop.f32.mrf.mxu0
    %v1062 = vadd.f32 %v924, %v1061
    %v1063 = vpop.f32.mrf.mxu0
    %v1064 = vadd.f32 %v924, %v1063
    %1065 = vmatmul.bf16.gmra.mxu0 %v921
    %v1066 = vpop.f32.mrf.mxu0
    %v1067 = vadd.f32 %v924, %v1066
    %v1068 = vpop.f32.mrf.mxu0
    %v1069 = vadd.f32 %v924, %v1068
    %1070 = vdwg.mxu0
    %1071 = vmatpush.bf16.msra.mxu0 0
    %1072 = vmatpush.bf16.msra.mxu0 0
    %1073 = vmatpush.bf16.msra.mxu0 0
    %1074 = vmatpush.bf16.msra.mxu0 0
    %1075 = vmatpush.bf16.msra.mxu0 %v985
    %1076 = vmatpush.bf16.msra.mxu0 %v984
    %1077 = vmatpush.bf16.msra.mxu0 %v983
    %1078 = vmatpush.bf16.msra.mxu0 %v982
    %1079 = vmatmul.bf16.gmra.mxu0 %v999
    %v1080 = vpop.f32.mrf.mxu0
    %v1081 = vadd.f32 %v1032, %v1080
    %v1082 = vpop.f32.mrf.mxu0
    %v1083 = vadd.f32 %v1034, %v1082
    %1084 = vmatmul.bf16.gmra.mxu0 %v1002
    %v1085 = vpop.f32.mrf.mxu0
    %v1086 = vadd.f32 %v1037, %v1085
    %v1087 = vpop.f32.mrf.mxu0
    %v1088 = vadd.f32 %v1039, %v1087
    %1089 = vmatmul.bf16.gmra.mxu0 %v1005
    %v1090 = vpop.f32.mrf.mxu0
    %v1091 = vadd.f32 %v1042, %v1090
    %v1092 = vpop.f32.mrf.mxu0
    %v1093 = vadd.f32 %v1044, %v1092
    %1094 = vmatmul.bf16.gmra.mxu0 %v1008
    %v1095 = vpop.f32.mrf.mxu0
    %v1096 = vadd.f32 %v1047, %v1095
    %v1097 = vpop.f32.mrf.mxu0
    %v1098 = vadd.f32 %v1049, %v1097
    %1099 = vmatmul.bf16.gmra.mxu0 %v1011
    %v1100 = vpop.f32.mrf.mxu0
    %v1101 = vadd.f32 %v1052, %v1100
    %v1102 = vpop.f32.mrf.mxu0
    %v1103 = vadd.f32 %v1054, %v1102
    %1104 = vmatmul.bf16.gmra.mxu0 %v1014
    %v1105 = vpop.f32.mrf.mxu0
    %v1106 = vadd.f32 %v1057, %v1105
    %v1107 = vpop.f32.mrf.mxu0
    %v1108 = vadd.f32 %v1059, %v1107
    %1109 = vmatmul.bf16.gmra.mxu0 %v1017
    %v1110 = vpop.f32.mrf.mxu0
    %v1111 = vadd.f32 %v1062, %v1110
    %v1112 = vpop.f32.mrf.mxu0
    %v1113 = vadd.f32 %v1064, %v1112
    %1114 = vmatmul.bf16.gmra.mxu0 %v1020
    %v1115 = vpop.f32.mrf.mxu0
    %v1116 = vadd.f32 %v1067, %v1115
    %v1117 = vpop.f32.mrf.mxu0
    %v1118 = vadd.f32 %v1069, %v1117
    %1119 = vdwg.mxu0
    %v1120 = vmax.f32 %v1081, 0.0
    %v1121 = vmax.f32 %v1083, 0.0
    %v1122 = vmax.f32 %v1086, 0.0
    %v1123 = vmax.f32 %v1088, 0.0
    %v1124 = vmax.f32 %v1091, 0.0
    %v1125 = vmax.f32 %v1093, 0.0
    %v1126 = vmax.f32 %v1096, 0.0
    %v1127 = vmax.f32 %v1098, 0.0
    %v1128 = vmax.f32 %v1101, 0.0
    %v1129 = vmax.f32 %v1103, 0.0
    %v1130 = vmax.f32 %v1106, 0.0
    %v1131 = vmax.f32 %v1108, 0.0
    %v1132 = vmax.f32 %v1111, 0.0
    %v1133 = vmax.f32 %v1113, 0.0
    %v1134 = vmax.f32 %v1116, 0.0
    %v1135 = vmax.f32 %v1118, 0.0
    %s1136 = scalar_lea.vmem %s3, 96
    %v1137 = vld [vmem:[%s1136] sm:$0xf]
    %v1138 = vld [vmem:[%s1136 + $0x4] sm:$0xf]
    %v1139 = vld [vmem:[%s1136 + $0x8] sm:$0xf]
    %v1140 = vld [vmem:[%s1136 + $0xc] sm:$0xf]
    %v1141 = vld [vmem:[%s1136 + $0x10] sm:$0xf]
    %v1142 = vld [vmem:[%s1136 + $0x14] sm:$0xf]
    %v1143 = vld [vmem:[%s1136 + $0x18] sm:$0xf]
    %v1144 = vld [vmem:[%s1136 + $0x1c] sm:$0xf]
    %v1145 = vld [vmem:[%s1136 + $0x20] sm:$0xf]
    %v1146 = vld [vmem:[%s1136 + $0x24] sm:$0xf]
    %v1147 = vld [vmem:[%s1136 + $0x28] sm:$0xf]
    %v1148 = vld [vmem:[%s1136 + $0x2c] sm:$0xf]
    %v1149 = vld [vmem:[%s1136 + $0x30] sm:$0xf]
    %v1150 = vld [vmem:[%s1136 + $0x34] sm:$0xf]
    %v1151 = vld [vmem:[%s1136 + $0x38] sm:$0xf]
    %v1152 = vld [vmem:[%s1136 + $0x3c] sm:$0xf]
    %v1153 = vld [vmem:[%s1136 + $0x40] sm:$0xf]
    %v1154 = vld [vmem:[%s1136 + $0x44] sm:$0xf]
    %v1155 = vld [vmem:[%s1136 + $0x48] sm:$0xf]
    %v1156 = vld [vmem:[%s1136 + $0x4c] sm:$0xf]
    %v1157 = vld [vmem:[%s1136 + $0x50] sm:$0xf]
    %v1158 = vld [vmem:[%s1136 + $0x54] sm:$0xf]
    %v1159 = vld [vmem:[%s1136 + $0x58] sm:$0xf]
    %v1160 = vld [vmem:[%s1136 + $0x5c] sm:$0xf]
    %s1161 = scalar_lea.vmem %s4, 1
    %v1162 = vld [vmem:[%s1161] sm:$0x1]
    %v1179 = vrot.slane %v1120, 7
    %v1180 = vrot.slane %v1121, 7
    %v1181 = vsel %vm712, %v1179, %v1180
    %v1182 = vrot.slane %v1122, 7
    %v1183 = vsel %vm712, %v1180, %v1182
    %v1184 = vrot.slane %v1123, 7
    %v1185 = vsel %vm712, %v1182, %v1184
    %v1186 = vrot.slane %v1124, 7
    %v1187 = vsel %vm712, %v1184, %v1186
    %v1188 = vrot.slane %v1125, 7
    %v1189 = vsel %vm712, %v1186, %v1188
    %v1190 = vrot.slane %v1126, 7
    %v1191 = vsel %vm712, %v1188, %v1190
    %v1192 = vrot.slane %v1127, 7
    %v1193 = vsel %vm712, %v1190, %v1192
    %v1194 = vrot.slane %v1128, 7
    %v1195 = vsel %vm712, %v1192, %v1194
    %v1196 = vrot.slane %v1129, 7
    %v1197 = vsel %vm712, %v1194, %v1196
    %v1198 = vrot.slane %v1130, 7
    %v1199 = vsel %vm712, %v1196, %v1198
    %v1200 = vrot.slane %v1131, 7
    %v1201 = vsel %vm712, %v1198, %v1200
    %v1202 = vrot.slane %v1132, 7
    %v1203 = vsel %vm712, %v1200, %v1202
    %v1204 = vrot.slane %v1133, 7
    %v1205 = vsel %vm712, %v1202, %v1204
    %v1206 = vrot.slane %v1134, 7
    %v1207 = vsel %vm712, %v1204, %v1206
    %v1208 = vrot.slane %v1135, 7
    %v1209 = vsel %vm712, %v1206, %v1208
    %v1226 = vsel %vm712, 0.0, %v1179
    %v1227 = vmul.f32 %v1226, %v607
    %v1228 = vmul.f32 %v1181, %v608
    %v1229 = vmul.f32 %v1183, %v609
    %v1230 = vmul.f32 %v1185, %v610
    %v1231 = vmul.f32 %v1187, %v611
    %v1232 = vmul.f32 %v1189, %v612
    %v1233 = vmul.f32 %v1191, %v613
    %v1234 = vmul.f32 %v1193, %v614
    %v1235 = vmul.f32 %v1195, %v615
    %v1236 = vmul.f32 %v1197, %v616
    %v1237 = vmul.f32 %v1199, %v617
    %v1238 = vmul.f32 %v1201, %v618
    %v1239 = vmul.f32 %v1203, %v619
    %v1240 = vmul.f32 %v1205, %v620
    %v1241 = vmul.f32 %v1207, %v621
    %v1242 = vmul.f32 %v1209, %v622
    %v1243 = vrot.slane %v1120, 1
    %v1244 = vrot.slane %v1121, 1
    %v1245 = vsel %vm777, %v1243, %v1244
    %v1246 = vrot.slane %v1122, 1
    %v1247 = vsel %vm777, %v1244, %v1246
    %v1248 = vrot.slane %v1123, 1
    %v1249 = vsel %vm777, %v1246, %v1248
    %v1250 = vrot.slane %v1124, 1
    %v1251 = vsel %vm777, %v1248, %v1250
    %v1252 = vrot.slane %v1125, 1
    %v1253 = vsel %vm777, %v1250, %v1252
    %v1254 = vrot.slane %v1126, 1
    %v1255 = vsel %vm777, %v1252, %v1254
    %v1256 = vrot.slane %v1127, 1
    %v1257 = vsel %vm777, %v1254, %v1256
    %v1258 = vrot.slane %v1128, 1
    %v1259 = vsel %vm777, %v1256, %v1258
    %v1260 = vrot.slane %v1129, 1
    %v1261 = vsel %vm777, %v1258, %v1260
    %v1262 = vrot.slane %v1130, 1
    %v1263 = vsel %vm777, %v1260, %v1262
    %v1264 = vrot.slane %v1131, 1
    %v1265 = vsel %vm777, %v1262, %v1264
    %v1266 = vrot.slane %v1132, 1
    %v1267 = vsel %vm777, %v1264, %v1266
    %v1268 = vrot.slane %v1133, 1
    %v1269 = vsel %vm777, %v1266, %v1268
    %v1270 = vrot.slane %v1134, 1
    %v1271 = vsel %vm777, %v1268, %v1270
    %v1272 = vrot.slane %v1135, 1
    %v1273 = vsel %vm777, %v1270, %v1272
    %v1290 = vsel %vm777, %v1272, 0.0
    %v1291 = vmul.f32 %v1245, %v655
    %v1292 = vmul.f32 %v1247, %v656
    %v1293 = vmul.f32 %v1249, %v657
    %v1294 = vmul.f32 %v1251, %v658
    %v1295 = vmul.f32 %v1253, %v659
    %v1296 = vmul.f32 %v1255, %v660
    %v1297 = vmul.f32 %v1257, %v661
    %v1298 = vmul.f32 %v1259, %v662
    %v1299 = vmul.f32 %v1261, %v663
    %v1300 = vmul.f32 %v1263, %v664
    %v1301 = vmul.f32 %v1265, %v665
    %v1302 = vmul.f32 %v1267, %v666
    %v1303 = vmul.f32 %v1269, %v667
    %v1304 = vmul.f32 %v1271, %v668
    %v1305 = vmul.f32 %v1273, %v669
    %v1306 = vmul.f32 %v1290, %v670
    %1307 = vrot.lane.b32.xlu0 %v1120, 64
    %v1308 = vpop.permute.xlu0 %1307
    %1309 = vrot.lane.b32.xlu0 %v1121, 64
    %v1310 = vpop.permute.xlu0 %1309
    %1311 = vrot.lane.b32.xlu0 %v1122, 64
    %v1312 = vpop.permute.xlu0 %1311
    %1313 = vrot.lane.b32.xlu0 %v1123, 64
    %v1314 = vpop.permute.xlu0 %1313
    %1315 = vrot.lane.b32.xlu0 %v1124, 64
    %v1316 = vpop.permute.xlu0 %1315
    %1317 = vrot.lane.b32.xlu0 %v1125, 64
    %v1318 = vpop.permute.xlu0 %1317
    %1319 = vrot.lane.b32.xlu0 %v1126, 64
    %v1320 = vpop.permute.xlu0 %1319
    %1321 = vrot.lane.b32.xlu0 %v1127, 64
    %v1322 = vpop.permute.xlu0 %1321
    %1323 = vrot.lane.b32.xlu0 %v1128, 64
    %v1324 = vpop.permute.xlu0 %1323
    %1325 = vrot.lane.b32.xlu0 %v1129, 64
    %v1326 = vpop.permute.xlu0 %1325
    %1327 = vrot.lane.b32.xlu0 %v1130, 64
    %v1328 = vpop.permute.xlu0 %1327
    %1329 = vrot.lane.b32.xlu0 %v1131, 64
    %v1330 = vpop.permute.xlu0 %1329
    %1331 = vrot.lane.b32.xlu0 %v1132, 64
    %v1332 = vpop.permute.xlu0 %1331
    %1333 = vrot.lane.b32.xlu0 %v1133, 64
    %v1334 = vpop.permute.xlu0 %1333
    %1335 = vrot.lane.b32.xlu0 %v1134, 64
    %v1336 = vpop.permute.xlu0 %1335
    %1337 = vrot.lane.b32.xlu0 %v1135, 64
    %v1338 = vpop.permute.xlu0 %1337
    %v1355 = vsel %vm890, %v1227, %v1308
    %v1356 = vsel %vm890, %v1228, %v1310
    %v1357 = vsel %vm890, %v1229, %v1312
    %v1358 = vsel %vm890, %v1230, %v1314
    %v1359 = vsel %vm890, %v1231, %v1316
    %v1360 = vsel %vm890, %v1232, %v1318
    %v1361 = vsel %vm890, %v1233, %v1320
    %v1362 = vsel %vm890, %v1234, %v1322
    %v1363 = vsel %vm890, %v1235, %v1324
    %v1364 = vsel %vm890, %v1236, %v1326
    %v1365 = vsel %vm890, %v1237, %v1328
    %v1366 = vsel %vm890, %v1238, %v1330
    %v1367 = vsel %vm890, %v1239, %v1332
    %v1368 = vsel %vm890, %v1240, %v1334
    %v1369 = vsel %vm890, %v1241, %v1336
    %v1370 = vsel %vm890, %v1242, %v1338
    %v1371 = vpack.c.bf16 %v1356, %v1355
    %v1372 = vpack.c.bf16 %v1292, %v1291
    %v1373 = vpack.c.bf16 %v1358, %v1357
    %v1374 = vpack.c.bf16 %v1294, %v1293
    %v1375 = vpack.c.bf16 %v1360, %v1359
    %v1376 = vpack.c.bf16 %v1296, %v1295
    %v1377 = vpack.c.bf16 %v1362, %v1361
    %v1378 = vpack.c.bf16 %v1298, %v1297
    %v1379 = vpack.c.bf16 %v1364, %v1363
    %v1380 = vpack.c.bf16 %v1300, %v1299
    %v1381 = vpack.c.bf16 %v1366, %v1365
    %v1382 = vpack.c.bf16 %v1302, %v1301
    %v1383 = vpack.c.bf16 %v1368, %v1367
    %v1384 = vpack.c.bf16 %v1304, %v1303
    %v1385 = vpack.c.bf16 %v1370, %v1369
    %v1386 = vpack.c.bf16 %v1306, %v1305
    %v1388 = vperm.slane %v1162, 0
    %v1414 = vunpack.c.l.b16 %v1137
    %v1415 = vunpack.c.l.b16 %v1138
    %v1416 = vunpack.c.l.b16 %v1139
    %v1417 = vunpack.c.l.b16 %v1140
    %v1418 = vunpack.c.l.b16 %v1141
    %v1419 = vunpack.c.l.b16 %v1142
    %v1420 = vunpack.c.l.b16 %v1143
    %v1421 = vunpack.c.l.b16 %v1144
    %v1422 = vunpack.c.l.b16 %v1145
    %v1423 = vunpack.c.l.b16 %v1146
    %v1424 = vunpack.c.l.b16 %v1147
    %v1425 = vunpack.c.l.b16 %v1148
    %v1426 = vunpack.c.l.b16 %v1149
    %v1427 = vunpack.c.l.b16 %v1150
    %v1428 = vunpack.c.l.b16 %v1151
    %v1429 = vunpack.c.l.b16 %v1152
    %v1430 = vunpack.c.l.b16 %v1153
    %v1431 = vunpack.c.l.b16 %v1154
    %v1432 = vunpack.c.l.b16 %v1155
    %v1433 = vunpack.c.l.b16 %v1156
    %v1434 = vunpack.c.l.b16 %v1157
    %v1435 = vunpack.c.l.b16 %v1158
    %v1436 = vunpack.c.l.b16 %v1159
    %v1437 = vunpack.c.l.b16 %v1160
    %v1438 = vpack.c.b16 %v1415, %v1414
    %v1439 = vpack.c.b16 %v1417, %v1416
    %v1440 = vpack.c.b16 %v1419, %v1418
    %v1441 = vpack.c.b16 %v1421, %v1420
    %v1442 = vpack.c.b16 %v1423, %v1422
    %v1443 = vpack.c.b16 %v1425, %v1424
    %v1444 = vpack.c.b16 %v1427, %v1426
    %v1445 = vpack.c.b16 %v1429, %v1428
    %v1446 = vpack.c.b16 %v1431, %v1430
    %v1447 = vpack.c.b16 %v1433, %v1432
    %v1448 = vpack.c.b16 %v1435, %v1434
    %v1449 = vpack.c.b16 %v1437, %v1436
    %v1463 = vsel %vm890, %v1372, 0
    %v1466 = vsel %vm890, %v1374, 0
    %v1469 = vsel %vm890, %v1376, 0
    %v1472 = vsel %vm890, %v1378, 0
    %v1475 = vsel %vm890, %v1380, 0
    %v1478 = vsel %vm890, %v1382, 0
    %v1481 = vsel %vm890, %v1384, 0
    %v1484 = vsel %vm890, %v1386, 0
    %1486 = vmatpush.bf16.msra.mxu0 %v1445
    %1487 = vmatpush.bf16.msra.mxu0 %v1444
    %1488 = vmatpush.bf16.msra.mxu0 %v1443
    %1489 = vmatpush.bf16.msra.mxu0 %v1442
    %1490 = vmatpush.bf16.msra.mxu0 %v1441
    %1491 = vmatpush.bf16.msra.mxu0 %v1440
    %1492 = vmatpush.bf16.msra.mxu0 %v1439
    %1493 = vmatpush.bf16.msra.mxu0 %v1438
    %1494 = vmatmul.bf16.gmra.mxu0 %v1371
    %v1495 = vpop.f32.mrf.mxu0
    %v1496 = vadd.f32 %v1388, %v1495
    %v1497 = vpop.f32.mrf.mxu0
    %v1498 = vadd.f32 %v1388, %v1497
    %1499 = vmatmul.bf16.gmra.mxu0 %v1373
    %v1500 = vpop.f32.mrf.mxu0
    %v1501 = vadd.f32 %v1388, %v1500
    %v1502 = vpop.f32.mrf.mxu0
    %v1503 = vadd.f32 %v1388, %v1502
    %1504 = vmatmul.bf16.gmra.mxu0 %v1375
    %v1505 = vpop.f32.mrf.mxu0
    %v1506 = vadd.f32 %v1388, %v1505
    %v1507 = vpop.f32.mrf.mxu0
    %v1508 = vadd.f32 %v1388, %v1507
    %1509 = vmatmul.bf16.gmra.mxu0 %v1377
    %v1510 = vpop.f32.mrf.mxu0
    %v1511 = vadd.f32 %v1388, %v1510
    %v1512 = vpop.f32.mrf.mxu0
    %v1513 = vadd.f32 %v1388, %v1512
    %1514 = vmatmul.bf16.gmra.mxu0 %v1379
    %v1515 = vpop.f32.mrf.mxu0
    %v1516 = vadd.f32 %v1388, %v1515
    %v1517 = vpop.f32.mrf.mxu0
    %v1518 = vadd.f32 %v1388, %v1517
    %1519 = vmatmul.bf16.gmra.mxu0 %v1381
    %v1520 = vpop.f32.mrf.mxu0
    %v1521 = vadd.f32 %v1388, %v1520
    %v1522 = vpop.f32.mrf.mxu0
    %v1523 = vadd.f32 %v1388, %v1522
    %1524 = vmatmul.bf16.gmra.mxu0 %v1383
    %v1525 = vpop.f32.mrf.mxu0
    %v1526 = vadd.f32 %v1388, %v1525
    %v1527 = vpop.f32.mrf.mxu0
    %v1528 = vadd.f32 %v1388, %v1527
    %1529 = vmatmul.bf16.gmra.mxu0 %v1385
    %v1530 = vpop.f32.mrf.mxu0
    %v1531 = vadd.f32 %v1388, %v1530
    %v1532 = vpop.f32.mrf.mxu0
    %v1533 = vadd.f32 %v1388, %v1532
    %1534 = vdwg.mxu0
    %1535 = vmatpush.bf16.msra.mxu0 0
    %1536 = vmatpush.bf16.msra.mxu0 0
    %1537 = vmatpush.bf16.msra.mxu0 0
    %1538 = vmatpush.bf16.msra.mxu0 0
    %1539 = vmatpush.bf16.msra.mxu0 %v1449
    %1540 = vmatpush.bf16.msra.mxu0 %v1448
    %1541 = vmatpush.bf16.msra.mxu0 %v1447
    %1542 = vmatpush.bf16.msra.mxu0 %v1446
    %1543 = vmatmul.bf16.gmra.mxu0 %v1463
    %v1544 = vpop.f32.mrf.mxu0
    %v1545 = vadd.f32 %v1496, %v1544
    %v1546 = vpop.f32.mrf.mxu0
    %v1547 = vadd.f32 %v1498, %v1546
    %1548 = vmatmul.bf16.gmra.mxu0 %v1466
    %v1549 = vpop.f32.mrf.mxu0
    %v1550 = vadd.f32 %v1501, %v1549
    %v1551 = vpop.f32.mrf.mxu0
    %v1552 = vadd.f32 %v1503, %v1551
    %1553 = vmatmul.bf16.gmra.mxu0 %v1469
    %v1554 = vpop.f32.mrf.mxu0
    %v1555 = vadd.f32 %v1506, %v1554
    %v1556 = vpop.f32.mrf.mxu0
    %v1557 = vadd.f32 %v1508, %v1556
    %1558 = vmatmul.bf16.gmra.mxu0 %v1472
    %v1559 = vpop.f32.mrf.mxu0
    %v1560 = vadd.f32 %v1511, %v1559
    %v1561 = vpop.f32.mrf.mxu0
    %v1562 = vadd.f32 %v1513, %v1561
    %1563 = vmatmul.bf16.gmra.mxu0 %v1475
    %v1564 = vpop.f32.mrf.mxu0
    %v1565 = vadd.f32 %v1516, %v1564
    %v1566 = vpop.f32.mrf.mxu0
    %v1567 = vadd.f32 %v1518, %v1566
    %1568 = vmatmul.bf16.gmra.mxu0 %v1478
    %v1569 = vpop.f32.mrf.mxu0
    %v1570 = vadd.f32 %v1521, %v1569
    %v1571 = vpop.f32.mrf.mxu0
    %v1572 = vadd.f32 %v1523, %v1571
    %1573 = vmatmul.bf16.gmra.mxu0 %v1481
    %v1574 = vpop.f32.mrf.mxu0
    %v1575 = vadd.f32 %v1526, %v1574
    %v1576 = vpop.f32.mrf.mxu0
    %v1577 = vadd.f32 %v1528, %v1576
    %1578 = vmatmul.bf16.gmra.mxu0 %v1484
    %v1579 = vpop.f32.mrf.mxu0
    %v1580 = vadd.f32 %v1531, %v1579
    %v1581 = vpop.f32.mrf.mxu0
    %v1582 = vadd.f32 %v1533, %v1581
    %1583 = vdwg.mxu0
    %v1584 = vadd.f32 %v1545, %v350
    %v1585 = vadd.f32 %v1547, %v351
    %v1586 = vadd.f32 %v1550, %v352
    %v1587 = vadd.f32 %v1552, %v353
    %v1588 = vadd.f32 %v1555, %v354
    %v1589 = vadd.f32 %v1557, %v355
    %v1590 = vadd.f32 %v1560, %v356
    %v1591 = vadd.f32 %v1562, %v357
    %v1592 = vadd.f32 %v1565, %v358
    %v1593 = vadd.f32 %v1567, %v359
    %v1594 = vadd.f32 %v1570, %v360
    %v1595 = vadd.f32 %v1572, %v361
    %v1596 = vadd.f32 %v1575, %v362
    %v1597 = vadd.f32 %v1577, %v363
    %v1598 = vadd.f32 %v1580, %v364
    %v1599 = vadd.f32 %v1582, %v365
    %v1600 = vmax.f32 %v1584, 0.0
    %v1601 = vmax.f32 %v1585, 0.0
    %v1602 = vmax.f32 %v1586, 0.0
    %v1603 = vmax.f32 %v1587, 0.0
    %v1604 = vmax.f32 %v1588, 0.0
    %v1605 = vmax.f32 %v1589, 0.0
    %v1606 = vmax.f32 %v1590, 0.0
    %v1607 = vmax.f32 %v1591, 0.0
    %v1608 = vmax.f32 %v1592, 0.0
    %v1609 = vmax.f32 %v1593, 0.0
    %v1610 = vmax.f32 %v1594, 0.0
    %v1611 = vmax.f32 %v1595, 0.0
    %v1612 = vmax.f32 %v1596, 0.0
    %v1613 = vmax.f32 %v1597, 0.0
    %v1614 = vmax.f32 %v1598, 0.0
    %v1615 = vmax.f32 %v1599, 0.0
    %s1616 = scalar_lea.vmem %s3, 192
    %v1617 = vld [vmem:[%s1616] sm:$0xf]
    %v1618 = vld [vmem:[%s1616 + $0x4] sm:$0xf]
    %v1619 = vld [vmem:[%s1616 + $0x8] sm:$0xf]
    %v1620 = vld [vmem:[%s1616 + $0xc] sm:$0xf]
    %v1621 = vld [vmem:[%s1616 + $0x10] sm:$0xf]
    %v1622 = vld [vmem:[%s1616 + $0x14] sm:$0xf]
    %v1623 = vld [vmem:[%s1616 + $0x18] sm:$0xf]
    %v1624 = vld [vmem:[%s1616 + $0x1c] sm:$0xf]
    %v1625 = vld [vmem:[%s1616 + $0x20] sm:$0xf]
    %v1626 = vld [vmem:[%s1616 + $0x24] sm:$0xf]
    %v1627 = vld [vmem:[%s1616 + $0x28] sm:$0xf]
    %v1628 = vld [vmem:[%s1616 + $0x2c] sm:$0xf]
    %v1629 = vld [vmem:[%s1616 + $0x30] sm:$0xf]
    %v1630 = vld [vmem:[%s1616 + $0x34] sm:$0xf]
    %v1631 = vld [vmem:[%s1616 + $0x38] sm:$0xf]
    %v1632 = vld [vmem:[%s1616 + $0x3c] sm:$0xf]
    %v1633 = vld [vmem:[%s1616 + $0x40] sm:$0xf]
    %v1634 = vld [vmem:[%s1616 + $0x44] sm:$0xf]
    %v1635 = vld [vmem:[%s1616 + $0x48] sm:$0xf]
    %v1636 = vld [vmem:[%s1616 + $0x4c] sm:$0xf]
    %v1637 = vld [vmem:[%s1616 + $0x50] sm:$0xf]
    %v1638 = vld [vmem:[%s1616 + $0x54] sm:$0xf]
    %v1639 = vld [vmem:[%s1616 + $0x58] sm:$0xf]
    %v1640 = vld [vmem:[%s1616 + $0x5c] sm:$0xf]
    %s1641 = scalar_lea.vmem %s4, 2
    %v1642 = vld [vmem:[%s1641] sm:$0x1]
    %v1659 = vrot.slane %v1600, 7
    %v1660 = vrot.slane %v1601, 7
    %v1661 = vsel %vm712, %v1659, %v1660
    %v1662 = vrot.slane %v1602, 7
    %v1663 = vsel %vm712, %v1660, %v1662
    %v1664 = vrot.slane %v1603, 7
    %v1665 = vsel %vm712, %v1662, %v1664
    %v1666 = vrot.slane %v1604, 7
    %v1667 = vsel %vm712, %v1664, %v1666
    %v1668 = vrot.slane %v1605, 7
    %v1669 = vsel %vm712, %v1666, %v1668
    %v1670 = vrot.slane %v1606, 7
    %v1671 = vsel %vm712, %v1668, %v1670
    %v1672 = vrot.slane %v1607, 7
    %v1673 = vsel %vm712, %v1670, %v1672
    %v1674 = vrot.slane %v1608, 7
    %v1675 = vsel %vm712, %v1672, %v1674
    %v1676 = vrot.slane %v1609, 7
    %v1677 = vsel %vm712, %v1674, %v1676
    %v1678 = vrot.slane %v1610, 7
    %v1679 = vsel %vm712, %v1676, %v1678
    %v1680 = vrot.slane %v1611, 7
    %v1681 = vsel %vm712, %v1678, %v1680
    %v1682 = vrot.slane %v1612, 7
    %v1683 = vsel %vm712, %v1680, %v1682
    %v1684 = vrot.slane %v1613, 7
    %v1685 = vsel %vm712, %v1682, %v1684
    %v1686 = vrot.slane %v1614, 7
    %v1687 = vsel %vm712, %v1684, %v1686
    %v1688 = vrot.slane %v1615, 7
    %v1689 = vsel %vm712, %v1686, %v1688
    %v1706 = vsel %vm712, 0.0, %v1659
    %v1707 = vmul.f32 %v1706, %v607
    %v1708 = vmul.f32 %v1661, %v608
    %v1709 = vmul.f32 %v1663, %v609
    %v1710 = vmul.f32 %v1665, %v610
    %v1711 = vmul.f32 %v1667, %v611
    %v1712 = vmul.f32 %v1669, %v612
    %v1713 = vmul.f32 %v1671, %v613
    %v1714 = vmul.f32 %v1673, %v614
    %v1715 = vmul.f32 %v1675, %v615
    %v1716 = vmul.f32 %v1677, %v616
    %v1717 = vmul.f32 %v1679, %v617
    %v1718 = vmul.f32 %v1681, %v618
    %v1719 = vmul.f32 %v1683, %v619
    %v1720 = vmul.f32 %v1685, %v620
    %v1721 = vmul.f32 %v1687, %v621
    %v1722 = vmul.f32 %v1689, %v622
    %v1723 = vrot.slane %v1600, 1
    %v1724 = vrot.slane %v1601, 1
    %v1725 = vsel %vm777, %v1723, %v1724
    %v1726 = vrot.slane %v1602, 1
    %v1727 = vsel %vm777, %v1724, %v1726
    %v1728 = vrot.slane %v1603, 1
    %v1729 = vsel %vm777, %v1726, %v1728
    %v1730 = vrot.slane %v1604, 1
    %v1731 = vsel %vm777, %v1728, %v1730
    %v1732 = vrot.slane %v1605, 1
    %v1733 = vsel %vm777, %v1730, %v1732
    %v1734 = vrot.slane %v1606, 1
    %v1735 = vsel %vm777, %v1732, %v1734
    %v1736 = vrot.slane %v1607, 1
    %v1737 = vsel %vm777, %v1734, %v1736
    %v1738 = vrot.slane %v1608, 1
    %v1739 = vsel %vm777, %v1736, %v1738
    %v1740 = vrot.slane %v1609, 1
    %v1741 = vsel %vm777, %v1738, %v1740
    %v1742 = vrot.slane %v1610, 1
    %v1743 = vsel %vm777, %v1740, %v1742
    %v1744 = vrot.slane %v1611, 1
    %v1745 = vsel %vm777, %v1742, %v1744
    %v1746 = vrot.slane %v1612, 1
    %v1747 = vsel %vm777, %v1744, %v1746
    %v1748 = vrot.slane %v1613, 1
    %v1749 = vsel %vm777, %v1746, %v1748
    %v1750 = vrot.slane %v1614, 1
    %v1751 = vsel %vm777, %v1748, %v1750
    %v1752 = vrot.slane %v1615, 1
    %v1753 = vsel %vm777, %v1750, %v1752
    %v1770 = vsel %vm777, %v1752, 0.0
    %v1771 = vmul.f32 %v1725, %v655
    %v1772 = vmul.f32 %v1727, %v656
    %v1773 = vmul.f32 %v1729, %v657
    %v1774 = vmul.f32 %v1731, %v658
    %v1775 = vmul.f32 %v1733, %v659
    %v1776 = vmul.f32 %v1735, %v660
    %v1777 = vmul.f32 %v1737, %v661
    %v1778 = vmul.f32 %v1739, %v662
    %v1779 = vmul.f32 %v1741, %v663
    %v1780 = vmul.f32 %v1743, %v664
    %v1781 = vmul.f32 %v1745, %v665
    %v1782 = vmul.f32 %v1747, %v666
    %v1783 = vmul.f32 %v1749, %v667
    %v1784 = vmul.f32 %v1751, %v668
    %v1785 = vmul.f32 %v1753, %v669
    %v1786 = vmul.f32 %v1770, %v670
    %1787 = vrot.lane.b32.xlu0 %v1600, 64
    %v1788 = vpop.permute.xlu0 %1787
    %1789 = vrot.lane.b32.xlu0 %v1601, 64
    %v1790 = vpop.permute.xlu0 %1789
    %1791 = vrot.lane.b32.xlu0 %v1602, 64
    %v1792 = vpop.permute.xlu0 %1791
    %1793 = vrot.lane.b32.xlu0 %v1603, 64
    %v1794 = vpop.permute.xlu0 %1793
    %1795 = vrot.lane.b32.xlu0 %v1604, 64
    %v1796 = vpop.permute.xlu0 %1795
    %1797 = vrot.lane.b32.xlu0 %v1605, 64
    %v1798 = vpop.permute.xlu0 %1797
    %1799 = vrot.lane.b32.xlu0 %v1606, 64
    %v1800 = vpop.permute.xlu0 %1799
    %1801 = vrot.lane.b32.xlu0 %v1607, 64
    %v1802 = vpop.permute.xlu0 %1801
    %1803 = vrot.lane.b32.xlu0 %v1608, 64
    %v1804 = vpop.permute.xlu0 %1803
    %1805 = vrot.lane.b32.xlu0 %v1609, 64
    %v1806 = vpop.permute.xlu0 %1805
    %1807 = vrot.lane.b32.xlu0 %v1610, 64
    %v1808 = vpop.permute.xlu0 %1807
    %1809 = vrot.lane.b32.xlu0 %v1611, 64
    %v1810 = vpop.permute.xlu0 %1809
    %1811 = vrot.lane.b32.xlu0 %v1612, 64
    %v1812 = vpop.permute.xlu0 %1811
    %1813 = vrot.lane.b32.xlu0 %v1613, 64
    %v1814 = vpop.permute.xlu0 %1813
    %1815 = vrot.lane.b32.xlu0 %v1614, 64
    %v1816 = vpop.permute.xlu0 %1815
    %1817 = vrot.lane.b32.xlu0 %v1615, 64
    %v1818 = vpop.permute.xlu0 %1817
    %v1835 = vsel %vm890, %v1707, %v1788
    %v1836 = vsel %vm890, %v1708, %v1790
    %v1837 = vsel %vm890, %v1709, %v1792
    %v1838 = vsel %vm890, %v1710, %v1794
    %v1839 = vsel %vm890, %v1711, %v1796
    %v1840 = vsel %vm890, %v1712, %v1798
    %v1841 = vsel %vm890, %v1713, %v1800
    %v1842 = vsel %vm890, %v1714, %v1802
    %v1843 = vsel %vm890, %v1715, %v1804
    %v1844 = vsel %vm890, %v1716, %v1806
    %v1845 = vsel %vm890, %v1717, %v1808
    %v1846 = vsel %vm890, %v1718, %v1810
    %v1847 = vsel %vm890, %v1719, %v1812
    %v1848 = vsel %vm890, %v1720, %v1814
    %v1849 = vsel %vm890, %v1721, %v1816
    %v1850 = vsel %vm890, %v1722, %v1818
    %v1851 = vpack.c.bf16 %v1836, %v1835
    %v1852 = vpack.c.bf16 %v1772, %v1771
    %v1853 = vpack.c.bf16 %v1838, %v1837
    %v1854 = vpack.c.bf16 %v1774, %v1773
    %v1855 = vpack.c.bf16 %v1840, %v1839
    %v1856 = vpack.c.bf16 %v1776, %v1775
    %v1857 = vpack.c.bf16 %v1842, %v1841
    %v1858 = vpack.c.bf16 %v1778, %v1777
    %v1859 = vpack.c.bf16 %v1844, %v1843
    %v1860 = vpack.c.bf16 %v1780, %v1779
    %v1861 = vpack.c.bf16 %v1846, %v1845
    %v1862 = vpack.c.bf16 %v1782, %v1781
    %v1863 = vpack.c.bf16 %v1848, %v1847
    %v1864 = vpack.c.bf16 %v1784, %v1783
    %v1865 = vpack.c.bf16 %v1850, %v1849
    %v1866 = vpack.c.bf16 %v1786, %v1785
    %v1868 = vperm.slane %v1642, 0
    %v1894 = vunpack.c.l.b16 %v1617
    %v1895 = vunpack.c.l.b16 %v1618
    %v1896 = vunpack.c.l.b16 %v1619
    %v1897 = vunpack.c.l.b16 %v1620
    %v1898 = vunpack.c.l.b16 %v1621
    %v1899 = vunpack.c.l.b16 %v1622
    %v1900 = vunpack.c.l.b16 %v1623
    %v1901 = vunpack.c.l.b16 %v1624
    %v1902 = vunpack.c.l.b16 %v1625
    %v1903 = vunpack.c.l.b16 %v1626
    %v1904 = vunpack.c.l.b16 %v1627
    %v1905 = vunpack.c.l.b16 %v1628
    %v1906 = vunpack.c.l.b16 %v1629
    %v1907 = vunpack.c.l.b16 %v1630
    %v1908 = vunpack.c.l.b16 %v1631
    %v1909 = vunpack.c.l.b16 %v1632
    %v1910 = vunpack.c.l.b16 %v1633
    %v1911 = vunpack.c.l.b16 %v1634
    %v1912 = vunpack.c.l.b16 %v1635
    %v1913 = vunpack.c.l.b16 %v1636
    %v1914 = vunpack.c.l.b16 %v1637
    %v1915 = vunpack.c.l.b16 %v1638
    %v1916 = vunpack.c.l.b16 %v1639
    %v1917 = vunpack.c.l.b16 %v1640
    %v1918 = vpack.c.b16 %v1895, %v1894
    %v1919 = vpack.c.b16 %v1897, %v1896
    %v1920 = vpack.c.b16 %v1899, %v1898
    %v1921 = vpack.c.b16 %v1901, %v1900
    %v1922 = vpack.c.b16 %v1903, %v1902
    %v1923 = vpack.c.b16 %v1905, %v1904
    %v1924 = vpack.c.b16 %v1907, %v1906
    %v1925 = vpack.c.b16 %v1909, %v1908
    %v1926 = vpack.c.b16 %v1911, %v1910
    %v1927 = vpack.c.b16 %v1913, %v1912
    %v1928 = vpack.c.b16 %v1915, %v1914
    %v1929 = vpack.c.b16 %v1917, %v1916
    %v1943 = vsel %vm890, %v1852, 0
    %v1946 = vsel %vm890, %v1854, 0
    %v1949 = vsel %vm890, %v1856, 0
    %v1952 = vsel %vm890, %v1858, 0
    %v1955 = vsel %vm890, %v1860, 0
    %v1958 = vsel %vm890, %v1862, 0
    %v1961 = vsel %vm890, %v1864, 0
    %v1964 = vsel %vm890, %v1866, 0
    %1966 = vmatpush.bf16.msra.mxu0 %v1925
    %1967 = vmatpush.bf16.msra.mxu0 %v1924
    %1968 = vmatpush.bf16.msra.mxu0 %v1923
    %1969 = vmatpush.bf16.msra.mxu0 %v1922
    %1970 = vmatpush.bf16.msra.mxu0 %v1921
    %1971 = vmatpush.bf16.msra.mxu0 %v1920
    %1972 = vmatpush.bf16.msra.mxu0 %v1919
    %1973 = vmatpush.bf16.msra.mxu0 %v1918
    %1974 = vmatmul.bf16.gmra.mxu0 %v1851
    %v1975 = vpop.f32.mrf.mxu0
    %v1976 = vadd.f32 %v1868, %v1975
    %v1977 = vpop.f32.mrf.mxu0
    %v1978 = vadd.f32 %v1868, %v1977
    %1979 = vmatmul.bf16.gmra.mxu0 %v1853
    %v1980 = vpop.f32.mrf.mxu0
    %v1981 = vadd.f32 %v1868, %v1980
    %v1982 = vpop.f32.mrf.mxu0
    %v1983 = vadd.f32 %v1868, %v1982
    %1984 = vmatmul.bf16.gmra.mxu0 %v1855
    %v1985 = vpop.f32.mrf.mxu0
    %v1986 = vadd.f32 %v1868, %v1985
    %v1987 = vpop.f32.mrf.mxu0
    %v1988 = vadd.f32 %v1868, %v1987
    %1989 = vmatmul.bf16.gmra.mxu0 %v1857
    %v1990 = vpop.f32.mrf.mxu0
    %v1991 = vadd.f32 %v1868, %v1990
    %v1992 = vpop.f32.mrf.mxu0
    %v1993 = vadd.f32 %v1868, %v1992
    %1994 = vmatmul.bf16.gmra.mxu0 %v1859
    %v1995 = vpop.f32.mrf.mxu0
    %v1996 = vadd.f32 %v1868, %v1995
    %v1997 = vpop.f32.mrf.mxu0
    %v1998 = vadd.f32 %v1868, %v1997
    %1999 = vmatmul.bf16.gmra.mxu0 %v1861
    %v2000 = vpop.f32.mrf.mxu0
    %v2001 = vadd.f32 %v1868, %v2000
    %v2002 = vpop.f32.mrf.mxu0
    %v2003 = vadd.f32 %v1868, %v2002
    %2004 = vmatmul.bf16.gmra.mxu0 %v1863
    %v2005 = vpop.f32.mrf.mxu0
    %v2006 = vadd.f32 %v1868, %v2005
    %v2007 = vpop.f32.mrf.mxu0
    %v2008 = vadd.f32 %v1868, %v2007
    %2009 = vmatmul.bf16.gmra.mxu0 %v1865
    %v2010 = vpop.f32.mrf.mxu0
    %v2011 = vadd.f32 %v1868, %v2010
    %v2012 = vpop.f32.mrf.mxu0
    %v2013 = vadd.f32 %v1868, %v2012
    %2014 = vdwg.mxu0
    %2015 = vmatpush.bf16.msra.mxu0 0
    %2016 = vmatpush.bf16.msra.mxu0 0
    %2017 = vmatpush.bf16.msra.mxu0 0
    %2018 = vmatpush.bf16.msra.mxu0 0
    %2019 = vmatpush.bf16.msra.mxu0 %v1929
    %2020 = vmatpush.bf16.msra.mxu0 %v1928
    %2021 = vmatpush.bf16.msra.mxu0 %v1927
    %2022 = vmatpush.bf16.msra.mxu0 %v1926
    %2023 = vmatmul.bf16.gmra.mxu0 %v1943
    %v2024 = vpop.f32.mrf.mxu0
    %v2025 = vadd.f32 %v1976, %v2024
    %v2026 = vpop.f32.mrf.mxu0
    %v2027 = vadd.f32 %v1978, %v2026
    %2028 = vmatmul.bf16.gmra.mxu0 %v1946
    %v2029 = vpop.f32.mrf.mxu0
    %v2030 = vadd.f32 %v1981, %v2029
    %v2031 = vpop.f32.mrf.mxu0
    %v2032 = vadd.f32 %v1983, %v2031
    %2033 = vmatmul.bf16.gmra.mxu0 %v1949
    %v2034 = vpop.f32.mrf.mxu0
    %v2035 = vadd.f32 %v1986, %v2034
    %v2036 = vpop.f32.mrf.mxu0
    %v2037 = vadd.f32 %v1988, %v2036
    %2038 = vmatmul.bf16.gmra.mxu0 %v1952
    %v2039 = vpop.f32.mrf.mxu0
    %v2040 = vadd.f32 %v1991, %v2039
    %v2041 = vpop.f32.mrf.mxu0
    %v2042 = vadd.f32 %v1993, %v2041
    %2043 = vmatmul.bf16.gmra.mxu0 %v1955
    %v2044 = vpop.f32.mrf.mxu0
    %v2045 = vadd.f32 %v1996, %v2044
    %v2046 = vpop.f32.mrf.mxu0
    %v2047 = vadd.f32 %v1998, %v2046
    %2048 = vmatmul.bf16.gmra.mxu0 %v1958
    %v2049 = vpop.f32.mrf.mxu0
    %v2050 = vadd.f32 %v2001, %v2049
    %v2051 = vpop.f32.mrf.mxu0
    %v2052 = vadd.f32 %v2003, %v2051
    %2053 = vmatmul.bf16.gmra.mxu0 %v1961
    %v2054 = vpop.f32.mrf.mxu0
    %v2055 = vadd.f32 %v2006, %v2054
    %v2056 = vpop.f32.mrf.mxu0
    %v2057 = vadd.f32 %v2008, %v2056
    %2058 = vmatmul.bf16.gmra.mxu0 %v1964
    %v2059 = vpop.f32.mrf.mxu0
    %v2060 = vadd.f32 %v2011, %v2059
    %v2061 = vpop.f32.mrf.mxu0
    %v2062 = vadd.f32 %v2013, %v2061
    %2063 = vdwg.mxu0
    %v2064 = vmax.f32 %v2025, 0.0
    %v2065 = vmax.f32 %v2027, 0.0
    %v2066 = vmax.f32 %v2030, 0.0
    %v2067 = vmax.f32 %v2032, 0.0
    %v2068 = vmax.f32 %v2035, 0.0
    %v2069 = vmax.f32 %v2037, 0.0
    %v2070 = vmax.f32 %v2040, 0.0
    %v2071 = vmax.f32 %v2042, 0.0
    %v2072 = vmax.f32 %v2045, 0.0
    %v2073 = vmax.f32 %v2047, 0.0
    %v2074 = vmax.f32 %v2050, 0.0
    %v2075 = vmax.f32 %v2052, 0.0
    %v2076 = vmax.f32 %v2055, 0.0
    %v2077 = vmax.f32 %v2057, 0.0
    %v2078 = vmax.f32 %v2060, 0.0
    %v2079 = vmax.f32 %v2062, 0.0
    %s2080 = scalar_lea.vmem %s3, 288
    %v2081 = vld [vmem:[%s2080] sm:$0xf]
    %v2082 = vld [vmem:[%s2080 + $0x4] sm:$0xf]
    %v2083 = vld [vmem:[%s2080 + $0x8] sm:$0xf]
    %v2084 = vld [vmem:[%s2080 + $0xc] sm:$0xf]
    %v2085 = vld [vmem:[%s2080 + $0x10] sm:$0xf]
    %v2086 = vld [vmem:[%s2080 + $0x14] sm:$0xf]
    %v2087 = vld [vmem:[%s2080 + $0x18] sm:$0xf]
    %v2088 = vld [vmem:[%s2080 + $0x1c] sm:$0xf]
    %v2089 = vld [vmem:[%s2080 + $0x20] sm:$0xf]
    %v2090 = vld [vmem:[%s2080 + $0x24] sm:$0xf]
    %v2091 = vld [vmem:[%s2080 + $0x28] sm:$0xf]
    %v2092 = vld [vmem:[%s2080 + $0x2c] sm:$0xf]
    %v2093 = vld [vmem:[%s2080 + $0x30] sm:$0xf]
    %v2094 = vld [vmem:[%s2080 + $0x34] sm:$0xf]
    %v2095 = vld [vmem:[%s2080 + $0x38] sm:$0xf]
    %v2096 = vld [vmem:[%s2080 + $0x3c] sm:$0xf]
    %v2097 = vld [vmem:[%s2080 + $0x40] sm:$0xf]
    %v2098 = vld [vmem:[%s2080 + $0x44] sm:$0xf]
    %v2099 = vld [vmem:[%s2080 + $0x48] sm:$0xf]
    %v2100 = vld [vmem:[%s2080 + $0x4c] sm:$0xf]
    %v2101 = vld [vmem:[%s2080 + $0x50] sm:$0xf]
    %v2102 = vld [vmem:[%s2080 + $0x54] sm:$0xf]
    %v2103 = vld [vmem:[%s2080 + $0x58] sm:$0xf]
    %v2104 = vld [vmem:[%s2080 + $0x5c] sm:$0xf]
    %s2105 = scalar_lea.vmem %s4, 3
    %v2106 = vld [vmem:[%s2105] sm:$0x1]
    %v2123 = vrot.slane %v2064, 7
    %v2124 = vrot.slane %v2065, 7
    %v2125 = vsel %vm712, %v2123, %v2124
    %v2126 = vrot.slane %v2066, 7
    %v2127 = vsel %vm712, %v2124, %v2126
    %v2128 = vrot.slane %v2067, 7
    %v2129 = vsel %vm712, %v2126, %v2128
    %v2130 = vrot.slane %v2068, 7
    %v2131 = vsel %vm712, %v2128, %v2130
    %v2132 = vrot.slane %v2069, 7
    %v2133 = vsel %vm712, %v2130, %v2132
    %v2134 = vrot.slane %v2070, 7
    %v2135 = vsel %vm712, %v2132, %v2134
    %v2136 = vrot.slane %v2071, 7
    %v2137 = vsel %vm712, %v2134, %v2136
    %v2138 = vrot.slane %v2072, 7
    %v2139 = vsel %vm712, %v2136, %v2138
    %v2140 = vrot.slane %v2073, 7
    %v2141 = vsel %vm712, %v2138, %v2140
    %v2142 = vrot.slane %v2074, 7
    %v2143 = vsel %vm712, %v2140, %v2142
    %v2144 = vrot.slane %v2075, 7
    %v2145 = vsel %vm712, %v2142, %v2144
    %v2146 = vrot.slane %v2076, 7
    %v2147 = vsel %vm712, %v2144, %v2146
    %v2148 = vrot.slane %v2077, 7
    %v2149 = vsel %vm712, %v2146, %v2148
    %v2150 = vrot.slane %v2078, 7
    %v2151 = vsel %vm712, %v2148, %v2150
    %v2152 = vrot.slane %v2079, 7
    %v2153 = vsel %vm712, %v2150, %v2152
    %v2170 = vsel %vm712, 0.0, %v2123
    %v2171 = vmul.f32 %v2170, %v607
    %v2172 = vmul.f32 %v2125, %v608
    %v2173 = vmul.f32 %v2127, %v609
    %v2174 = vmul.f32 %v2129, %v610
    %v2175 = vmul.f32 %v2131, %v611
    %v2176 = vmul.f32 %v2133, %v612
    %v2177 = vmul.f32 %v2135, %v613
    %v2178 = vmul.f32 %v2137, %v614
    %v2179 = vmul.f32 %v2139, %v615
    %v2180 = vmul.f32 %v2141, %v616
    %v2181 = vmul.f32 %v2143, %v617
    %v2182 = vmul.f32 %v2145, %v618
    %v2183 = vmul.f32 %v2147, %v619
    %v2184 = vmul.f32 %v2149, %v620
    %v2185 = vmul.f32 %v2151, %v621
    %v2186 = vmul.f32 %v2153, %v622
    %v2187 = vrot.slane %v2064, 1
    %v2188 = vrot.slane %v2065, 1
    %v2189 = vsel %vm777, %v2187, %v2188
    %v2190 = vrot.slane %v2066, 1
    %v2191 = vsel %vm777, %v2188, %v2190
    %v2192 = vrot.slane %v2067, 1
    %v2193 = vsel %vm777, %v2190, %v2192
    %v2194 = vrot.slane %v2068, 1
    %v2195 = vsel %vm777, %v2192, %v2194
    %v2196 = vrot.slane %v2069, 1
    %v2197 = vsel %vm777, %v2194, %v2196
    %v2198 = vrot.slane %v2070, 1
    %v2199 = vsel %vm777, %v2196, %v2198
    %v2200 = vrot.slane %v2071, 1
    %v2201 = vsel %vm777, %v2198, %v2200
    %v2202 = vrot.slane %v2072, 1
    %v2203 = vsel %vm777, %v2200, %v2202
    %v2204 = vrot.slane %v2073, 1
    %v2205 = vsel %vm777, %v2202, %v2204
    %v2206 = vrot.slane %v2074, 1
    %v2207 = vsel %vm777, %v2204, %v2206
    %v2208 = vrot.slane %v2075, 1
    %v2209 = vsel %vm777, %v2206, %v2208
    %v2210 = vrot.slane %v2076, 1
    %v2211 = vsel %vm777, %v2208, %v2210
    %v2212 = vrot.slane %v2077, 1
    %v2213 = vsel %vm777, %v2210, %v2212
    %v2214 = vrot.slane %v2078, 1
    %v2215 = vsel %vm777, %v2212, %v2214
    %v2216 = vrot.slane %v2079, 1
    %v2217 = vsel %vm777, %v2214, %v2216
    %v2234 = vsel %vm777, %v2216, 0.0
    %v2235 = vmul.f32 %v2189, %v655
    %v2236 = vmul.f32 %v2191, %v656
    %v2237 = vmul.f32 %v2193, %v657
    %v2238 = vmul.f32 %v2195, %v658
    %v2239 = vmul.f32 %v2197, %v659
    %v2240 = vmul.f32 %v2199, %v660
    %v2241 = vmul.f32 %v2201, %v661
    %v2242 = vmul.f32 %v2203, %v662
    %v2243 = vmul.f32 %v2205, %v663
    %v2244 = vmul.f32 %v2207, %v664
    %v2245 = vmul.f32 %v2209, %v665
    %v2246 = vmul.f32 %v2211, %v666
    %v2247 = vmul.f32 %v2213, %v667
    %v2248 = vmul.f32 %v2215, %v668
    %v2249 = vmul.f32 %v2217, %v669
    %v2250 = vmul.f32 %v2234, %v670
    %2251 = vrot.lane.b32.xlu0 %v2064, 64
    %v2252 = vpop.permute.xlu0 %2251
    %2253 = vrot.lane.b32.xlu0 %v2065, 64
    %v2254 = vpop.permute.xlu0 %2253
    %2255 = vrot.lane.b32.xlu0 %v2066, 64
    %v2256 = vpop.permute.xlu0 %2255
    %2257 = vrot.lane.b32.xlu0 %v2067, 64
    %v2258 = vpop.permute.xlu0 %2257
    %2259 = vrot.lane.b32.xlu0 %v2068, 64
    %v2260 = vpop.permute.xlu0 %2259
    %2261 = vrot.lane.b32.xlu0 %v2069, 64
    %v2262 = vpop.permute.xlu0 %2261
    %2263 = vrot.lane.b32.xlu0 %v2070, 64
    %v2264 = vpop.permute.xlu0 %2263
    %2265 = vrot.lane.b32.xlu0 %v2071, 64
    %v2266 = vpop.permute.xlu0 %2265
    %2267 = vrot.lane.b32.xlu0 %v2072, 64
    %v2268 = vpop.permute.xlu0 %2267
    %2269 = vrot.lane.b32.xlu0 %v2073, 64
    %v2270 = vpop.permute.xlu0 %2269
    %2271 = vrot.lane.b32.xlu0 %v2074, 64
    %v2272 = vpop.permute.xlu0 %2271
    %2273 = vrot.lane.b32.xlu0 %v2075, 64
    %v2274 = vpop.permute.xlu0 %2273
    %2275 = vrot.lane.b32.xlu0 %v2076, 64
    %v2276 = vpop.permute.xlu0 %2275
    %2277 = vrot.lane.b32.xlu0 %v2077, 64
    %v2278 = vpop.permute.xlu0 %2277
    %2279 = vrot.lane.b32.xlu0 %v2078, 64
    %v2280 = vpop.permute.xlu0 %2279
    %2281 = vrot.lane.b32.xlu0 %v2079, 64
    %v2282 = vpop.permute.xlu0 %2281
    %v2299 = vsel %vm890, %v2171, %v2252
    %v2300 = vsel %vm890, %v2172, %v2254
    %v2301 = vsel %vm890, %v2173, %v2256
    %v2302 = vsel %vm890, %v2174, %v2258
    %v2303 = vsel %vm890, %v2175, %v2260
    %v2304 = vsel %vm890, %v2176, %v2262
    %v2305 = vsel %vm890, %v2177, %v2264
    %v2306 = vsel %vm890, %v2178, %v2266
    %v2307 = vsel %vm890, %v2179, %v2268
    %v2308 = vsel %vm890, %v2180, %v2270
    %v2309 = vsel %vm890, %v2181, %v2272
    %v2310 = vsel %vm890, %v2182, %v2274
    %v2311 = vsel %vm890, %v2183, %v2276
    %v2312 = vsel %vm890, %v2184, %v2278
    %v2313 = vsel %vm890, %v2185, %v2280
    %v2314 = vsel %vm890, %v2186, %v2282
    %v2315 = vpack.c.bf16 %v2300, %v2299
    %v2316 = vpack.c.bf16 %v2236, %v2235
    %v2317 = vpack.c.bf16 %v2302, %v2301
    %v2318 = vpack.c.bf16 %v2238, %v2237
    %v2319 = vpack.c.bf16 %v2304, %v2303
    %v2320 = vpack.c.bf16 %v2240, %v2239
    %v2321 = vpack.c.bf16 %v2306, %v2305
    %v2322 = vpack.c.bf16 %v2242, %v2241
    %v2323 = vpack.c.bf16 %v2308, %v2307
    %v2324 = vpack.c.bf16 %v2244, %v2243
    %v2325 = vpack.c.bf16 %v2310, %v2309
    %v2326 = vpack.c.bf16 %v2246, %v2245
    %v2327 = vpack.c.bf16 %v2312, %v2311
    %v2328 = vpack.c.bf16 %v2248, %v2247
    %v2329 = vpack.c.bf16 %v2314, %v2313
    %v2330 = vpack.c.bf16 %v2250, %v2249
    %v2332 = vperm.slane %v2106, 0
    %v2358 = vunpack.c.l.b16 %v2081
    %v2359 = vunpack.c.l.b16 %v2082
    %v2360 = vunpack.c.l.b16 %v2083
    %v2361 = vunpack.c.l.b16 %v2084
    %v2362 = vunpack.c.l.b16 %v2085
    %v2363 = vunpack.c.l.b16 %v2086
    %v2364 = vunpack.c.l.b16 %v2087
    %v2365 = vunpack.c.l.b16 %v2088
    %v2366 = vunpack.c.l.b16 %v2089
    %v2367 = vunpack.c.l.b16 %v2090
    %v2368 = vunpack.c.l.b16 %v2091
    %v2369 = vunpack.c.l.b16 %v2092
    %v2370 = vunpack.c.l.b16 %v2093
    %v2371 = vunpack.c.l.b16 %v2094
    %v2372 = vunpack.c.l.b16 %v2095
    %v2373 = vunpack.c.l.b16 %v2096
    %v2374 = vunpack.c.l.b16 %v2097
    %v2375 = vunpack.c.l.b16 %v2098
    %v2376 = vunpack.c.l.b16 %v2099
    %v2377 = vunpack.c.l.b16 %v2100
    %v2378 = vunpack.c.l.b16 %v2101
    %v2379 = vunpack.c.l.b16 %v2102
    %v2380 = vunpack.c.l.b16 %v2103
    %v2381 = vunpack.c.l.b16 %v2104
    %v2382 = vpack.c.b16 %v2359, %v2358
    %v2383 = vpack.c.b16 %v2361, %v2360
    %v2384 = vpack.c.b16 %v2363, %v2362
    %v2385 = vpack.c.b16 %v2365, %v2364
    %v2386 = vpack.c.b16 %v2367, %v2366
    %v2387 = vpack.c.b16 %v2369, %v2368
    %v2388 = vpack.c.b16 %v2371, %v2370
    %v2389 = vpack.c.b16 %v2373, %v2372
    %v2390 = vpack.c.b16 %v2375, %v2374
    %v2391 = vpack.c.b16 %v2377, %v2376
    %v2392 = vpack.c.b16 %v2379, %v2378
    %v2393 = vpack.c.b16 %v2381, %v2380
    %v2407 = vsel %vm890, %v2316, 0
    %v2410 = vsel %vm890, %v2318, 0
    %v2413 = vsel %vm890, %v2320, 0
    %v2416 = vsel %vm890, %v2322, 0
    %v2419 = vsel %vm890, %v2324, 0
    %v2422 = vsel %vm890, %v2326, 0
    %v2425 = vsel %vm890, %v2328, 0
    %v2428 = vsel %vm890, %v2330, 0
    %2430 = vmatpush.bf16.msra.mxu0 %v2389
    %2431 = vmatpush.bf16.msra.mxu0 %v2388
    %2432 = vmatpush.bf16.msra.mxu0 %v2387
    %2433 = vmatpush.bf16.msra.mxu0 %v2386
    %2434 = vmatpush.bf16.msra.mxu0 %v2385
    %2435 = vmatpush.bf16.msra.mxu0 %v2384
    %2436 = vmatpush.bf16.msra.mxu0 %v2383
    %2437 = vmatpush.bf16.msra.mxu0 %v2382
    %2438 = vmatmul.bf16.gmra.mxu0 %v2315
    %v2439 = vpop.f32.mrf.mxu0
    %v2440 = vadd.f32 %v2332, %v2439
    %v2441 = vpop.f32.mrf.mxu0
    %v2442 = vadd.f32 %v2332, %v2441
    %2443 = vmatmul.bf16.gmra.mxu0 %v2317
    %v2444 = vpop.f32.mrf.mxu0
    %v2445 = vadd.f32 %v2332, %v2444
    %v2446 = vpop.f32.mrf.mxu0
    %v2447 = vadd.f32 %v2332, %v2446
    %2448 = vmatmul.bf16.gmra.mxu0 %v2319
    %v2449 = vpop.f32.mrf.mxu0
    %v2450 = vadd.f32 %v2332, %v2449
    %v2451 = vpop.f32.mrf.mxu0
    %v2452 = vadd.f32 %v2332, %v2451
    %2453 = vmatmul.bf16.gmra.mxu0 %v2321
    %v2454 = vpop.f32.mrf.mxu0
    %v2455 = vadd.f32 %v2332, %v2454
    %v2456 = vpop.f32.mrf.mxu0
    %v2457 = vadd.f32 %v2332, %v2456
    %2458 = vmatmul.bf16.gmra.mxu0 %v2323
    %v2459 = vpop.f32.mrf.mxu0
    %v2460 = vadd.f32 %v2332, %v2459
    %v2461 = vpop.f32.mrf.mxu0
    %v2462 = vadd.f32 %v2332, %v2461
    %2463 = vmatmul.bf16.gmra.mxu0 %v2325
    %v2464 = vpop.f32.mrf.mxu0
    %v2465 = vadd.f32 %v2332, %v2464
    %v2466 = vpop.f32.mrf.mxu0
    %v2467 = vadd.f32 %v2332, %v2466
    %2468 = vmatmul.bf16.gmra.mxu0 %v2327
    %v2469 = vpop.f32.mrf.mxu0
    %v2470 = vadd.f32 %v2332, %v2469
    %v2471 = vpop.f32.mrf.mxu0
    %v2472 = vadd.f32 %v2332, %v2471
    %2473 = vmatmul.bf16.gmra.mxu0 %v2329
    %v2474 = vpop.f32.mrf.mxu0
    %v2475 = vadd.f32 %v2332, %v2474
    %v2476 = vpop.f32.mrf.mxu0
    %v2477 = vadd.f32 %v2332, %v2476
    %2478 = vdwg.mxu0
    %2479 = vmatpush.bf16.msra.mxu0 0
    %2480 = vmatpush.bf16.msra.mxu0 0
    %2481 = vmatpush.bf16.msra.mxu0 0
    %2482 = vmatpush.bf16.msra.mxu0 0
    %2483 = vmatpush.bf16.msra.mxu0 %v2393
    %2484 = vmatpush.bf16.msra.mxu0 %v2392
    %2485 = vmatpush.bf16.msra.mxu0 %v2391
    %2486 = vmatpush.bf16.msra.mxu0 %v2390
    %2487 = vmatmul.bf16.gmra.mxu0 %v2407
    %v2488 = vpop.f32.mrf.mxu0
    %v2489 = vadd.f32 %v2440, %v2488
    %v2490 = vpop.f32.mrf.mxu0
    %v2491 = vadd.f32 %v2442, %v2490
    %2492 = vmatmul.bf16.gmra.mxu0 %v2410
    %v2493 = vpop.f32.mrf.mxu0
    %v2494 = vadd.f32 %v2445, %v2493
    %v2495 = vpop.f32.mrf.mxu0
    %v2496 = vadd.f32 %v2447, %v2495
    %2497 = vmatmul.bf16.gmra.mxu0 %v2413
    %v2498 = vpop.f32.mrf.mxu0
    %v2499 = vadd.f32 %v2450, %v2498
    %v2500 = vpop.f32.mrf.mxu0
    %v2501 = vadd.f32 %v2452, %v2500
    %2502 = vmatmul.bf16.gmra.mxu0 %v2416
    %v2503 = vpop.f32.mrf.mxu0
    %v2504 = vadd.f32 %v2455, %v2503
    %v2505 = vpop.f32.mrf.mxu0
    %v2506 = vadd.f32 %v2457, %v2505
    %2507 = vmatmul.bf16.gmra.mxu0 %v2419
    %v2508 = vpop.f32.mrf.mxu0
    %v2509 = vadd.f32 %v2460, %v2508
    %v2510 = vpop.f32.mrf.mxu0
    %v2511 = vadd.f32 %v2462, %v2510
    %2512 = vmatmul.bf16.gmra.mxu0 %v2422
    %v2513 = vpop.f32.mrf.mxu0
    %v2514 = vadd.f32 %v2465, %v2513
    %v2515 = vpop.f32.mrf.mxu0
    %v2516 = vadd.f32 %v2467, %v2515
    %2517 = vmatmul.bf16.gmra.mxu0 %v2425
    %v2518 = vpop.f32.mrf.mxu0
    %v2519 = vadd.f32 %v2470, %v2518
    %v2520 = vpop.f32.mrf.mxu0
    %v2521 = vadd.f32 %v2472, %v2520
    %2522 = vmatmul.bf16.gmra.mxu0 %v2428
    %v2523 = vpop.f32.mrf.mxu0
    %v2524 = vadd.f32 %v2475, %v2523
    %v2525 = vpop.f32.mrf.mxu0
    %v2526 = vadd.f32 %v2477, %v2525
    %2527 = vdwg.mxu0
    %v2528 = vadd.f32 %v2489, %v1600
    %v2529 = vadd.f32 %v2491, %v1601
    %v2530 = vadd.f32 %v2494, %v1602
    %v2531 = vadd.f32 %v2496, %v1603
    %v2532 = vadd.f32 %v2499, %v1604
    %v2533 = vadd.f32 %v2501, %v1605
    %v2534 = vadd.f32 %v2504, %v1606
    %v2535 = vadd.f32 %v2506, %v1607
    %v2536 = vadd.f32 %v2509, %v1608
    %v2537 = vadd.f32 %v2511, %v1609
    %v2538 = vadd.f32 %v2514, %v1610
    %v2539 = vadd.f32 %v2516, %v1611
    %v2540 = vadd.f32 %v2519, %v1612
    %v2541 = vadd.f32 %v2521, %v1613
    %v2542 = vadd.f32 %v2524, %v1614
    %v2543 = vadd.f32 %v2526, %v1615
    %v2544 = vmax.f32 %v2528, 0.0
    %v2545 = vmax.f32 %v2529, 0.0
    %v2546 = vmax.f32 %v2530, 0.0
    %v2547 = vmax.f32 %v2531, 0.0
    %v2548 = vmax.f32 %v2532, 0.0
    %v2549 = vmax.f32 %v2533, 0.0
    %v2550 = vmax.f32 %v2534, 0.0
    %v2551 = vmax.f32 %v2535, 0.0
    %v2552 = vmax.f32 %v2536, 0.0
    %v2553 = vmax.f32 %v2537, 0.0
    %v2554 = vmax.f32 %v2538, 0.0
    %v2555 = vmax.f32 %v2539, 0.0
    %v2556 = vmax.f32 %v2540, 0.0
    %v2557 = vmax.f32 %v2541, 0.0
    %v2558 = vmax.f32 %v2542, 0.0
    %v2559 = vmax.f32 %v2543, 0.0
    %s2560 = scalar_lea.vmem %s3, 384
    %v2561 = vld [vmem:[%s2560] sm:$0xf]
    %v2562 = vld [vmem:[%s2560 + $0x4] sm:$0xf]
    %v2563 = vld [vmem:[%s2560 + $0x8] sm:$0xf]
    %v2564 = vld [vmem:[%s2560 + $0xc] sm:$0xf]
    %v2565 = vld [vmem:[%s2560 + $0x10] sm:$0xf]
    %v2566 = vld [vmem:[%s2560 + $0x14] sm:$0xf]
    %v2567 = vld [vmem:[%s2560 + $0x18] sm:$0xf]
    %v2568 = vld [vmem:[%s2560 + $0x1c] sm:$0xf]
    %v2569 = vld [vmem:[%s2560 + $0x20] sm:$0xf]
    %v2570 = vld [vmem:[%s2560 + $0x24] sm:$0xf]
    %v2571 = vld [vmem:[%s2560 + $0x28] sm:$0xf]
    %v2572 = vld [vmem:[%s2560 + $0x2c] sm:$0xf]
    %v2573 = vld [vmem:[%s2560 + $0x30] sm:$0xf]
    %v2574 = vld [vmem:[%s2560 + $0x34] sm:$0xf]
    %v2575 = vld [vmem:[%s2560 + $0x38] sm:$0xf]
    %v2576 = vld [vmem:[%s2560 + $0x3c] sm:$0xf]
    %v2577 = vld [vmem:[%s2560 + $0x40] sm:$0xf]
    %v2578 = vld [vmem:[%s2560 + $0x44] sm:$0xf]
    %v2579 = vld [vmem:[%s2560 + $0x48] sm:$0xf]
    %v2580 = vld [vmem:[%s2560 + $0x4c] sm:$0xf]
    %v2581 = vld [vmem:[%s2560 + $0x50] sm:$0xf]
    %v2582 = vld [vmem:[%s2560 + $0x54] sm:$0xf]
    %v2583 = vld [vmem:[%s2560 + $0x58] sm:$0xf]
    %v2584 = vld [vmem:[%s2560 + $0x5c] sm:$0xf]
    %s2585 = scalar_lea.vmem %s4, 4
    %v2586 = vld [vmem:[%s2585] sm:$0x1]
    %v2603 = vrot.slane %v2544, 7
    %v2604 = vrot.slane %v2545, 7
    %v2605 = vsel %vm712, %v2603, %v2604
    %v2606 = vrot.slane %v2546, 7
    %v2607 = vsel %vm712, %v2604, %v2606
    %v2608 = vrot.slane %v2547, 7
    %v2609 = vsel %vm712, %v2606, %v2608
    %v2610 = vrot.slane %v2548, 7
    %v2611 = vsel %vm712, %v2608, %v2610
    %v2612 = vrot.slane %v2549, 7
    %v2613 = vsel %vm712, %v2610, %v2612
    %v2614 = vrot.slane %v2550, 7
    %v2615 = vsel %vm712, %v2612, %v2614
    %v2616 = vrot.slane %v2551, 7
    %v2617 = vsel %vm712, %v2614, %v2616
    %v2618 = vrot.slane %v2552, 7
    %v2619 = vsel %vm712, %v2616, %v2618
    %v2620 = vrot.slane %v2553, 7
    %v2621 = vsel %vm712, %v2618, %v2620
    %v2622 = vrot.slane %v2554, 7
    %v2623 = vsel %vm712, %v2620, %v2622
    %v2624 = vrot.slane %v2555, 7
    %v2625 = vsel %vm712, %v2622, %v2624
    %v2626 = vrot.slane %v2556, 7
    %v2627 = vsel %vm712, %v2624, %v2626
    %v2628 = vrot.slane %v2557, 7
    %v2629 = vsel %vm712, %v2626, %v2628
    %v2630 = vrot.slane %v2558, 7
    %v2631 = vsel %vm712, %v2628, %v2630
    %v2632 = vrot.slane %v2559, 7
    %v2633 = vsel %vm712, %v2630, %v2632
    %v2650 = vsel %vm712, 0.0, %v2603
    %v2651 = vmul.f32 %v2650, %v607
    %v2652 = vmul.f32 %v2605, %v608
    %v2653 = vmul.f32 %v2607, %v609
    %v2654 = vmul.f32 %v2609, %v610
    %v2655 = vmul.f32 %v2611, %v611
    %v2656 = vmul.f32 %v2613, %v612
    %v2657 = vmul.f32 %v2615, %v613
    %v2658 = vmul.f32 %v2617, %v614
    %v2659 = vmul.f32 %v2619, %v615
    %v2660 = vmul.f32 %v2621, %v616
    %v2661 = vmul.f32 %v2623, %v617
    %v2662 = vmul.f32 %v2625, %v618
    %v2663 = vmul.f32 %v2627, %v619
    %v2664 = vmul.f32 %v2629, %v620
    %v2665 = vmul.f32 %v2631, %v621
    %v2666 = vmul.f32 %v2633, %v622
    %v2667 = vrot.slane %v2544, 1
    %v2668 = vrot.slane %v2545, 1
    %v2669 = vsel %vm777, %v2667, %v2668
    %v2670 = vrot.slane %v2546, 1
    %v2671 = vsel %vm777, %v2668, %v2670
    %v2672 = vrot.slane %v2547, 1
    %v2673 = vsel %vm777, %v2670, %v2672
    %v2674 = vrot.slane %v2548, 1
    %v2675 = vsel %vm777, %v2672, %v2674
    %v2676 = vrot.slane %v2549, 1
    %v2677 = vsel %vm777, %v2674, %v2676
    %v2678 = vrot.slane %v2550, 1
    %v2679 = vsel %vm777, %v2676, %v2678
    %v2680 = vrot.slane %v2551, 1
    %v2681 = vsel %vm777, %v2678, %v2680
    %v2682 = vrot.slane %v2552, 1
    %v2683 = vsel %vm777, %v2680, %v2682
    %v2684 = vrot.slane %v2553, 1
    %v2685 = vsel %vm777, %v2682, %v2684
    %v2686 = vrot.slane %v2554, 1
    %v2687 = vsel %vm777, %v2684, %v2686
    %v2688 = vrot.slane %v2555, 1
    %v2689 = vsel %vm777, %v2686, %v2688
    %v2690 = vrot.slane %v2556, 1
    %v2691 = vsel %vm777, %v2688, %v2690
    %v2692 = vrot.slane %v2557, 1
    %v2693 = vsel %vm777, %v2690, %v2692
    %v2694 = vrot.slane %v2558, 1
    %v2695 = vsel %vm777, %v2692, %v2694
    %v2696 = vrot.slane %v2559, 1
    %v2697 = vsel %vm777, %v2694, %v2696
    %v2714 = vsel %vm777, %v2696, 0.0
    %v2715 = vmul.f32 %v2669, %v655
    %v2716 = vmul.f32 %v2671, %v656
    %v2717 = vmul.f32 %v2673, %v657
    %v2718 = vmul.f32 %v2675, %v658
    %v2719 = vmul.f32 %v2677, %v659
    %v2720 = vmul.f32 %v2679, %v660
    %v2721 = vmul.f32 %v2681, %v661
    %v2722 = vmul.f32 %v2683, %v662
    %v2723 = vmul.f32 %v2685, %v663
    %v2724 = vmul.f32 %v2687, %v664
    %v2725 = vmul.f32 %v2689, %v665
    %v2726 = vmul.f32 %v2691, %v666
    %v2727 = vmul.f32 %v2693, %v667
    %v2728 = vmul.f32 %v2695, %v668
    %v2729 = vmul.f32 %v2697, %v669
    %v2730 = vmul.f32 %v2714, %v670
    %2731 = vrot.lane.b32.xlu0 %v2544, 64
    %v2732 = vpop.permute.xlu0 %2731
    %2733 = vrot.lane.b32.xlu0 %v2545, 64
    %v2734 = vpop.permute.xlu0 %2733
    %2735 = vrot.lane.b32.xlu0 %v2546, 64
    %v2736 = vpop.permute.xlu0 %2735
    %2737 = vrot.lane.b32.xlu0 %v2547, 64
    %v2738 = vpop.permute.xlu0 %2737
    %2739 = vrot.lane.b32.xlu0 %v2548, 64
    %v2740 = vpop.permute.xlu0 %2739
    %2741 = vrot.lane.b32.xlu0 %v2549, 64
    %v2742 = vpop.permute.xlu0 %2741
    %2743 = vrot.lane.b32.xlu0 %v2550, 64
    %v2744 = vpop.permute.xlu0 %2743
    %2745 = vrot.lane.b32.xlu0 %v2551, 64
    %v2746 = vpop.permute.xlu0 %2745
    %2747 = vrot.lane.b32.xlu0 %v2552, 64
    %v2748 = vpop.permute.xlu0 %2747
    %2749 = vrot.lane.b32.xlu0 %v2553, 64
    %v2750 = vpop.permute.xlu0 %2749
    %2751 = vrot.lane.b32.xlu0 %v2554, 64
    %v2752 = vpop.permute.xlu0 %2751
    %2753 = vrot.lane.b32.xlu0 %v2555, 64
    %v2754 = vpop.permute.xlu0 %2753
    %2755 = vrot.lane.b32.xlu0 %v2556, 64
    %v2756 = vpop.permute.xlu0 %2755
    %2757 = vrot.lane.b32.xlu0 %v2557, 64
    %v2758 = vpop.permute.xlu0 %2757
    %2759 = vrot.lane.b32.xlu0 %v2558, 64
    %v2760 = vpop.permute.xlu0 %2759
    %2761 = vrot.lane.b32.xlu0 %v2559, 64
    %v2762 = vpop.permute.xlu0 %2761
    %v2779 = vsel %vm890, %v2651, %v2732
    %v2780 = vsel %vm890, %v2652, %v2734
    %v2781 = vsel %vm890, %v2653, %v2736
    %v2782 = vsel %vm890, %v2654, %v2738
    %v2783 = vsel %vm890, %v2655, %v2740
    %v2784 = vsel %vm890, %v2656, %v2742
    %v2785 = vsel %vm890, %v2657, %v2744
    %v2786 = vsel %vm890, %v2658, %v2746
    %v2787 = vsel %vm890, %v2659, %v2748
    %v2788 = vsel %vm890, %v2660, %v2750
    %v2789 = vsel %vm890, %v2661, %v2752
    %v2790 = vsel %vm890, %v2662, %v2754
    %v2791 = vsel %vm890, %v2663, %v2756
    %v2792 = vsel %vm890, %v2664, %v2758
    %v2793 = vsel %vm890, %v2665, %v2760
    %v2794 = vsel %vm890, %v2666, %v2762
    %v2795 = vpack.c.bf16 %v2780, %v2779
    %v2796 = vpack.c.bf16 %v2716, %v2715
    %v2797 = vpack.c.bf16 %v2782, %v2781
    %v2798 = vpack.c.bf16 %v2718, %v2717
    %v2799 = vpack.c.bf16 %v2784, %v2783
    %v2800 = vpack.c.bf16 %v2720, %v2719
    %v2801 = vpack.c.bf16 %v2786, %v2785
    %v2802 = vpack.c.bf16 %v2722, %v2721
    %v2803 = vpack.c.bf16 %v2788, %v2787
    %v2804 = vpack.c.bf16 %v2724, %v2723
    %v2805 = vpack.c.bf16 %v2790, %v2789
    %v2806 = vpack.c.bf16 %v2726, %v2725
    %v2807 = vpack.c.bf16 %v2792, %v2791
    %v2808 = vpack.c.bf16 %v2728, %v2727
    %v2809 = vpack.c.bf16 %v2794, %v2793
    %v2810 = vpack.c.bf16 %v2730, %v2729
    %v2812 = vperm.slane %v2586, 0
    %v2838 = vunpack.c.l.b16 %v2561
    %v2839 = vunpack.c.l.b16 %v2562
    %v2840 = vunpack.c.l.b16 %v2563
    %v2841 = vunpack.c.l.b16 %v2564
    %v2842 = vunpack.c.l.b16 %v2565
    %v2843 = vunpack.c.l.b16 %v2566
    %v2844 = vunpack.c.l.b16 %v2567
    %v2845 = vunpack.c.l.b16 %v2568
    %v2846 = vunpack.c.l.b16 %v2569
    %v2847 = vunpack.c.l.b16 %v2570
    %v2848 = vunpack.c.l.b16 %v2571
    %v2849 = vunpack.c.l.b16 %v2572
    %v2850 = vunpack.c.l.b16 %v2573
    %v2851 = vunpack.c.l.b16 %v2574
    %v2852 = vunpack.c.l.b16 %v2575
    %v2853 = vunpack.c.l.b16 %v2576
    %v2854 = vunpack.c.l.b16 %v2577
    %v2855 = vunpack.c.l.b16 %v2578
    %v2856 = vunpack.c.l.b16 %v2579
    %v2857 = vunpack.c.l.b16 %v2580
    %v2858 = vunpack.c.l.b16 %v2581
    %v2859 = vunpack.c.l.b16 %v2582
    %v2860 = vunpack.c.l.b16 %v2583
    %v2861 = vunpack.c.l.b16 %v2584
    %v2862 = vpack.c.b16 %v2839, %v2838
    %v2863 = vpack.c.b16 %v2841, %v2840
    %v2864 = vpack.c.b16 %v2843, %v2842
    %v2865 = vpack.c.b16 %v2845, %v2844
    %v2866 = vpack.c.b16 %v2847, %v2846
    %v2867 = vpack.c.b16 %v2849, %v2848
    %v2868 = vpack.c.b16 %v2851, %v2850
    %v2869 = vpack.c.b16 %v2853, %v2852
    %v2870 = vpack.c.b16 %v2855, %v2854
    %v2871 = vpack.c.b16 %v2857, %v2856
    %v2872 = vpack.c.b16 %v2859, %v2858
    %v2873 = vpack.c.b16 %v2861, %v2860
    %v2887 = vsel %vm890, %v2796, 0
    %v2890 = vsel %vm890, %v2798, 0
    %v2893 = vsel %vm890, %v2800, 0
    %v2896 = vsel %vm890, %v2802, 0
    %v2899 = vsel %vm890, %v2804, 0
    %v2902 = vsel %vm890, %v2806, 0
    %v2905 = vsel %vm890, %v2808, 0
    %v2908 = vsel %vm890, %v2810, 0
    %2910 = vmatpush.bf16.msra.mxu0 %v2869
    %2911 = vmatpush.bf16.msra.mxu0 %v2868
    %2912 = vmatpush.bf16.msra.mxu0 %v2867
    %2913 = vmatpush.bf16.msra.mxu0 %v2866
    %2914 = vmatpush.bf16.msra.mxu0 %v2865
    %2915 = vmatpush.bf16.msra.mxu0 %v2864
    %2916 = vmatpush.bf16.msra.mxu0 %v2863
    %2917 = vmatpush.bf16.msra.mxu0 %v2862
    %2918 = vmatmul.bf16.gmra.mxu0 %v2795
    %v2919 = vpop.f32.mrf.mxu0
    %v2920 = vadd.f32 %v2812, %v2919
    %v2921 = vpop.f32.mrf.mxu0
    %v2922 = vadd.f32 %v2812, %v2921
    %2923 = vmatmul.bf16.gmra.mxu0 %v2797
    %v2924 = vpop.f32.mrf.mxu0
    %v2925 = vadd.f32 %v2812, %v2924
    %v2926 = vpop.f32.mrf.mxu0
    %v2927 = vadd.f32 %v2812, %v2926
    %2928 = vmatmul.bf16.gmra.mxu0 %v2799
    %v2929 = vpop.f32.mrf.mxu0
    %v2930 = vadd.f32 %v2812, %v2929
    %v2931 = vpop.f32.mrf.mxu0
    %v2932 = vadd.f32 %v2812, %v2931
    %2933 = vmatmul.bf16.gmra.mxu0 %v2801
    %v2934 = vpop.f32.mrf.mxu0
    %v2935 = vadd.f32 %v2812, %v2934
    %v2936 = vpop.f32.mrf.mxu0
    %v2937 = vadd.f32 %v2812, %v2936
    %2938 = vmatmul.bf16.gmra.mxu0 %v2803
    %v2939 = vpop.f32.mrf.mxu0
    %v2940 = vadd.f32 %v2812, %v2939
    %v2941 = vpop.f32.mrf.mxu0
    %v2942 = vadd.f32 %v2812, %v2941
    %2943 = vmatmul.bf16.gmra.mxu0 %v2805
    %v2944 = vpop.f32.mrf.mxu0
    %v2945 = vadd.f32 %v2812, %v2944
    %v2946 = vpop.f32.mrf.mxu0
    %v2947 = vadd.f32 %v2812, %v2946
    %2948 = vmatmul.bf16.gmra.mxu0 %v2807
    %v2949 = vpop.f32.mrf.mxu0
    %v2950 = vadd.f32 %v2812, %v2949
    %v2951 = vpop.f32.mrf.mxu0
    %v2952 = vadd.f32 %v2812, %v2951
    %2953 = vmatmul.bf16.gmra.mxu0 %v2809
    %v2954 = vpop.f32.mrf.mxu0
    %v2955 = vadd.f32 %v2812, %v2954
    %v2956 = vpop.f32.mrf.mxu0
    %v2957 = vadd.f32 %v2812, %v2956
    %2958 = vdwg.mxu0
    %2959 = vmatpush.bf16.msra.mxu0 0
    %2960 = vmatpush.bf16.msra.mxu0 0
    %2961 = vmatpush.bf16.msra.mxu0 0
    %2962 = vmatpush.bf16.msra.mxu0 0
    %2963 = vmatpush.bf16.msra.mxu0 %v2873
    %2964 = vmatpush.bf16.msra.mxu0 %v2872
    %2965 = vmatpush.bf16.msra.mxu0 %v2871
    %2966 = vmatpush.bf16.msra.mxu0 %v2870
    %2967 = vmatmul.bf16.gmra.mxu0 %v2887
    %v2968 = vpop.f32.mrf.mxu0
    %v2969 = vadd.f32 %v2920, %v2968
    %v2970 = vpop.f32.mrf.mxu0
    %v2971 = vadd.f32 %v2922, %v2970
    %2972 = vmatmul.bf16.gmra.mxu0 %v2890
    %v2973 = vpop.f32.mrf.mxu0
    %v2974 = vadd.f32 %v2925, %v2973
    %v2975 = vpop.f32.mrf.mxu0
    %v2976 = vadd.f32 %v2927, %v2975
    %2977 = vmatmul.bf16.gmra.mxu0 %v2893
    %v2978 = vpop.f32.mrf.mxu0
    %v2979 = vadd.f32 %v2930, %v2978
    %v2980 = vpop.f32.mrf.mxu0
    %v2981 = vadd.f32 %v2932, %v2980
    %2982 = vmatmul.bf16.gmra.mxu0 %v2896
    %v2983 = vpop.f32.mrf.mxu0
    %v2984 = vadd.f32 %v2935, %v2983
    %v2985 = vpop.f32.mrf.mxu0
    %v2986 = vadd.f32 %v2937, %v2985
    %2987 = vmatmul.bf16.gmra.mxu0 %v2899
    %v2988 = vpop.f32.mrf.mxu0
    %v2989 = vadd.f32 %v2940, %v2988
    %v2990 = vpop.f32.mrf.mxu0
    %v2991 = vadd.f32 %v2942, %v2990
    %2992 = vmatmul.bf16.gmra.mxu0 %v2902
    %v2993 = vpop.f32.mrf.mxu0
    %v2994 = vadd.f32 %v2945, %v2993
    %v2995 = vpop.f32.mrf.mxu0
    %v2996 = vadd.f32 %v2947, %v2995
    %2997 = vmatmul.bf16.gmra.mxu0 %v2905
    %v2998 = vpop.f32.mrf.mxu0
    %v2999 = vadd.f32 %v2950, %v2998
    %v3000 = vpop.f32.mrf.mxu0
    %v3001 = vadd.f32 %v2952, %v3000
    %3002 = vmatmul.bf16.gmra.mxu0 %v2908
    %v3003 = vpop.f32.mrf.mxu0
    %v3004 = vadd.f32 %v2955, %v3003
    %v3005 = vpop.f32.mrf.mxu0
    %v3006 = vadd.f32 %v2957, %v3005
    %3007 = vdwg.mxu0
    %v3008 = vmax.f32 %v2969, 0.0
    %v3009 = vmax.f32 %v2971, 0.0
    %v3010 = vmax.f32 %v2974, 0.0
    %v3011 = vmax.f32 %v2976, 0.0
    %v3012 = vmax.f32 %v2979, 0.0
    %v3013 = vmax.f32 %v2981, 0.0
    %v3014 = vmax.f32 %v2984, 0.0
    %v3015 = vmax.f32 %v2986, 0.0
    %v3016 = vmax.f32 %v2989, 0.0
    %v3017 = vmax.f32 %v2991, 0.0
    %v3018 = vmax.f32 %v2994, 0.0
    %v3019 = vmax.f32 %v2996, 0.0
    %v3020 = vmax.f32 %v2999, 0.0
    %v3021 = vmax.f32 %v3001, 0.0
    %v3022 = vmax.f32 %v3004, 0.0
    %v3023 = vmax.f32 %v3006, 0.0
    %s3024 = scalar_lea.vmem %s3, 480
    %v3025 = vld [vmem:[%s3024] sm:$0xf]
    %v3026 = vld [vmem:[%s3024 + $0x4] sm:$0xf]
    %v3027 = vld [vmem:[%s3024 + $0x8] sm:$0xf]
    %v3028 = vld [vmem:[%s3024 + $0xc] sm:$0xf]
    %v3029 = vld [vmem:[%s3024 + $0x10] sm:$0xf]
    %v3030 = vld [vmem:[%s3024 + $0x14] sm:$0xf]
    %v3031 = vld [vmem:[%s3024 + $0x18] sm:$0xf]
    %v3032 = vld [vmem:[%s3024 + $0x1c] sm:$0xf]
    %v3033 = vld [vmem:[%s3024 + $0x20] sm:$0xf]
    %v3034 = vld [vmem:[%s3024 + $0x24] sm:$0xf]
    %v3035 = vld [vmem:[%s3024 + $0x28] sm:$0xf]
    %v3036 = vld [vmem:[%s3024 + $0x2c] sm:$0xf]
    %v3037 = vld [vmem:[%s3024 + $0x30] sm:$0xf]
    %v3038 = vld [vmem:[%s3024 + $0x34] sm:$0xf]
    %v3039 = vld [vmem:[%s3024 + $0x38] sm:$0xf]
    %v3040 = vld [vmem:[%s3024 + $0x3c] sm:$0xf]
    %v3041 = vld [vmem:[%s3024 + $0x40] sm:$0xf]
    %v3042 = vld [vmem:[%s3024 + $0x44] sm:$0xf]
    %v3043 = vld [vmem:[%s3024 + $0x48] sm:$0xf]
    %v3044 = vld [vmem:[%s3024 + $0x4c] sm:$0xf]
    %v3045 = vld [vmem:[%s3024 + $0x50] sm:$0xf]
    %v3046 = vld [vmem:[%s3024 + $0x54] sm:$0xf]
    %v3047 = vld [vmem:[%s3024 + $0x58] sm:$0xf]
    %v3048 = vld [vmem:[%s3024 + $0x5c] sm:$0xf]
    %s3049 = scalar_lea.vmem %s4, 5
    %v3050 = vld [vmem:[%s3049] sm:$0x1]
    %v3067 = vrot.slane %v3008, 7
    %v3068 = vrot.slane %v3009, 7
    %v3069 = vsel %vm712, %v3067, %v3068
    %v3070 = vrot.slane %v3010, 7
    %v3071 = vsel %vm712, %v3068, %v3070
    %v3072 = vrot.slane %v3011, 7
    %v3073 = vsel %vm712, %v3070, %v3072
    %v3074 = vrot.slane %v3012, 7
    %v3075 = vsel %vm712, %v3072, %v3074
    %v3076 = vrot.slane %v3013, 7
    %v3077 = vsel %vm712, %v3074, %v3076
    %v3078 = vrot.slane %v3014, 7
    %v3079 = vsel %vm712, %v3076, %v3078
    %v3080 = vrot.slane %v3015, 7
    %v3081 = vsel %vm712, %v3078, %v3080
    %v3082 = vrot.slane %v3016, 7
    %v3083 = vsel %vm712, %v3080, %v3082
    %v3084 = vrot.slane %v3017, 7
    %v3085 = vsel %vm712, %v3082, %v3084
    %v3086 = vrot.slane %v3018, 7
    %v3087 = vsel %vm712, %v3084, %v3086
    %v3088 = vrot.slane %v3019, 7
    %v3089 = vsel %vm712, %v3086, %v3088
    %v3090 = vrot.slane %v3020, 7
    %v3091 = vsel %vm712, %v3088, %v3090
    %v3092 = vrot.slane %v3021, 7
    %v3093 = vsel %vm712, %v3090, %v3092
    %v3094 = vrot.slane %v3022, 7
    %v3095 = vsel %vm712, %v3092, %v3094
    %v3096 = vrot.slane %v3023, 7
    %v3097 = vsel %vm712, %v3094, %v3096
    %v3114 = vsel %vm712, 0.0, %v3067
    %v3115 = vmul.f32 %v3114, %v607
    %v3116 = vmul.f32 %v3069, %v608
    %v3117 = vmul.f32 %v3071, %v609
    %v3118 = vmul.f32 %v3073, %v610
    %v3119 = vmul.f32 %v3075, %v611
    %v3120 = vmul.f32 %v3077, %v612
    %v3121 = vmul.f32 %v3079, %v613
    %v3122 = vmul.f32 %v3081, %v614
    %v3123 = vmul.f32 %v3083, %v615
    %v3124 = vmul.f32 %v3085, %v616
    %v3125 = vmul.f32 %v3087, %v617
    %v3126 = vmul.f32 %v3089, %v618
    %v3127 = vmul.f32 %v3091, %v619
    %v3128 = vmul.f32 %v3093, %v620
    %v3129 = vmul.f32 %v3095, %v621
    %v3130 = vmul.f32 %v3097, %v622
    %v3131 = vrot.slane %v3008, 1
    %v3132 = vrot.slane %v3009, 1
    %v3133 = vsel %vm777, %v3131, %v3132
    %v3134 = vrot.slane %v3010, 1
    %v3135 = vsel %vm777, %v3132, %v3134
    %v3136 = vrot.slane %v3011, 1
    %v3137 = vsel %vm777, %v3134, %v3136
    %v3138 = vrot.slane %v3012, 1
    %v3139 = vsel %vm777, %v3136, %v3138
    %v3140 = vrot.slane %v3013, 1
    %v3141 = vsel %vm777, %v3138, %v3140
    %v3142 = vrot.slane %v3014, 1
    %v3143 = vsel %vm777, %v3140, %v3142
    %v3144 = vrot.slane %v3015, 1
    %v3145 = vsel %vm777, %v3142, %v3144
    %v3146 = vrot.slane %v3016, 1
    %v3147 = vsel %vm777, %v3144, %v3146
    %v3148 = vrot.slane %v3017, 1
    %v3149 = vsel %vm777, %v3146, %v3148
    %v3150 = vrot.slane %v3018, 1
    %v3151 = vsel %vm777, %v3148, %v3150
    %v3152 = vrot.slane %v3019, 1
    %v3153 = vsel %vm777, %v3150, %v3152
    %v3154 = vrot.slane %v3020, 1
    %v3155 = vsel %vm777, %v3152, %v3154
    %v3156 = vrot.slane %v3021, 1
    %v3157 = vsel %vm777, %v3154, %v3156
    %v3158 = vrot.slane %v3022, 1
    %v3159 = vsel %vm777, %v3156, %v3158
    %v3160 = vrot.slane %v3023, 1
    %v3161 = vsel %vm777, %v3158, %v3160
    %v3178 = vsel %vm777, %v3160, 0.0
    %v3179 = vmul.f32 %v3133, %v655
    %v3180 = vmul.f32 %v3135, %v656
    %v3181 = vmul.f32 %v3137, %v657
    %v3182 = vmul.f32 %v3139, %v658
    %v3183 = vmul.f32 %v3141, %v659
    %v3184 = vmul.f32 %v3143, %v660
    %v3185 = vmul.f32 %v3145, %v661
    %v3186 = vmul.f32 %v3147, %v662
    %v3187 = vmul.f32 %v3149, %v663
    %v3188 = vmul.f32 %v3151, %v664
    %v3189 = vmul.f32 %v3153, %v665
    %v3190 = vmul.f32 %v3155, %v666
    %v3191 = vmul.f32 %v3157, %v667
    %v3192 = vmul.f32 %v3159, %v668
    %v3193 = vmul.f32 %v3161, %v669
    %v3194 = vmul.f32 %v3178, %v670
    %3195 = vrot.lane.b32.xlu0 %v3008, 64
    %v3196 = vpop.permute.xlu0 %3195
    %3197 = vrot.lane.b32.xlu0 %v3009, 64
    %v3198 = vpop.permute.xlu0 %3197
    %3199 = vrot.lane.b32.xlu0 %v3010, 64
    %v3200 = vpop.permute.xlu0 %3199
    %3201 = vrot.lane.b32.xlu0 %v3011, 64
    %v3202 = vpop.permute.xlu0 %3201
    %3203 = vrot.lane.b32.xlu0 %v3012, 64
    %v3204 = vpop.permute.xlu0 %3203
    %3205 = vrot.lane.b32.xlu0 %v3013, 64
    %v3206 = vpop.permute.xlu0 %3205
    %3207 = vrot.lane.b32.xlu0 %v3014, 64
    %v3208 = vpop.permute.xlu0 %3207
    %3209 = vrot.lane.b32.xlu0 %v3015, 64
    %v3210 = vpop.permute.xlu0 %3209
    %3211 = vrot.lane.b32.xlu0 %v3016, 64
    %v3212 = vpop.permute.xlu0 %3211
    %3213 = vrot.lane.b32.xlu0 %v3017, 64
    %v3214 = vpop.permute.xlu0 %3213
    %3215 = vrot.lane.b32.xlu0 %v3018, 64
    %v3216 = vpop.permute.xlu0 %3215
    %3217 = vrot.lane.b32.xlu0 %v3019, 64
    %v3218 = vpop.permute.xlu0 %3217
    %3219 = vrot.lane.b32.xlu0 %v3020, 64
    %v3220 = vpop.permute.xlu0 %3219
    %3221 = vrot.lane.b32.xlu0 %v3021, 64
    %v3222 = vpop.permute.xlu0 %3221
    %3223 = vrot.lane.b32.xlu0 %v3022, 64
    %v3224 = vpop.permute.xlu0 %3223
    %3225 = vrot.lane.b32.xlu0 %v3023, 64
    %v3226 = vpop.permute.xlu0 %3225
    %v3243 = vsel %vm890, %v3115, %v3196
    %v3244 = vsel %vm890, %v3116, %v3198
    %v3245 = vsel %vm890, %v3117, %v3200
    %v3246 = vsel %vm890, %v3118, %v3202
    %v3247 = vsel %vm890, %v3119, %v3204
    %v3248 = vsel %vm890, %v3120, %v3206
    %v3249 = vsel %vm890, %v3121, %v3208
    %v3250 = vsel %vm890, %v3122, %v3210
    %v3251 = vsel %vm890, %v3123, %v3212
    %v3252 = vsel %vm890, %v3124, %v3214
    %v3253 = vsel %vm890, %v3125, %v3216
    %v3254 = vsel %vm890, %v3126, %v3218
    %v3255 = vsel %vm890, %v3127, %v3220
    %v3256 = vsel %vm890, %v3128, %v3222
    %v3257 = vsel %vm890, %v3129, %v3224
    %v3258 = vsel %vm890, %v3130, %v3226
    %v3259 = vpack.c.bf16 %v3244, %v3243
    %v3260 = vpack.c.bf16 %v3180, %v3179
    %v3261 = vpack.c.bf16 %v3246, %v3245
    %v3262 = vpack.c.bf16 %v3182, %v3181
    %v3263 = vpack.c.bf16 %v3248, %v3247
    %v3264 = vpack.c.bf16 %v3184, %v3183
    %v3265 = vpack.c.bf16 %v3250, %v3249
    %v3266 = vpack.c.bf16 %v3186, %v3185
    %v3267 = vpack.c.bf16 %v3252, %v3251
    %v3268 = vpack.c.bf16 %v3188, %v3187
    %v3269 = vpack.c.bf16 %v3254, %v3253
    %v3270 = vpack.c.bf16 %v3190, %v3189
    %v3271 = vpack.c.bf16 %v3256, %v3255
    %v3272 = vpack.c.bf16 %v3192, %v3191
    %v3273 = vpack.c.bf16 %v3258, %v3257
    %v3274 = vpack.c.bf16 %v3194, %v3193
    %v3276 = vperm.slane %v3050, 0
    %v3302 = vunpack.c.l.b16 %v3025
    %v3303 = vunpack.c.l.b16 %v3026
    %v3304 = vunpack.c.l.b16 %v3027
    %v3305 = vunpack.c.l.b16 %v3028
    %v3306 = vunpack.c.l.b16 %v3029
    %v3307 = vunpack.c.l.b16 %v3030
    %v3308 = vunpack.c.l.b16 %v3031
    %v3309 = vunpack.c.l.b16 %v3032
    %v3310 = vunpack.c.l.b16 %v3033
    %v3311 = vunpack.c.l.b16 %v3034
    %v3312 = vunpack.c.l.b16 %v3035
    %v3313 = vunpack.c.l.b16 %v3036
    %v3314 = vunpack.c.l.b16 %v3037
    %v3315 = vunpack.c.l.b16 %v3038
    %v3316 = vunpack.c.l.b16 %v3039
    %v3317 = vunpack.c.l.b16 %v3040
    %v3318 = vunpack.c.l.b16 %v3041
    %v3319 = vunpack.c.l.b16 %v3042
    %v3320 = vunpack.c.l.b16 %v3043
    %v3321 = vunpack.c.l.b16 %v3044
    %v3322 = vunpack.c.l.b16 %v3045
    %v3323 = vunpack.c.l.b16 %v3046
    %v3324 = vunpack.c.l.b16 %v3047
    %v3325 = vunpack.c.l.b16 %v3048
    %v3326 = vpack.c.b16 %v3303, %v3302
    %v3327 = vpack.c.b16 %v3305, %v3304
    %v3328 = vpack.c.b16 %v3307, %v3306
    %v3329 = vpack.c.b16 %v3309, %v3308
    %v3330 = vpack.c.b16 %v3311, %v3310
    %v3331 = vpack.c.b16 %v3313, %v3312
    %v3332 = vpack.c.b16 %v3315, %v3314
    %v3333 = vpack.c.b16 %v3317, %v3316
    %v3334 = vpack.c.b16 %v3319, %v3318
    %v3335 = vpack.c.b16 %v3321, %v3320
    %v3336 = vpack.c.b16 %v3323, %v3322
    %v3337 = vpack.c.b16 %v3325, %v3324
    %v3351 = vsel %vm890, %v3260, 0
    %v3354 = vsel %vm890, %v3262, 0
    %v3357 = vsel %vm890, %v3264, 0
    %v3360 = vsel %vm890, %v3266, 0
    %v3363 = vsel %vm890, %v3268, 0
    %v3366 = vsel %vm890, %v3270, 0
    %v3369 = vsel %vm890, %v3272, 0
    %v3372 = vsel %vm890, %v3274, 0
    %3374 = vmatpush.bf16.msra.mxu0 %v3333
    %3375 = vmatpush.bf16.msra.mxu0 %v3332
    %3376 = vmatpush.bf16.msra.mxu0 %v3331
    %3377 = vmatpush.bf16.msra.mxu0 %v3330
    %3378 = vmatpush.bf16.msra.mxu0 %v3329
    %3379 = vmatpush.bf16.msra.mxu0 %v3328
    %3380 = vmatpush.bf16.msra.mxu0 %v3327
    %3381 = vmatpush.bf16.msra.mxu0 %v3326
    %3382 = vmatmul.bf16.gmra.mxu0 %v3259
    %v3383 = vpop.f32.mrf.mxu0
    %v3384 = vadd.f32 %v3276, %v3383
    %v3385 = vpop.f32.mrf.mxu0
    %v3386 = vadd.f32 %v3276, %v3385
    %3387 = vmatmul.bf16.gmra.mxu0 %v3261
    %v3388 = vpop.f32.mrf.mxu0
    %v3389 = vadd.f32 %v3276, %v3388
    %v3390 = vpop.f32.mrf.mxu0
    %v3391 = vadd.f32 %v3276, %v3390
    %3392 = vmatmul.bf16.gmra.mxu0 %v3263
    %v3393 = vpop.f32.mrf.mxu0
    %v3394 = vadd.f32 %v3276, %v3393
    %v3395 = vpop.f32.mrf.mxu0
    %v3396 = vadd.f32 %v3276, %v3395
    %3397 = vmatmul.bf16.gmra.mxu0 %v3265
    %v3398 = vpop.f32.mrf.mxu0
    %v3399 = vadd.f32 %v3276, %v3398
    %v3400 = vpop.f32.mrf.mxu0
    %v3401 = vadd.f32 %v3276, %v3400
    %3402 = vmatmul.bf16.gmra.mxu0 %v3267
    %v3403 = vpop.f32.mrf.mxu0
    %v3404 = vadd.f32 %v3276, %v3403
    %v3405 = vpop.f32.mrf.mxu0
    %v3406 = vadd.f32 %v3276, %v3405
    %3407 = vmatmul.bf16.gmra.mxu0 %v3269
    %v3408 = vpop.f32.mrf.mxu0
    %v3409 = vadd.f32 %v3276, %v3408
    %v3410 = vpop.f32.mrf.mxu0
    %v3411 = vadd.f32 %v3276, %v3410
    %3412 = vmatmul.bf16.gmra.mxu0 %v3271
    %v3413 = vpop.f32.mrf.mxu0
    %v3414 = vadd.f32 %v3276, %v3413
    %v3415 = vpop.f32.mrf.mxu0
    %v3416 = vadd.f32 %v3276, %v3415
    %3417 = vmatmul.bf16.gmra.mxu0 %v3273
    %v3418 = vpop.f32.mrf.mxu0
    %v3419 = vadd.f32 %v3276, %v3418
    %v3420 = vpop.f32.mrf.mxu0
    %v3421 = vadd.f32 %v3276, %v3420
    %3422 = vdwg.mxu0
    %3423 = vmatpush.bf16.msra.mxu0 0
    %3424 = vmatpush.bf16.msra.mxu0 0
    %3425 = vmatpush.bf16.msra.mxu0 0
    %3426 = vmatpush.bf16.msra.mxu0 0
    %3427 = vmatpush.bf16.msra.mxu0 %v3337
    %3428 = vmatpush.bf16.msra.mxu0 %v3336
    %3429 = vmatpush.bf16.msra.mxu0 %v3335
    %3430 = vmatpush.bf16.msra.mxu0 %v3334
    %3431 = vmatmul.bf16.gmra.mxu0 %v3351
    %v3432 = vpop.f32.mrf.mxu0
    %v3433 = vadd.f32 %v3384, %v3432
    %v3434 = vpop.f32.mrf.mxu0
    %v3435 = vadd.f32 %v3386, %v3434
    %3436 = vmatmul.bf16.gmra.mxu0 %v3354
    %v3437 = vpop.f32.mrf.mxu0
    %v3438 = vadd.f32 %v3389, %v3437
    %v3439 = vpop.f32.mrf.mxu0
    %v3440 = vadd.f32 %v3391, %v3439
    %3441 = vmatmul.bf16.gmra.mxu0 %v3357
    %v3442 = vpop.f32.mrf.mxu0
    %v3443 = vadd.f32 %v3394, %v3442
    %v3444 = vpop.f32.mrf.mxu0
    %v3445 = vadd.f32 %v3396, %v3444
    %3446 = vmatmul.bf16.gmra.mxu0 %v3360
    %v3447 = vpop.f32.mrf.mxu0
    %v3448 = vadd.f32 %v3399, %v3447
    %v3449 = vpop.f32.mrf.mxu0
    %v3450 = vadd.f32 %v3401, %v3449
    %3451 = vmatmul.bf16.gmra.mxu0 %v3363
    %v3452 = vpop.f32.mrf.mxu0
    %v3453 = vadd.f32 %v3404, %v3452
    %v3454 = vpop.f32.mrf.mxu0
    %v3455 = vadd.f32 %v3406, %v3454
    %3456 = vmatmul.bf16.gmra.mxu0 %v3366
    %v3457 = vpop.f32.mrf.mxu0
    %v3458 = vadd.f32 %v3409, %v3457
    %v3459 = vpop.f32.mrf.mxu0
    %v3460 = vadd.f32 %v3411, %v3459
    %3461 = vmatmul.bf16.gmra.mxu0 %v3369
    %v3462 = vpop.f32.mrf.mxu0
    %v3463 = vadd.f32 %v3414, %v3462
    %v3464 = vpop.f32.mrf.mxu0
    %v3465 = vadd.f32 %v3416, %v3464
    %3466 = vmatmul.bf16.gmra.mxu0 %v3372
    %v3467 = vpop.f32.mrf.mxu0
    %v3468 = vadd.f32 %v3419, %v3467
    %v3469 = vpop.f32.mrf.mxu0
    %v3470 = vadd.f32 %v3421, %v3469
    %3471 = vdwg.mxu0
    %v3472 = vadd.f32 %v3433, %v2544
    %v3473 = vadd.f32 %v3435, %v2545
    %v3474 = vadd.f32 %v3438, %v2546
    %v3475 = vadd.f32 %v3440, %v2547
    %v3476 = vadd.f32 %v3443, %v2548
    %v3477 = vadd.f32 %v3445, %v2549
    %v3478 = vadd.f32 %v3448, %v2550
    %v3479 = vadd.f32 %v3450, %v2551
    %v3480 = vadd.f32 %v3453, %v2552
    %v3481 = vadd.f32 %v3455, %v2553
    %v3482 = vadd.f32 %v3458, %v2554
    %v3483 = vadd.f32 %v3460, %v2555
    %v3484 = vadd.f32 %v3463, %v2556
    %v3485 = vadd.f32 %v3465, %v2557
    %v3486 = vadd.f32 %v3468, %v2558
    %v3487 = vadd.f32 %v3470, %v2559
    %v3488 = vmax.f32 %v3472, 0.0
    %v3489 = vmax.f32 %v3473, 0.0
    %v3490 = vmax.f32 %v3474, 0.0
    %v3491 = vmax.f32 %v3475, 0.0
    %v3492 = vmax.f32 %v3476, 0.0
    %v3493 = vmax.f32 %v3477, 0.0
    %v3494 = vmax.f32 %v3478, 0.0
    %v3495 = vmax.f32 %v3479, 0.0
    %v3496 = vmax.f32 %v3480, 0.0
    %v3497 = vmax.f32 %v3481, 0.0
    %v3498 = vmax.f32 %v3482, 0.0
    %v3499 = vmax.f32 %v3483, 0.0
    %v3500 = vmax.f32 %v3484, 0.0
    %v3501 = vmax.f32 %v3485, 0.0
    %v3502 = vmax.f32 %v3486, 0.0
    %v3503 = vmax.f32 %v3487, 0.0
    %s3504 = scalar_lea.vmem %s3, 576
    %v3505 = vld [vmem:[%s3504] sm:$0xf]
    %v3506 = vld [vmem:[%s3504 + $0x4] sm:$0xf]
    %v3507 = vld [vmem:[%s3504 + $0x8] sm:$0xf]
    %v3508 = vld [vmem:[%s3504 + $0xc] sm:$0xf]
    %v3509 = vld [vmem:[%s3504 + $0x10] sm:$0xf]
    %v3510 = vld [vmem:[%s3504 + $0x14] sm:$0xf]
    %v3511 = vld [vmem:[%s3504 + $0x18] sm:$0xf]
    %v3512 = vld [vmem:[%s3504 + $0x1c] sm:$0xf]
    %v3513 = vld [vmem:[%s3504 + $0x20] sm:$0xf]
    %v3514 = vld [vmem:[%s3504 + $0x24] sm:$0xf]
    %v3515 = vld [vmem:[%s3504 + $0x28] sm:$0xf]
    %v3516 = vld [vmem:[%s3504 + $0x2c] sm:$0xf]
    %v3517 = vld [vmem:[%s3504 + $0x30] sm:$0xf]
    %v3518 = vld [vmem:[%s3504 + $0x34] sm:$0xf]
    %v3519 = vld [vmem:[%s3504 + $0x38] sm:$0xf]
    %v3520 = vld [vmem:[%s3504 + $0x3c] sm:$0xf]
    %v3521 = vld [vmem:[%s3504 + $0x40] sm:$0xf]
    %v3522 = vld [vmem:[%s3504 + $0x44] sm:$0xf]
    %v3523 = vld [vmem:[%s3504 + $0x48] sm:$0xf]
    %v3524 = vld [vmem:[%s3504 + $0x4c] sm:$0xf]
    %v3525 = vld [vmem:[%s3504 + $0x50] sm:$0xf]
    %v3526 = vld [vmem:[%s3504 + $0x54] sm:$0xf]
    %v3527 = vld [vmem:[%s3504 + $0x58] sm:$0xf]
    %v3528 = vld [vmem:[%s3504 + $0x5c] sm:$0xf]
    %s3529 = scalar_lea.vmem %s4, 6
    %v3530 = vld [vmem:[%s3529] sm:$0x1]
    %v3547 = vrot.slane %v3488, 7
    %v3548 = vrot.slane %v3489, 7
    %v3549 = vsel %vm712, %v3547, %v3548
    %v3550 = vrot.slane %v3490, 7
    %v3551 = vsel %vm712, %v3548, %v3550
    %v3552 = vrot.slane %v3491, 7
    %v3553 = vsel %vm712, %v3550, %v3552
    %v3554 = vrot.slane %v3492, 7
    %v3555 = vsel %vm712, %v3552, %v3554
    %v3556 = vrot.slane %v3493, 7
    %v3557 = vsel %vm712, %v3554, %v3556
    %v3558 = vrot.slane %v3494, 7
    %v3559 = vsel %vm712, %v3556, %v3558
    %v3560 = vrot.slane %v3495, 7
    %v3561 = vsel %vm712, %v3558, %v3560
    %v3562 = vrot.slane %v3496, 7
    %v3563 = vsel %vm712, %v3560, %v3562
    %v3564 = vrot.slane %v3497, 7
    %v3565 = vsel %vm712, %v3562, %v3564
    %v3566 = vrot.slane %v3498, 7
    %v3567 = vsel %vm712, %v3564, %v3566
    %v3568 = vrot.slane %v3499, 7
    %v3569 = vsel %vm712, %v3566, %v3568
    %v3570 = vrot.slane %v3500, 7
    %v3571 = vsel %vm712, %v3568, %v3570
    %v3572 = vrot.slane %v3501, 7
    %v3573 = vsel %vm712, %v3570, %v3572
    %v3574 = vrot.slane %v3502, 7
    %v3575 = vsel %vm712, %v3572, %v3574
    %v3576 = vrot.slane %v3503, 7
    %v3577 = vsel %vm712, %v3574, %v3576
    %v3594 = vsel %vm712, 0.0, %v3547
    %v3595 = vmul.f32 %v3594, %v607
    %v3596 = vmul.f32 %v3549, %v608
    %v3597 = vmul.f32 %v3551, %v609
    %v3598 = vmul.f32 %v3553, %v610
    %v3599 = vmul.f32 %v3555, %v611
    %v3600 = vmul.f32 %v3557, %v612
    %v3601 = vmul.f32 %v3559, %v613
    %v3602 = vmul.f32 %v3561, %v614
    %v3603 = vmul.f32 %v3563, %v615
    %v3604 = vmul.f32 %v3565, %v616
    %v3605 = vmul.f32 %v3567, %v617
    %v3606 = vmul.f32 %v3569, %v618
    %v3607 = vmul.f32 %v3571, %v619
    %v3608 = vmul.f32 %v3573, %v620
    %v3609 = vmul.f32 %v3575, %v621
    %v3610 = vmul.f32 %v3577, %v622
    %v3611 = vrot.slane %v3488, 1
    %v3612 = vrot.slane %v3489, 1
    %v3613 = vsel %vm777, %v3611, %v3612
    %v3614 = vrot.slane %v3490, 1
    %v3615 = vsel %vm777, %v3612, %v3614
    %v3616 = vrot.slane %v3491, 1
    %v3617 = vsel %vm777, %v3614, %v3616
    %v3618 = vrot.slane %v3492, 1
    %v3619 = vsel %vm777, %v3616, %v3618
    %v3620 = vrot.slane %v3493, 1
    %v3621 = vsel %vm777, %v3618, %v3620
    %v3622 = vrot.slane %v3494, 1
    %v3623 = vsel %vm777, %v3620, %v3622
    %v3624 = vrot.slane %v3495, 1
    %v3625 = vsel %vm777, %v3622, %v3624
    %v3626 = vrot.slane %v3496, 1
    %v3627 = vsel %vm777, %v3624, %v3626
    %v3628 = vrot.slane %v3497, 1
    %v3629 = vsel %vm777, %v3626, %v3628
    %v3630 = vrot.slane %v3498, 1
    %v3631 = vsel %vm777, %v3628, %v3630
    %v3632 = vrot.slane %v3499, 1
    %v3633 = vsel %vm777, %v3630, %v3632
    %v3634 = vrot.slane %v3500, 1
    %v3635 = vsel %vm777, %v3632, %v3634
    %v3636 = vrot.slane %v3501, 1
    %v3637 = vsel %vm777, %v3634, %v3636
    %v3638 = vrot.slane %v3502, 1
    %v3639 = vsel %vm777, %v3636, %v3638
    %v3640 = vrot.slane %v3503, 1
    %v3641 = vsel %vm777, %v3638, %v3640
    %v3658 = vsel %vm777, %v3640, 0.0
    %v3659 = vmul.f32 %v3613, %v655
    %v3660 = vmul.f32 %v3615, %v656
    %v3661 = vmul.f32 %v3617, %v657
    %v3662 = vmul.f32 %v3619, %v658
    %v3663 = vmul.f32 %v3621, %v659
    %v3664 = vmul.f32 %v3623, %v660
    %v3665 = vmul.f32 %v3625, %v661
    %v3666 = vmul.f32 %v3627, %v662
    %v3667 = vmul.f32 %v3629, %v663
    %v3668 = vmul.f32 %v3631, %v664
    %v3669 = vmul.f32 %v3633, %v665
    %v3670 = vmul.f32 %v3635, %v666
    %v3671 = vmul.f32 %v3637, %v667
    %v3672 = vmul.f32 %v3639, %v668
    %v3673 = vmul.f32 %v3641, %v669
    %v3674 = vmul.f32 %v3658, %v670
    %3675 = vrot.lane.b32.xlu0 %v3488, 64
    %v3676 = vpop.permute.xlu0 %3675
    %3677 = vrot.lane.b32.xlu0 %v3489, 64
    %v3678 = vpop.permute.xlu0 %3677
    %3679 = vrot.lane.b32.xlu0 %v3490, 64
    %v3680 = vpop.permute.xlu0 %3679
    %3681 = vrot.lane.b32.xlu0 %v3491, 64
    %v3682 = vpop.permute.xlu0 %3681
    %3683 = vrot.lane.b32.xlu0 %v3492, 64
    %v3684 = vpop.permute.xlu0 %3683
    %3685 = vrot.lane.b32.xlu0 %v3493, 64
    %v3686 = vpop.permute.xlu0 %3685
    %3687 = vrot.lane.b32.xlu0 %v3494, 64
    %v3688 = vpop.permute.xlu0 %3687
    %3689 = vrot.lane.b32.xlu0 %v3495, 64
    %v3690 = vpop.permute.xlu0 %3689
    %3691 = vrot.lane.b32.xlu0 %v3496, 64
    %v3692 = vpop.permute.xlu0 %3691
    %3693 = vrot.lane.b32.xlu0 %v3497, 64
    %v3694 = vpop.permute.xlu0 %3693
    %3695 = vrot.lane.b32.xlu0 %v3498, 64
    %v3696 = vpop.permute.xlu0 %3695
    %3697 = vrot.lane.b32.xlu0 %v3499, 64
    %v3698 = vpop.permute.xlu0 %3697
    %3699 = vrot.lane.b32.xlu0 %v3500, 64
    %v3700 = vpop.permute.xlu0 %3699
    %3701 = vrot.lane.b32.xlu0 %v3501, 64
    %v3702 = vpop.permute.xlu0 %3701
    %3703 = vrot.lane.b32.xlu0 %v3502, 64
    %v3704 = vpop.permute.xlu0 %3703
    %3705 = vrot.lane.b32.xlu0 %v3503, 64
    %v3706 = vpop.permute.xlu0 %3705
    %v3723 = vsel %vm890, %v3595, %v3676
    %v3724 = vsel %vm890, %v3596, %v3678
    %v3725 = vsel %vm890, %v3597, %v3680
    %v3726 = vsel %vm890, %v3598, %v3682
    %v3727 = vsel %vm890, %v3599, %v3684
    %v3728 = vsel %vm890, %v3600, %v3686
    %v3729 = vsel %vm890, %v3601, %v3688
    %v3730 = vsel %vm890, %v3602, %v3690
    %v3731 = vsel %vm890, %v3603, %v3692
    %v3732 = vsel %vm890, %v3604, %v3694
    %v3733 = vsel %vm890, %v3605, %v3696
    %v3734 = vsel %vm890, %v3606, %v3698
    %v3735 = vsel %vm890, %v3607, %v3700
    %v3736 = vsel %vm890, %v3608, %v3702
    %v3737 = vsel %vm890, %v3609, %v3704
    %v3738 = vsel %vm890, %v3610, %v3706
    %v3739 = vpack.c.bf16 %v3724, %v3723
    %v3740 = vpack.c.bf16 %v3660, %v3659
    %v3741 = vpack.c.bf16 %v3726, %v3725
    %v3742 = vpack.c.bf16 %v3662, %v3661
    %v3743 = vpack.c.bf16 %v3728, %v3727
    %v3744 = vpack.c.bf16 %v3664, %v3663
    %v3745 = vpack.c.bf16 %v3730, %v3729
    %v3746 = vpack.c.bf16 %v3666, %v3665
    %v3747 = vpack.c.bf16 %v3732, %v3731
    %v3748 = vpack.c.bf16 %v3668, %v3667
    %v3749 = vpack.c.bf16 %v3734, %v3733
    %v3750 = vpack.c.bf16 %v3670, %v3669
    %v3751 = vpack.c.bf16 %v3736, %v3735
    %v3752 = vpack.c.bf16 %v3672, %v3671
    %v3753 = vpack.c.bf16 %v3738, %v3737
    %v3754 = vpack.c.bf16 %v3674, %v3673
    %v3756 = vperm.slane %v3530, 0
    %v3782 = vunpack.c.l.b16 %v3505
    %v3783 = vunpack.c.l.b16 %v3506
    %v3784 = vunpack.c.l.b16 %v3507
    %v3785 = vunpack.c.l.b16 %v3508
    %v3786 = vunpack.c.l.b16 %v3509
    %v3787 = vunpack.c.l.b16 %v3510
    %v3788 = vunpack.c.l.b16 %v3511
    %v3789 = vunpack.c.l.b16 %v3512
    %v3790 = vunpack.c.l.b16 %v3513
    %v3791 = vunpack.c.l.b16 %v3514
    %v3792 = vunpack.c.l.b16 %v3515
    %v3793 = vunpack.c.l.b16 %v3516
    %v3794 = vunpack.c.l.b16 %v3517
    %v3795 = vunpack.c.l.b16 %v3518
    %v3796 = vunpack.c.l.b16 %v3519
    %v3797 = vunpack.c.l.b16 %v3520
    %v3798 = vunpack.c.l.b16 %v3521
    %v3799 = vunpack.c.l.b16 %v3522
    %v3800 = vunpack.c.l.b16 %v3523
    %v3801 = vunpack.c.l.b16 %v3524
    %v3802 = vunpack.c.l.b16 %v3525
    %v3803 = vunpack.c.l.b16 %v3526
    %v3804 = vunpack.c.l.b16 %v3527
    %v3805 = vunpack.c.l.b16 %v3528
    %v3806 = vpack.c.b16 %v3783, %v3782
    %v3807 = vpack.c.b16 %v3785, %v3784
    %v3808 = vpack.c.b16 %v3787, %v3786
    %v3809 = vpack.c.b16 %v3789, %v3788
    %v3810 = vpack.c.b16 %v3791, %v3790
    %v3811 = vpack.c.b16 %v3793, %v3792
    %v3812 = vpack.c.b16 %v3795, %v3794
    %v3813 = vpack.c.b16 %v3797, %v3796
    %v3814 = vpack.c.b16 %v3799, %v3798
    %v3815 = vpack.c.b16 %v3801, %v3800
    %v3816 = vpack.c.b16 %v3803, %v3802
    %v3817 = vpack.c.b16 %v3805, %v3804
    %v3831 = vsel %vm890, %v3740, 0
    %v3834 = vsel %vm890, %v3742, 0
    %v3837 = vsel %vm890, %v3744, 0
    %v3840 = vsel %vm890, %v3746, 0
    %v3843 = vsel %vm890, %v3748, 0
    %v3846 = vsel %vm890, %v3750, 0
    %v3849 = vsel %vm890, %v3752, 0
    %v3852 = vsel %vm890, %v3754, 0
    %3854 = vmatpush.bf16.msra.mxu0 %v3813
    %3855 = vmatpush.bf16.msra.mxu0 %v3812
    %3856 = vmatpush.bf16.msra.mxu0 %v3811
    %3857 = vmatpush.bf16.msra.mxu0 %v3810
    %3858 = vmatpush.bf16.msra.mxu0 %v3809
    %3859 = vmatpush.bf16.msra.mxu0 %v3808
    %3860 = vmatpush.bf16.msra.mxu0 %v3807
    %3861 = vmatpush.bf16.msra.mxu0 %v3806
    %3862 = vmatmul.bf16.gmra.mxu0 %v3739
    %v3863 = vpop.f32.mrf.mxu0
    %v3864 = vadd.f32 %v3756, %v3863
    %v3865 = vpop.f32.mrf.mxu0
    %v3866 = vadd.f32 %v3756, %v3865
    %3867 = vmatmul.bf16.gmra.mxu0 %v3741
    %v3868 = vpop.f32.mrf.mxu0
    %v3869 = vadd.f32 %v3756, %v3868
    %v3870 = vpop.f32.mrf.mxu0
    %v3871 = vadd.f32 %v3756, %v3870
    %3872 = vmatmul.bf16.gmra.mxu0 %v3743
    %v3873 = vpop.f32.mrf.mxu0
    %v3874 = vadd.f32 %v3756, %v3873
    %v3875 = vpop.f32.mrf.mxu0
    %v3876 = vadd.f32 %v3756, %v3875
    %3877 = vmatmul.bf16.gmra.mxu0 %v3745
    %v3878 = vpop.f32.mrf.mxu0
    %v3879 = vadd.f32 %v3756, %v3878
    %v3880 = vpop.f32.mrf.mxu0
    %v3881 = vadd.f32 %v3756, %v3880
    %3882 = vmatmul.bf16.gmra.mxu0 %v3747
    %v3883 = vpop.f32.mrf.mxu0
    %v3884 = vadd.f32 %v3756, %v3883
    %v3885 = vpop.f32.mrf.mxu0
    %v3886 = vadd.f32 %v3756, %v3885
    %3887 = vmatmul.bf16.gmra.mxu0 %v3749
    %v3888 = vpop.f32.mrf.mxu0
    %v3889 = vadd.f32 %v3756, %v3888
    %v3890 = vpop.f32.mrf.mxu0
    %v3891 = vadd.f32 %v3756, %v3890
    %3892 = vmatmul.bf16.gmra.mxu0 %v3751
    %v3893 = vpop.f32.mrf.mxu0
    %v3894 = vadd.f32 %v3756, %v3893
    %v3895 = vpop.f32.mrf.mxu0
    %v3896 = vadd.f32 %v3756, %v3895
    %3897 = vmatmul.bf16.gmra.mxu0 %v3753
    %v3898 = vpop.f32.mrf.mxu0
    %v3899 = vadd.f32 %v3756, %v3898
    %v3900 = vpop.f32.mrf.mxu0
    %v3901 = vadd.f32 %v3756, %v3900
    %3902 = vdwg.mxu0
    %3903 = vmatpush.bf16.msra.mxu0 0
    %3904 = vmatpush.bf16.msra.mxu0 0
    %3905 = vmatpush.bf16.msra.mxu0 0
    %3906 = vmatpush.bf16.msra.mxu0 0
    %3907 = vmatpush.bf16.msra.mxu0 %v3817
    %3908 = vmatpush.bf16.msra.mxu0 %v3816
    %3909 = vmatpush.bf16.msra.mxu0 %v3815
    %3910 = vmatpush.bf16.msra.mxu0 %v3814
    %3911 = vmatmul.bf16.gmra.mxu0 %v3831
    %v3912 = vpop.f32.mrf.mxu0
    %v3913 = vadd.f32 %v3864, %v3912
    %v3914 = vpop.f32.mrf.mxu0
    %v3915 = vadd.f32 %v3866, %v3914
    %3916 = vmatmul.bf16.gmra.mxu0 %v3834
    %v3917 = vpop.f32.mrf.mxu0
    %v3918 = vadd.f32 %v3869, %v3917
    %v3919 = vpop.f32.mrf.mxu0
    %v3920 = vadd.f32 %v3871, %v3919
    %3921 = vmatmul.bf16.gmra.mxu0 %v3837
    %v3922 = vpop.f32.mrf.mxu0
    %v3923 = vadd.f32 %v3874, %v3922
    %v3924 = vpop.f32.mrf.mxu0
    %v3925 = vadd.f32 %v3876, %v3924
    %3926 = vmatmul.bf16.gmra.mxu0 %v3840
    %v3927 = vpop.f32.mrf.mxu0
    %v3928 = vadd.f32 %v3879, %v3927
    %v3929 = vpop.f32.mrf.mxu0
    %v3930 = vadd.f32 %v3881, %v3929
    %3931 = vmatmul.bf16.gmra.mxu0 %v3843
    %v3932 = vpop.f32.mrf.mxu0
    %v3933 = vadd.f32 %v3884, %v3932
    %v3934 = vpop.f32.mrf.mxu0
    %v3935 = vadd.f32 %v3886, %v3934
    %3936 = vmatmul.bf16.gmra.mxu0 %v3846
    %v3937 = vpop.f32.mrf.mxu0
    %v3938 = vadd.f32 %v3889, %v3937
    %v3939 = vpop.f32.mrf.mxu0
    %v3940 = vadd.f32 %v3891, %v3939
    %3941 = vmatmul.bf16.gmra.mxu0 %v3849
    %v3942 = vpop.f32.mrf.mxu0
    %v3943 = vadd.f32 %v3894, %v3942
    %v3944 = vpop.f32.mrf.mxu0
    %v3945 = vadd.f32 %v3896, %v3944
    %3946 = vmatmul.bf16.gmra.mxu0 %v3852
    %v3947 = vpop.f32.mrf.mxu0
    %v3948 = vadd.f32 %v3899, %v3947
    %v3949 = vpop.f32.mrf.mxu0
    %v3950 = vadd.f32 %v3901, %v3949
    %3951 = vdwg.mxu0
    %v3952 = vmax.f32 %v3913, 0.0
    %v3953 = vmax.f32 %v3915, 0.0
    %v3954 = vmax.f32 %v3918, 0.0
    %v3955 = vmax.f32 %v3920, 0.0
    %v3956 = vmax.f32 %v3923, 0.0
    %v3957 = vmax.f32 %v3925, 0.0
    %v3958 = vmax.f32 %v3928, 0.0
    %v3959 = vmax.f32 %v3930, 0.0
    %v3960 = vmax.f32 %v3933, 0.0
    %v3961 = vmax.f32 %v3935, 0.0
    %v3962 = vmax.f32 %v3938, 0.0
    %v3963 = vmax.f32 %v3940, 0.0
    %v3964 = vmax.f32 %v3943, 0.0
    %v3965 = vmax.f32 %v3945, 0.0
    %v3966 = vmax.f32 %v3948, 0.0
    %v3967 = vmax.f32 %v3950, 0.0
    %s3968 = scalar_lea.vmem %s3, 672
    %v3969 = vld [vmem:[%s3968] sm:$0xf]
    %v3970 = vld [vmem:[%s3968 + $0x4] sm:$0xf]
    %v3971 = vld [vmem:[%s3968 + $0x8] sm:$0xf]
    %v3972 = vld [vmem:[%s3968 + $0xc] sm:$0xf]
    %v3973 = vld [vmem:[%s3968 + $0x10] sm:$0xf]
    %v3974 = vld [vmem:[%s3968 + $0x14] sm:$0xf]
    %v3975 = vld [vmem:[%s3968 + $0x18] sm:$0xf]
    %v3976 = vld [vmem:[%s3968 + $0x1c] sm:$0xf]
    %v3977 = vld [vmem:[%s3968 + $0x20] sm:$0xf]
    %v3978 = vld [vmem:[%s3968 + $0x24] sm:$0xf]
    %v3979 = vld [vmem:[%s3968 + $0x28] sm:$0xf]
    %v3980 = vld [vmem:[%s3968 + $0x2c] sm:$0xf]
    %v3981 = vld [vmem:[%s3968 + $0x30] sm:$0xf]
    %v3982 = vld [vmem:[%s3968 + $0x34] sm:$0xf]
    %v3983 = vld [vmem:[%s3968 + $0x38] sm:$0xf]
    %v3984 = vld [vmem:[%s3968 + $0x3c] sm:$0xf]
    %v3985 = vld [vmem:[%s3968 + $0x40] sm:$0xf]
    %v3986 = vld [vmem:[%s3968 + $0x44] sm:$0xf]
    %v3987 = vld [vmem:[%s3968 + $0x48] sm:$0xf]
    %v3988 = vld [vmem:[%s3968 + $0x4c] sm:$0xf]
    %v3989 = vld [vmem:[%s3968 + $0x50] sm:$0xf]
    %v3990 = vld [vmem:[%s3968 + $0x54] sm:$0xf]
    %v3991 = vld [vmem:[%s3968 + $0x58] sm:$0xf]
    %v3992 = vld [vmem:[%s3968 + $0x5c] sm:$0xf]
    %s3993 = scalar_lea.vmem %s4, 7
    %v3994 = vld [vmem:[%s3993] sm:$0x1]
    %v4011 = vrot.slane %v3952, 7
    %v4012 = vrot.slane %v3953, 7
    %v4013 = vsel %vm712, %v4011, %v4012
    %v4014 = vrot.slane %v3954, 7
    %v4015 = vsel %vm712, %v4012, %v4014
    %v4016 = vrot.slane %v3955, 7
    %v4017 = vsel %vm712, %v4014, %v4016
    %v4018 = vrot.slane %v3956, 7
    %v4019 = vsel %vm712, %v4016, %v4018
    %v4020 = vrot.slane %v3957, 7
    %v4021 = vsel %vm712, %v4018, %v4020
    %v4022 = vrot.slane %v3958, 7
    %v4023 = vsel %vm712, %v4020, %v4022
    %v4024 = vrot.slane %v3959, 7
    %v4025 = vsel %vm712, %v4022, %v4024
    %v4026 = vrot.slane %v3960, 7
    %v4027 = vsel %vm712, %v4024, %v4026
    %v4028 = vrot.slane %v3961, 7
    %v4029 = vsel %vm712, %v4026, %v4028
    %v4030 = vrot.slane %v3962, 7
    %v4031 = vsel %vm712, %v4028, %v4030
    %v4032 = vrot.slane %v3963, 7
    %v4033 = vsel %vm712, %v4030, %v4032
    %v4034 = vrot.slane %v3964, 7
    %v4035 = vsel %vm712, %v4032, %v4034
    %v4036 = vrot.slane %v3965, 7
    %v4037 = vsel %vm712, %v4034, %v4036
    %v4038 = vrot.slane %v3966, 7
    %v4039 = vsel %vm712, %v4036, %v4038
    %v4040 = vrot.slane %v3967, 7
    %v4041 = vsel %vm712, %v4038, %v4040
    %v4058 = vsel %vm712, 0.0, %v4011
    %v4059 = vmul.f32 %v4058, %v607
    %v4060 = vmul.f32 %v4013, %v608
    %v4061 = vmul.f32 %v4015, %v609
    %v4062 = vmul.f32 %v4017, %v610
    %v4063 = vmul.f32 %v4019, %v611
    %v4064 = vmul.f32 %v4021, %v612
    %v4065 = vmul.f32 %v4023, %v613
    %v4066 = vmul.f32 %v4025, %v614
    %v4067 = vmul.f32 %v4027, %v615
    %v4068 = vmul.f32 %v4029, %v616
    %v4069 = vmul.f32 %v4031, %v617
    %v4070 = vmul.f32 %v4033, %v618
    %v4071 = vmul.f32 %v4035, %v619
    %v4072 = vmul.f32 %v4037, %v620
    %v4073 = vmul.f32 %v4039, %v621
    %v4074 = vmul.f32 %v4041, %v622
    %v4075 = vrot.slane %v3952, 1
    %v4076 = vrot.slane %v3953, 1
    %v4077 = vsel %vm777, %v4075, %v4076
    %v4078 = vrot.slane %v3954, 1
    %v4079 = vsel %vm777, %v4076, %v4078
    %v4080 = vrot.slane %v3955, 1
    %v4081 = vsel %vm777, %v4078, %v4080
    %v4082 = vrot.slane %v3956, 1
    %v4083 = vsel %vm777, %v4080, %v4082
    %v4084 = vrot.slane %v3957, 1
    %v4085 = vsel %vm777, %v4082, %v4084
    %v4086 = vrot.slane %v3958, 1
    %v4087 = vsel %vm777, %v4084, %v4086
    %v4088 = vrot.slane %v3959, 1
    %v4089 = vsel %vm777, %v4086, %v4088
    %v4090 = vrot.slane %v3960, 1
    %v4091 = vsel %vm777, %v4088, %v4090
    %v4092 = vrot.slane %v3961, 1
    %v4093 = vsel %vm777, %v4090, %v4092
    %v4094 = vrot.slane %v3962, 1
    %v4095 = vsel %vm777, %v4092, %v4094
    %v4096 = vrot.slane %v3963, 1
    %v4097 = vsel %vm777, %v4094, %v4096
    %v4098 = vrot.slane %v3964, 1
    %v4099 = vsel %vm777, %v4096, %v4098
    %v4100 = vrot.slane %v3965, 1
    %v4101 = vsel %vm777, %v4098, %v4100
    %v4102 = vrot.slane %v3966, 1
    %v4103 = vsel %vm777, %v4100, %v4102
    %v4104 = vrot.slane %v3967, 1
    %v4105 = vsel %vm777, %v4102, %v4104
    %v4122 = vsel %vm777, %v4104, 0.0
    %v4123 = vmul.f32 %v4077, %v655
    %v4124 = vmul.f32 %v4079, %v656
    %v4125 = vmul.f32 %v4081, %v657
    %v4126 = vmul.f32 %v4083, %v658
    %v4127 = vmul.f32 %v4085, %v659
    %v4128 = vmul.f32 %v4087, %v660
    %v4129 = vmul.f32 %v4089, %v661
    %v4130 = vmul.f32 %v4091, %v662
    %v4131 = vmul.f32 %v4093, %v663
    %v4132 = vmul.f32 %v4095, %v664
    %v4133 = vmul.f32 %v4097, %v665
    %v4134 = vmul.f32 %v4099, %v666
    %v4135 = vmul.f32 %v4101, %v667
    %v4136 = vmul.f32 %v4103, %v668
    %v4137 = vmul.f32 %v4105, %v669
    %v4138 = vmul.f32 %v4122, %v670
    %4139 = vrot.lane.b32.xlu0 %v3952, 64
    %v4140 = vpop.permute.xlu0 %4139
    %4141 = vrot.lane.b32.xlu0 %v3953, 64
    %v4142 = vpop.permute.xlu0 %4141
    %4143 = vrot.lane.b32.xlu0 %v3954, 64
    %v4144 = vpop.permute.xlu0 %4143
    %4145 = vrot.lane.b32.xlu0 %v3955, 64
    %v4146 = vpop.permute.xlu0 %4145
    %4147 = vrot.lane.b32.xlu0 %v3956, 64
    %v4148 = vpop.permute.xlu0 %4147
    %4149 = vrot.lane.b32.xlu0 %v3957, 64
    %v4150 = vpop.permute.xlu0 %4149
    %4151 = vrot.lane.b32.xlu0 %v3958, 64
    %v4152 = vpop.permute.xlu0 %4151
    %4153 = vrot.lane.b32.xlu0 %v3959, 64
    %v4154 = vpop.permute.xlu0 %4153
    %4155 = vrot.lane.b32.xlu0 %v3960, 64
    %v4156 = vpop.permute.xlu0 %4155
    %4157 = vrot.lane.b32.xlu0 %v3961, 64
    %v4158 = vpop.permute.xlu0 %4157
    %4159 = vrot.lane.b32.xlu0 %v3962, 64
    %v4160 = vpop.permute.xlu0 %4159
    %4161 = vrot.lane.b32.xlu0 %v3963, 64
    %v4162 = vpop.permute.xlu0 %4161
    %4163 = vrot.lane.b32.xlu0 %v3964, 64
    %v4164 = vpop.permute.xlu0 %4163
    %4165 = vrot.lane.b32.xlu0 %v3965, 64
    %v4166 = vpop.permute.xlu0 %4165
    %4167 = vrot.lane.b32.xlu0 %v3966, 64
    %v4168 = vpop.permute.xlu0 %4167
    %4169 = vrot.lane.b32.xlu0 %v3967, 64
    %v4170 = vpop.permute.xlu0 %4169
    %v4187 = vsel %vm890, %v4059, %v4140
    %v4188 = vsel %vm890, %v4060, %v4142
    %v4189 = vsel %vm890, %v4061, %v4144
    %v4190 = vsel %vm890, %v4062, %v4146
    %v4191 = vsel %vm890, %v4063, %v4148
    %v4192 = vsel %vm890, %v4064, %v4150
    %v4193 = vsel %vm890, %v4065, %v4152
    %v4194 = vsel %vm890, %v4066, %v4154
    %v4195 = vsel %vm890, %v4067, %v4156
    %v4196 = vsel %vm890, %v4068, %v4158
    %v4197 = vsel %vm890, %v4069, %v4160
    %v4198 = vsel %vm890, %v4070, %v4162
    %v4199 = vsel %vm890, %v4071, %v4164
    %v4200 = vsel %vm890, %v4072, %v4166
    %v4201 = vsel %vm890, %v4073, %v4168
    %v4202 = vsel %vm890, %v4074, %v4170
    %v4203 = vpack.c.bf16 %v4188, %v4187
    %v4204 = vpack.c.bf16 %v4124, %v4123
    %v4205 = vpack.c.bf16 %v4190, %v4189
    %v4206 = vpack.c.bf16 %v4126, %v4125
    %v4207 = vpack.c.bf16 %v4192, %v4191
    %v4208 = vpack.c.bf16 %v4128, %v4127
    %v4209 = vpack.c.bf16 %v4194, %v4193
    %v4210 = vpack.c.bf16 %v4130, %v4129
    %v4211 = vpack.c.bf16 %v4196, %v4195
    %v4212 = vpack.c.bf16 %v4132, %v4131
    %v4213 = vpack.c.bf16 %v4198, %v4197
    %v4214 = vpack.c.bf16 %v4134, %v4133
    %v4215 = vpack.c.bf16 %v4200, %v4199
    %v4216 = vpack.c.bf16 %v4136, %v4135
    %v4217 = vpack.c.bf16 %v4202, %v4201
    %v4218 = vpack.c.bf16 %v4138, %v4137
    %v4220 = vperm.slane %v3994, 0
    %v4246 = vunpack.c.l.b16 %v3969
    %v4247 = vunpack.c.l.b16 %v3970
    %v4248 = vunpack.c.l.b16 %v3971
    %v4249 = vunpack.c.l.b16 %v3972
    %v4250 = vunpack.c.l.b16 %v3973
    %v4251 = vunpack.c.l.b16 %v3974
    %v4252 = vunpack.c.l.b16 %v3975
    %v4253 = vunpack.c.l.b16 %v3976
    %v4254 = vunpack.c.l.b16 %v3977
    %v4255 = vunpack.c.l.b16 %v3978
    %v4256 = vunpack.c.l.b16 %v3979
    %v4257 = vunpack.c.l.b16 %v3980
    %v4258 = vunpack.c.l.b16 %v3981
    %v4259 = vunpack.c.l.b16 %v3982
    %v4260 = vunpack.c.l.b16 %v3983
    %v4261 = vunpack.c.l.b16 %v3984
    %v4262 = vunpack.c.l.b16 %v3985
    %v4263 = vunpack.c.l.b16 %v3986
    %v4264 = vunpack.c.l.b16 %v3987
    %v4265 = vunpack.c.l.b16 %v3988
    %v4266 = vunpack.c.l.b16 %v3989
    %v4267 = vunpack.c.l.b16 %v3990
    %v4268 = vunpack.c.l.b16 %v3991
    %v4269 = vunpack.c.l.b16 %v3992
    %v4270 = vpack.c.b16 %v4247, %v4246
    %v4271 = vpack.c.b16 %v4249, %v4248
    %v4272 = vpack.c.b16 %v4251, %v4250
    %v4273 = vpack.c.b16 %v4253, %v4252
    %v4274 = vpack.c.b16 %v4255, %v4254
    %v4275 = vpack.c.b16 %v4257, %v4256
    %v4276 = vpack.c.b16 %v4259, %v4258
    %v4277 = vpack.c.b16 %v4261, %v4260
    %v4278 = vpack.c.b16 %v4263, %v4262
    %v4279 = vpack.c.b16 %v4265, %v4264
    %v4280 = vpack.c.b16 %v4267, %v4266
    %v4281 = vpack.c.b16 %v4269, %v4268
    %v4295 = vsel %vm890, %v4204, 0
    %v4298 = vsel %vm890, %v4206, 0
    %v4301 = vsel %vm890, %v4208, 0
    %v4304 = vsel %vm890, %v4210, 0
    %v4307 = vsel %vm890, %v4212, 0
    %v4310 = vsel %vm890, %v4214, 0
    %v4313 = vsel %vm890, %v4216, 0
    %v4316 = vsel %vm890, %v4218, 0
    %4318 = vmatpush.bf16.msra.mxu0 %v4277
    %4319 = vmatpush.bf16.msra.mxu0 %v4276
    %4320 = vmatpush.bf16.msra.mxu0 %v4275
    %4321 = vmatpush.bf16.msra.mxu0 %v4274
    %4322 = vmatpush.bf16.msra.mxu0 %v4273
    %4323 = vmatpush.bf16.msra.mxu0 %v4272
    %4324 = vmatpush.bf16.msra.mxu0 %v4271
    %4325 = vmatpush.bf16.msra.mxu0 %v4270
    %4326 = vmatmul.bf16.gmra.mxu0 %v4203
    %v4327 = vpop.f32.mrf.mxu0
    %v4328 = vadd.f32 %v4220, %v4327
    %v4329 = vpop.f32.mrf.mxu0
    %v4330 = vadd.f32 %v4220, %v4329
    %4331 = vmatmul.bf16.gmra.mxu0 %v4205
    %v4332 = vpop.f32.mrf.mxu0
    %v4333 = vadd.f32 %v4220, %v4332
    %v4334 = vpop.f32.mrf.mxu0
    %v4335 = vadd.f32 %v4220, %v4334
    %4336 = vmatmul.bf16.gmra.mxu0 %v4207
    %v4337 = vpop.f32.mrf.mxu0
    %v4338 = vadd.f32 %v4220, %v4337
    %v4339 = vpop.f32.mrf.mxu0
    %v4340 = vadd.f32 %v4220, %v4339
    %4341 = vmatmul.bf16.gmra.mxu0 %v4209
    %v4342 = vpop.f32.mrf.mxu0
    %v4343 = vadd.f32 %v4220, %v4342
    %v4344 = vpop.f32.mrf.mxu0
    %v4345 = vadd.f32 %v4220, %v4344
    %4346 = vmatmul.bf16.gmra.mxu0 %v4211
    %v4347 = vpop.f32.mrf.mxu0
    %v4348 = vadd.f32 %v4220, %v4347
    %v4349 = vpop.f32.mrf.mxu0
    %v4350 = vadd.f32 %v4220, %v4349
    %4351 = vmatmul.bf16.gmra.mxu0 %v4213
    %v4352 = vpop.f32.mrf.mxu0
    %v4353 = vadd.f32 %v4220, %v4352
    %v4354 = vpop.f32.mrf.mxu0
    %v4355 = vadd.f32 %v4220, %v4354
    %4356 = vmatmul.bf16.gmra.mxu0 %v4215
    %v4357 = vpop.f32.mrf.mxu0
    %v4358 = vadd.f32 %v4220, %v4357
    %v4359 = vpop.f32.mrf.mxu0
    %v4360 = vadd.f32 %v4220, %v4359
    %4361 = vmatmul.bf16.gmra.mxu0 %v4217
    %v4362 = vpop.f32.mrf.mxu0
    %v4363 = vadd.f32 %v4220, %v4362
    %v4364 = vpop.f32.mrf.mxu0
    %v4365 = vadd.f32 %v4220, %v4364
    %4366 = vdwg.mxu0
    %4367 = vmatpush.bf16.msra.mxu0 0
    %4368 = vmatpush.bf16.msra.mxu0 0
    %4369 = vmatpush.bf16.msra.mxu0 0
    %4370 = vmatpush.bf16.msra.mxu0 0
    %4371 = vmatpush.bf16.msra.mxu0 %v4281
    %4372 = vmatpush.bf16.msra.mxu0 %v4280
    %4373 = vmatpush.bf16.msra.mxu0 %v4279
    %4374 = vmatpush.bf16.msra.mxu0 %v4278
    %4375 = vmatmul.bf16.gmra.mxu0 %v4295
    %v4376 = vpop.f32.mrf.mxu0
    %v4377 = vadd.f32 %v4328, %v4376
    %v4378 = vpop.f32.mrf.mxu0
    %v4379 = vadd.f32 %v4330, %v4378
    %4380 = vmatmul.bf16.gmra.mxu0 %v4298
    %v4381 = vpop.f32.mrf.mxu0
    %v4382 = vadd.f32 %v4333, %v4381
    %v4383 = vpop.f32.mrf.mxu0
    %v4384 = vadd.f32 %v4335, %v4383
    %4385 = vmatmul.bf16.gmra.mxu0 %v4301
    %v4386 = vpop.f32.mrf.mxu0
    %v4387 = vadd.f32 %v4338, %v4386
    %v4388 = vpop.f32.mrf.mxu0
    %v4389 = vadd.f32 %v4340, %v4388
    %4390 = vmatmul.bf16.gmra.mxu0 %v4304
    %v4391 = vpop.f32.mrf.mxu0
    %v4392 = vadd.f32 %v4343, %v4391
    %v4393 = vpop.f32.mrf.mxu0
    %v4394 = vadd.f32 %v4345, %v4393
    %4395 = vmatmul.bf16.gmra.mxu0 %v4307
    %v4396 = vpop.f32.mrf.mxu0
    %v4397 = vadd.f32 %v4348, %v4396
    %v4398 = vpop.f32.mrf.mxu0
    %v4399 = vadd.f32 %v4350, %v4398
    %4400 = vmatmul.bf16.gmra.mxu0 %v4310
    %v4401 = vpop.f32.mrf.mxu0
    %v4402 = vadd.f32 %v4353, %v4401
    %v4403 = vpop.f32.mrf.mxu0
    %v4404 = vadd.f32 %v4355, %v4403
    %4405 = vmatmul.bf16.gmra.mxu0 %v4313
    %v4406 = vpop.f32.mrf.mxu0
    %v4407 = vadd.f32 %v4358, %v4406
    %v4408 = vpop.f32.mrf.mxu0
    %v4409 = vadd.f32 %v4360, %v4408
    %4410 = vmatmul.bf16.gmra.mxu0 %v4316
    %v4411 = vpop.f32.mrf.mxu0
    %v4412 = vadd.f32 %v4363, %v4411
    %v4413 = vpop.f32.mrf.mxu0
    %v4414 = vadd.f32 %v4365, %v4413
    %4415 = vdwg.mxu0
    %v4416 = vadd.f32 %v4377, %v3488
    %v4417 = vadd.f32 %v4379, %v3489
    %v4418 = vadd.f32 %v4382, %v3490
    %v4419 = vadd.f32 %v4384, %v3491
    %v4420 = vadd.f32 %v4387, %v3492
    %v4421 = vadd.f32 %v4389, %v3493
    %v4422 = vadd.f32 %v4392, %v3494
    %v4423 = vadd.f32 %v4394, %v3495
    %v4424 = vadd.f32 %v4397, %v3496
    %v4425 = vadd.f32 %v4399, %v3497
    %v4426 = vadd.f32 %v4402, %v3498
    %v4427 = vadd.f32 %v4404, %v3499
    %v4428 = vadd.f32 %v4407, %v3500
    %v4429 = vadd.f32 %v4409, %v3501
    %v4430 = vadd.f32 %v4412, %v3502
    %v4431 = vadd.f32 %v4414, %v3503
    %v4432 = vmax.f32 %v4416, 0.0
    %v4433 = vmax.f32 %v4417, 0.0
    %v4434 = vmax.f32 %v4418, 0.0
    %v4435 = vmax.f32 %v4419, 0.0
    %v4436 = vmax.f32 %v4420, 0.0
    %v4437 = vmax.f32 %v4421, 0.0
    %v4438 = vmax.f32 %v4422, 0.0
    %v4439 = vmax.f32 %v4423, 0.0
    %v4440 = vmax.f32 %v4424, 0.0
    %v4441 = vmax.f32 %v4425, 0.0
    %v4442 = vmax.f32 %v4426, 0.0
    %v4443 = vmax.f32 %v4427, 0.0
    %v4444 = vmax.f32 %v4428, 0.0
    %v4445 = vmax.f32 %v4429, 0.0
    %v4446 = vmax.f32 %v4430, 0.0
    %v4447 = vmax.f32 %v4431, 0.0
    %s4448 = scalar_lea.vmem %s3, 768
    %v4449 = vld [vmem:[%s4448] sm:$0xf]
    %v4450 = vld [vmem:[%s4448 + $0x4] sm:$0xf]
    %v4451 = vld [vmem:[%s4448 + $0x8] sm:$0xf]
    %v4452 = vld [vmem:[%s4448 + $0xc] sm:$0xf]
    %v4453 = vld [vmem:[%s4448 + $0x10] sm:$0xf]
    %v4454 = vld [vmem:[%s4448 + $0x14] sm:$0xf]
    %v4455 = vld [vmem:[%s4448 + $0x18] sm:$0xf]
    %v4456 = vld [vmem:[%s4448 + $0x1c] sm:$0xf]
    %v4457 = vld [vmem:[%s4448 + $0x20] sm:$0xf]
    %v4458 = vld [vmem:[%s4448 + $0x24] sm:$0xf]
    %v4459 = vld [vmem:[%s4448 + $0x28] sm:$0xf]
    %v4460 = vld [vmem:[%s4448 + $0x2c] sm:$0xf]
    %v4461 = vld [vmem:[%s4448 + $0x30] sm:$0xf]
    %v4462 = vld [vmem:[%s4448 + $0x34] sm:$0xf]
    %v4463 = vld [vmem:[%s4448 + $0x38] sm:$0xf]
    %v4464 = vld [vmem:[%s4448 + $0x3c] sm:$0xf]
    %v4465 = vld [vmem:[%s4448 + $0x40] sm:$0xf]
    %v4466 = vld [vmem:[%s4448 + $0x44] sm:$0xf]
    %v4467 = vld [vmem:[%s4448 + $0x48] sm:$0xf]
    %v4468 = vld [vmem:[%s4448 + $0x4c] sm:$0xf]
    %v4469 = vld [vmem:[%s4448 + $0x50] sm:$0xf]
    %v4470 = vld [vmem:[%s4448 + $0x54] sm:$0xf]
    %v4471 = vld [vmem:[%s4448 + $0x58] sm:$0xf]
    %v4472 = vld [vmem:[%s4448 + $0x5c] sm:$0xf]
    %s4473 = scalar_lea.vmem %s4, 8
    %v4474 = vld [vmem:[%s4473] sm:$0x1]
    %v4491 = vrot.slane %v4432, 7
    %v4492 = vrot.slane %v4433, 7
    %v4493 = vsel %vm712, %v4491, %v4492
    %v4494 = vrot.slane %v4434, 7
    %v4495 = vsel %vm712, %v4492, %v4494
    %v4496 = vrot.slane %v4435, 7
    %v4497 = vsel %vm712, %v4494, %v4496
    %v4498 = vrot.slane %v4436, 7
    %v4499 = vsel %vm712, %v4496, %v4498
    %v4500 = vrot.slane %v4437, 7
    %v4501 = vsel %vm712, %v4498, %v4500
    %v4502 = vrot.slane %v4438, 7
    %v4503 = vsel %vm712, %v4500, %v4502
    %v4504 = vrot.slane %v4439, 7
    %v4505 = vsel %vm712, %v4502, %v4504
    %v4506 = vrot.slane %v4440, 7
    %v4507 = vsel %vm712, %v4504, %v4506
    %v4508 = vrot.slane %v4441, 7
    %v4509 = vsel %vm712, %v4506, %v4508
    %v4510 = vrot.slane %v4442, 7
    %v4511 = vsel %vm712, %v4508, %v4510
    %v4512 = vrot.slane %v4443, 7
    %v4513 = vsel %vm712, %v4510, %v4512
    %v4514 = vrot.slane %v4444, 7
    %v4515 = vsel %vm712, %v4512, %v4514
    %v4516 = vrot.slane %v4445, 7
    %v4517 = vsel %vm712, %v4514, %v4516
    %v4518 = vrot.slane %v4446, 7
    %v4519 = vsel %vm712, %v4516, %v4518
    %v4520 = vrot.slane %v4447, 7
    %v4521 = vsel %vm712, %v4518, %v4520
    %v4538 = vsel %vm712, 0.0, %v4491
    %v4539 = vmul.f32 %v4538, %v607
    %v4540 = vmul.f32 %v4493, %v608
    %v4541 = vmul.f32 %v4495, %v609
    %v4542 = vmul.f32 %v4497, %v610
    %v4543 = vmul.f32 %v4499, %v611
    %v4544 = vmul.f32 %v4501, %v612
    %v4545 = vmul.f32 %v4503, %v613
    %v4546 = vmul.f32 %v4505, %v614
    %v4547 = vmul.f32 %v4507, %v615
    %v4548 = vmul.f32 %v4509, %v616
    %v4549 = vmul.f32 %v4511, %v617
    %v4550 = vmul.f32 %v4513, %v618
    %v4551 = vmul.f32 %v4515, %v619
    %v4552 = vmul.f32 %v4517, %v620
    %v4553 = vmul.f32 %v4519, %v621
    %v4554 = vmul.f32 %v4521, %v622
    %v4555 = vrot.slane %v4432, 1
    %v4556 = vrot.slane %v4433, 1
    %v4557 = vsel %vm777, %v4555, %v4556
    %v4558 = vrot.slane %v4434, 1
    %v4559 = vsel %vm777, %v4556, %v4558
    %v4560 = vrot.slane %v4435, 1
    %v4561 = vsel %vm777, %v4558, %v4560
    %v4562 = vrot.slane %v4436, 1
    %v4563 = vsel %vm777, %v4560, %v4562
    %v4564 = vrot.slane %v4437, 1
    %v4565 = vsel %vm777, %v4562, %v4564
    %v4566 = vrot.slane %v4438, 1
    %v4567 = vsel %vm777, %v4564, %v4566
    %v4568 = vrot.slane %v4439, 1
    %v4569 = vsel %vm777, %v4566, %v4568
    %v4570 = vrot.slane %v4440, 1
    %v4571 = vsel %vm777, %v4568, %v4570
    %v4572 = vrot.slane %v4441, 1
    %v4573 = vsel %vm777, %v4570, %v4572
    %v4574 = vrot.slane %v4442, 1
    %v4575 = vsel %vm777, %v4572, %v4574
    %v4576 = vrot.slane %v4443, 1
    %v4577 = vsel %vm777, %v4574, %v4576
    %v4578 = vrot.slane %v4444, 1
    %v4579 = vsel %vm777, %v4576, %v4578
    %v4580 = vrot.slane %v4445, 1
    %v4581 = vsel %vm777, %v4578, %v4580
    %v4582 = vrot.slane %v4446, 1
    %v4583 = vsel %vm777, %v4580, %v4582
    %v4584 = vrot.slane %v4447, 1
    %v4585 = vsel %vm777, %v4582, %v4584
    %v4602 = vsel %vm777, %v4584, 0.0
    %v4603 = vmul.f32 %v4557, %v655
    %v4604 = vmul.f32 %v4559, %v656
    %v4605 = vmul.f32 %v4561, %v657
    %v4606 = vmul.f32 %v4563, %v658
    %v4607 = vmul.f32 %v4565, %v659
    %v4608 = vmul.f32 %v4567, %v660
    %v4609 = vmul.f32 %v4569, %v661
    %v4610 = vmul.f32 %v4571, %v662
    %v4611 = vmul.f32 %v4573, %v663
    %v4612 = vmul.f32 %v4575, %v664
    %v4613 = vmul.f32 %v4577, %v665
    %v4614 = vmul.f32 %v4579, %v666
    %v4615 = vmul.f32 %v4581, %v667
    %v4616 = vmul.f32 %v4583, %v668
    %v4617 = vmul.f32 %v4585, %v669
    %v4618 = vmul.f32 %v4602, %v670
    %4619 = vrot.lane.b32.xlu0 %v4432, 64
    %v4620 = vpop.permute.xlu0 %4619
    %4621 = vrot.lane.b32.xlu0 %v4433, 64
    %v4622 = vpop.permute.xlu0 %4621
    %4623 = vrot.lane.b32.xlu0 %v4434, 64
    %v4624 = vpop.permute.xlu0 %4623
    %4625 = vrot.lane.b32.xlu0 %v4435, 64
    %v4626 = vpop.permute.xlu0 %4625
    %4627 = vrot.lane.b32.xlu0 %v4436, 64
    %v4628 = vpop.permute.xlu0 %4627
    %4629 = vrot.lane.b32.xlu0 %v4437, 64
    %v4630 = vpop.permute.xlu0 %4629
    %4631 = vrot.lane.b32.xlu0 %v4438, 64
    %v4632 = vpop.permute.xlu0 %4631
    %4633 = vrot.lane.b32.xlu0 %v4439, 64
    %v4634 = vpop.permute.xlu0 %4633
    %4635 = vrot.lane.b32.xlu0 %v4440, 64
    %v4636 = vpop.permute.xlu0 %4635
    %4637 = vrot.lane.b32.xlu0 %v4441, 64
    %v4638 = vpop.permute.xlu0 %4637
    %4639 = vrot.lane.b32.xlu0 %v4442, 64
    %v4640 = vpop.permute.xlu0 %4639
    %4641 = vrot.lane.b32.xlu0 %v4443, 64
    %v4642 = vpop.permute.xlu0 %4641
    %4643 = vrot.lane.b32.xlu0 %v4444, 64
    %v4644 = vpop.permute.xlu0 %4643
    %4645 = vrot.lane.b32.xlu0 %v4445, 64
    %v4646 = vpop.permute.xlu0 %4645
    %4647 = vrot.lane.b32.xlu0 %v4446, 64
    %v4648 = vpop.permute.xlu0 %4647
    %4649 = vrot.lane.b32.xlu0 %v4447, 64
    %v4650 = vpop.permute.xlu0 %4649
    %v4667 = vsel %vm890, %v4539, %v4620
    %v4668 = vsel %vm890, %v4540, %v4622
    %v4669 = vsel %vm890, %v4541, %v4624
    %v4670 = vsel %vm890, %v4542, %v4626
    %v4671 = vsel %vm890, %v4543, %v4628
    %v4672 = vsel %vm890, %v4544, %v4630
    %v4673 = vsel %vm890, %v4545, %v4632
    %v4674 = vsel %vm890, %v4546, %v4634
    %v4675 = vsel %vm890, %v4547, %v4636
    %v4676 = vsel %vm890, %v4548, %v4638
    %v4677 = vsel %vm890, %v4549, %v4640
    %v4678 = vsel %vm890, %v4550, %v4642
    %v4679 = vsel %vm890, %v4551, %v4644
    %v4680 = vsel %vm890, %v4552, %v4646
    %v4681 = vsel %vm890, %v4553, %v4648
    %v4682 = vsel %vm890, %v4554, %v4650
    %v4683 = vpack.c.bf16 %v4668, %v4667
    %v4684 = vpack.c.bf16 %v4604, %v4603
    %v4685 = vpack.c.bf16 %v4670, %v4669
    %v4686 = vpack.c.bf16 %v4606, %v4605
    %v4687 = vpack.c.bf16 %v4672, %v4671
    %v4688 = vpack.c.bf16 %v4608, %v4607
    %v4689 = vpack.c.bf16 %v4674, %v4673
    %v4690 = vpack.c.bf16 %v4610, %v4609
    %v4691 = vpack.c.bf16 %v4676, %v4675
    %v4692 = vpack.c.bf16 %v4612, %v4611
    %v4693 = vpack.c.bf16 %v4678, %v4677
    %v4694 = vpack.c.bf16 %v4614, %v4613
    %v4695 = vpack.c.bf16 %v4680, %v4679
    %v4696 = vpack.c.bf16 %v4616, %v4615
    %v4697 = vpack.c.bf16 %v4682, %v4681
    %v4698 = vpack.c.bf16 %v4618, %v4617
    %v4700 = vperm.slane %v4474, 0
    %v4726 = vunpack.c.l.b16 %v4449
    %v4727 = vunpack.c.l.b16 %v4450
    %v4728 = vunpack.c.l.b16 %v4451
    %v4729 = vunpack.c.l.b16 %v4452
    %v4730 = vunpack.c.l.b16 %v4453
    %v4731 = vunpack.c.l.b16 %v4454
    %v4732 = vunpack.c.l.b16 %v4455
    %v4733 = vunpack.c.l.b16 %v4456
    %v4734 = vunpack.c.l.b16 %v4457
    %v4735 = vunpack.c.l.b16 %v4458
    %v4736 = vunpack.c.l.b16 %v4459
    %v4737 = vunpack.c.l.b16 %v4460
    %v4738 = vunpack.c.l.b16 %v4461
    %v4739 = vunpack.c.l.b16 %v4462
    %v4740 = vunpack.c.l.b16 %v4463
    %v4741 = vunpack.c.l.b16 %v4464
    %v4742 = vunpack.c.l.b16 %v4465
    %v4743 = vunpack.c.l.b16 %v4466
    %v4744 = vunpack.c.l.b16 %v4467
    %v4745 = vunpack.c.l.b16 %v4468
    %v4746 = vunpack.c.l.b16 %v4469
    %v4747 = vunpack.c.l.b16 %v4470
    %v4748 = vunpack.c.l.b16 %v4471
    %v4749 = vunpack.c.l.b16 %v4472
    %v4750 = vpack.c.b16 %v4727, %v4726
    %v4751 = vpack.c.b16 %v4729, %v4728
    %v4752 = vpack.c.b16 %v4731, %v4730
    %v4753 = vpack.c.b16 %v4733, %v4732
    %v4754 = vpack.c.b16 %v4735, %v4734
    %v4755 = vpack.c.b16 %v4737, %v4736
    %v4756 = vpack.c.b16 %v4739, %v4738
    %v4757 = vpack.c.b16 %v4741, %v4740
    %v4758 = vpack.c.b16 %v4743, %v4742
    %v4759 = vpack.c.b16 %v4745, %v4744
    %v4760 = vpack.c.b16 %v4747, %v4746
    %v4761 = vpack.c.b16 %v4749, %v4748
    %v4775 = vsel %vm890, %v4684, 0
    %v4778 = vsel %vm890, %v4686, 0
    %v4781 = vsel %vm890, %v4688, 0
    %v4784 = vsel %vm890, %v4690, 0
    %v4787 = vsel %vm890, %v4692, 0
    %v4790 = vsel %vm890, %v4694, 0
    %v4793 = vsel %vm890, %v4696, 0
    %v4796 = vsel %vm890, %v4698, 0
    %4798 = vmatpush.bf16.msra.mxu0 %v4757
    %4799 = vmatpush.bf16.msra.mxu0 %v4756
    %4800 = vmatpush.bf16.msra.mxu0 %v4755
    %4801 = vmatpush.bf16.msra.mxu0 %v4754
    %4802 = vmatpush.bf16.msra.mxu0 %v4753
    %4803 = vmatpush.bf16.msra.mxu0 %v4752
    %4804 = vmatpush.bf16.msra.mxu0 %v4751
    %4805 = vmatpush.bf16.msra.mxu0 %v4750
    %4806 = vmatmul.bf16.gmra.mxu0 %v4683
    %v4807 = vpop.f32.mrf.mxu0
    %v4808 = vadd.f32 %v4700, %v4807
    %v4809 = vpop.f32.mrf.mxu0
    %v4810 = vadd.f32 %v4700, %v4809
    %4811 = vmatmul.bf16.gmra.mxu0 %v4685
    %v4812 = vpop.f32.mrf.mxu0
    %v4813 = vadd.f32 %v4700, %v4812
    %v4814 = vpop.f32.mrf.mxu0
    %v4815 = vadd.f32 %v4700, %v4814
    %4816 = vmatmul.bf16.gmra.mxu0 %v4687
    %v4817 = vpop.f32.mrf.mxu0
    %v4818 = vadd.f32 %v4700, %v4817
    %v4819 = vpop.f32.mrf.mxu0
    %v4820 = vadd.f32 %v4700, %v4819
    %4821 = vmatmul.bf16.gmra.mxu0 %v4689
    %v4822 = vpop.f32.mrf.mxu0
    %v4823 = vadd.f32 %v4700, %v4822
    %v4824 = vpop.f32.mrf.mxu0
    %v4825 = vadd.f32 %v4700, %v4824
    %4826 = vmatmul.bf16.gmra.mxu0 %v4691
    %v4827 = vpop.f32.mrf.mxu0
    %v4828 = vadd.f32 %v4700, %v4827
    %v4829 = vpop.f32.mrf.mxu0
    %v4830 = vadd.f32 %v4700, %v4829
    %4831 = vmatmul.bf16.gmra.mxu0 %v4693
    %v4832 = vpop.f32.mrf.mxu0
    %v4833 = vadd.f32 %v4700, %v4832
    %v4834 = vpop.f32.mrf.mxu0
    %v4835 = vadd.f32 %v4700, %v4834
    %4836 = vmatmul.bf16.gmra.mxu0 %v4695
    %v4837 = vpop.f32.mrf.mxu0
    %v4838 = vadd.f32 %v4700, %v4837
    %v4839 = vpop.f32.mrf.mxu0
    %v4840 = vadd.f32 %v4700, %v4839
    %4841 = vmatmul.bf16.gmra.mxu0 %v4697
    %v4842 = vpop.f32.mrf.mxu0
    %v4843 = vadd.f32 %v4700, %v4842
    %v4844 = vpop.f32.mrf.mxu0
    %v4845 = vadd.f32 %v4700, %v4844
    %4846 = vdwg.mxu0
    %4847 = vmatpush.bf16.msra.mxu0 0
    %4848 = vmatpush.bf16.msra.mxu0 0
    %4849 = vmatpush.bf16.msra.mxu0 0
    %4850 = vmatpush.bf16.msra.mxu0 0
    %4851 = vmatpush.bf16.msra.mxu0 %v4761
    %4852 = vmatpush.bf16.msra.mxu0 %v4760
    %4853 = vmatpush.bf16.msra.mxu0 %v4759
    %4854 = vmatpush.bf16.msra.mxu0 %v4758
    %4855 = vmatmul.bf16.gmra.mxu0 %v4775
    %v4856 = vpop.f32.mrf.mxu0
    %v4857 = vadd.f32 %v4808, %v4856
    %v4858 = vpop.f32.mrf.mxu0
    %v4859 = vadd.f32 %v4810, %v4858
    %4860 = vmatmul.bf16.gmra.mxu0 %v4778
    %v4861 = vpop.f32.mrf.mxu0
    %v4862 = vadd.f32 %v4813, %v4861
    %v4863 = vpop.f32.mrf.mxu0
    %v4864 = vadd.f32 %v4815, %v4863
    %4865 = vmatmul.bf16.gmra.mxu0 %v4781
    %v4866 = vpop.f32.mrf.mxu0
    %v4867 = vadd.f32 %v4818, %v4866
    %v4868 = vpop.f32.mrf.mxu0
    %v4869 = vadd.f32 %v4820, %v4868
    %4870 = vmatmul.bf16.gmra.mxu0 %v4784
    %v4871 = vpop.f32.mrf.mxu0
    %v4872 = vadd.f32 %v4823, %v4871
    %v4873 = vpop.f32.mrf.mxu0
    %v4874 = vadd.f32 %v4825, %v4873
    %4875 = vmatmul.bf16.gmra.mxu0 %v4787
    %v4876 = vpop.f32.mrf.mxu0
    %v4877 = vadd.f32 %v4828, %v4876
    %v4878 = vpop.f32.mrf.mxu0
    %v4879 = vadd.f32 %v4830, %v4878
    %4880 = vmatmul.bf16.gmra.mxu0 %v4790
    %v4881 = vpop.f32.mrf.mxu0
    %v4882 = vadd.f32 %v4833, %v4881
    %v4883 = vpop.f32.mrf.mxu0
    %v4884 = vadd.f32 %v4835, %v4883
    %4885 = vmatmul.bf16.gmra.mxu0 %v4793
    %v4886 = vpop.f32.mrf.mxu0
    %v4887 = vadd.f32 %v4838, %v4886
    %v4888 = vpop.f32.mrf.mxu0
    %v4889 = vadd.f32 %v4840, %v4888
    %4890 = vmatmul.bf16.gmra.mxu0 %v4796
    %v4891 = vpop.f32.mrf.mxu0
    %v4892 = vadd.f32 %v4843, %v4891
    %v4893 = vpop.f32.mrf.mxu0
    %v4894 = vadd.f32 %v4845, %v4893
    %4895 = vdwg.mxu0
    %v4896 = vmax.f32 %v4857, 0.0
    %v4897 = vmax.f32 %v4859, 0.0
    %v4898 = vmax.f32 %v4862, 0.0
    %v4899 = vmax.f32 %v4864, 0.0
    %v4900 = vmax.f32 %v4867, 0.0
    %v4901 = vmax.f32 %v4869, 0.0
    %v4902 = vmax.f32 %v4872, 0.0
    %v4903 = vmax.f32 %v4874, 0.0
    %v4904 = vmax.f32 %v4877, 0.0
    %v4905 = vmax.f32 %v4879, 0.0
    %v4906 = vmax.f32 %v4882, 0.0
    %v4907 = vmax.f32 %v4884, 0.0
    %v4908 = vmax.f32 %v4887, 0.0
    %v4909 = vmax.f32 %v4889, 0.0
    %v4910 = vmax.f32 %v4892, 0.0
    %v4911 = vmax.f32 %v4894, 0.0
    %s4912 = scalar_lea.vmem %s3, 864
    %v4913 = vld [vmem:[%s4912] sm:$0xf]
    %v4914 = vld [vmem:[%s4912 + $0x4] sm:$0xf]
    %v4915 = vld [vmem:[%s4912 + $0x8] sm:$0xf]
    %v4916 = vld [vmem:[%s4912 + $0xc] sm:$0xf]
    %v4917 = vld [vmem:[%s4912 + $0x10] sm:$0xf]
    %v4918 = vld [vmem:[%s4912 + $0x14] sm:$0xf]
    %v4919 = vld [vmem:[%s4912 + $0x18] sm:$0xf]
    %v4920 = vld [vmem:[%s4912 + $0x1c] sm:$0xf]
    %v4921 = vld [vmem:[%s4912 + $0x20] sm:$0xf]
    %v4922 = vld [vmem:[%s4912 + $0x24] sm:$0xf]
    %v4923 = vld [vmem:[%s4912 + $0x28] sm:$0xf]
    %v4924 = vld [vmem:[%s4912 + $0x2c] sm:$0xf]
    %v4925 = vld [vmem:[%s4912 + $0x30] sm:$0xf]
    %v4926 = vld [vmem:[%s4912 + $0x34] sm:$0xf]
    %v4927 = vld [vmem:[%s4912 + $0x38] sm:$0xf]
    %v4928 = vld [vmem:[%s4912 + $0x3c] sm:$0xf]
    %v4929 = vld [vmem:[%s4912 + $0x40] sm:$0xf]
    %v4930 = vld [vmem:[%s4912 + $0x44] sm:$0xf]
    %v4931 = vld [vmem:[%s4912 + $0x48] sm:$0xf]
    %v4932 = vld [vmem:[%s4912 + $0x4c] sm:$0xf]
    %v4933 = vld [vmem:[%s4912 + $0x50] sm:$0xf]
    %v4934 = vld [vmem:[%s4912 + $0x54] sm:$0xf]
    %v4935 = vld [vmem:[%s4912 + $0x58] sm:$0xf]
    %v4936 = vld [vmem:[%s4912 + $0x5c] sm:$0xf]
    %s4937 = scalar_lea.vmem %s4, 9
    %v4938 = vld [vmem:[%s4937] sm:$0x1]
    %v4955 = vrot.slane %v4896, 7
    %v4956 = vrot.slane %v4897, 7
    %v4957 = vsel %vm712, %v4955, %v4956
    %v4958 = vrot.slane %v4898, 7
    %v4959 = vsel %vm712, %v4956, %v4958
    %v4960 = vrot.slane %v4899, 7
    %v4961 = vsel %vm712, %v4958, %v4960
    %v4962 = vrot.slane %v4900, 7
    %v4963 = vsel %vm712, %v4960, %v4962
    %v4964 = vrot.slane %v4901, 7
    %v4965 = vsel %vm712, %v4962, %v4964
    %v4966 = vrot.slane %v4902, 7
    %v4967 = vsel %vm712, %v4964, %v4966
    %v4968 = vrot.slane %v4903, 7
    %v4969 = vsel %vm712, %v4966, %v4968
    %v4970 = vrot.slane %v4904, 7
    %v4971 = vsel %vm712, %v4968, %v4970
    %v4972 = vrot.slane %v4905, 7
    %v4973 = vsel %vm712, %v4970, %v4972
    %v4974 = vrot.slane %v4906, 7
    %v4975 = vsel %vm712, %v4972, %v4974
    %v4976 = vrot.slane %v4907, 7
    %v4977 = vsel %vm712, %v4974, %v4976
    %v4978 = vrot.slane %v4908, 7
    %v4979 = vsel %vm712, %v4976, %v4978
    %v4980 = vrot.slane %v4909, 7
    %v4981 = vsel %vm712, %v4978, %v4980
    %v4982 = vrot.slane %v4910, 7
    %v4983 = vsel %vm712, %v4980, %v4982
    %v4984 = vrot.slane %v4911, 7
    %v4985 = vsel %vm712, %v4982, %v4984
    %v5002 = vsel %vm712, 0.0, %v4955
    %v5003 = vmul.f32 %v5002, %v607
    %v5004 = vmul.f32 %v4957, %v608
    %v5005 = vmul.f32 %v4959, %v609
    %v5006 = vmul.f32 %v4961, %v610
    %v5007 = vmul.f32 %v4963, %v611
    %v5008 = vmul.f32 %v4965, %v612
    %v5009 = vmul.f32 %v4967, %v613
    %v5010 = vmul.f32 %v4969, %v614
    %v5011 = vmul.f32 %v4971, %v615
    %v5012 = vmul.f32 %v4973, %v616
    %v5013 = vmul.f32 %v4975, %v617
    %v5014 = vmul.f32 %v4977, %v618
    %v5015 = vmul.f32 %v4979, %v619
    %v5016 = vmul.f32 %v4981, %v620
    %v5017 = vmul.f32 %v4983, %v621
    %v5018 = vmul.f32 %v4985, %v622
    %v5019 = vrot.slane %v4896, 1
    %v5020 = vrot.slane %v4897, 1
    %v5021 = vsel %vm777, %v5019, %v5020
    %v5022 = vrot.slane %v4898, 1
    %v5023 = vsel %vm777, %v5020, %v5022
    %v5024 = vrot.slane %v4899, 1
    %v5025 = vsel %vm777, %v5022, %v5024
    %v5026 = vrot.slane %v4900, 1
    %v5027 = vsel %vm777, %v5024, %v5026
    %v5028 = vrot.slane %v4901, 1
    %v5029 = vsel %vm777, %v5026, %v5028
    %v5030 = vrot.slane %v4902, 1
    %v5031 = vsel %vm777, %v5028, %v5030
    %v5032 = vrot.slane %v4903, 1
    %v5033 = vsel %vm777, %v5030, %v5032
    %v5034 = vrot.slane %v4904, 1
    %v5035 = vsel %vm777, %v5032, %v5034
    %v5036 = vrot.slane %v4905, 1
    %v5037 = vsel %vm777, %v5034, %v5036
    %v5038 = vrot.slane %v4906, 1
    %v5039 = vsel %vm777, %v5036, %v5038
    %v5040 = vrot.slane %v4907, 1
    %v5041 = vsel %vm777, %v5038, %v5040
    %v5042 = vrot.slane %v4908, 1
    %v5043 = vsel %vm777, %v5040, %v5042
    %v5044 = vrot.slane %v4909, 1
    %v5045 = vsel %vm777, %v5042, %v5044
    %v5046 = vrot.slane %v4910, 1
    %v5047 = vsel %vm777, %v5044, %v5046
    %v5048 = vrot.slane %v4911, 1
    %v5049 = vsel %vm777, %v5046, %v5048
    %v5066 = vsel %vm777, %v5048, 0.0
    %v5067 = vmul.f32 %v5021, %v655
    %v5068 = vmul.f32 %v5023, %v656
    %v5069 = vmul.f32 %v5025, %v657
    %v5070 = vmul.f32 %v5027, %v658
    %v5071 = vmul.f32 %v5029, %v659
    %v5072 = vmul.f32 %v5031, %v660
    %v5073 = vmul.f32 %v5033, %v661
    %v5074 = vmul.f32 %v5035, %v662
    %v5075 = vmul.f32 %v5037, %v663
    %v5076 = vmul.f32 %v5039, %v664
    %v5077 = vmul.f32 %v5041, %v665
    %v5078 = vmul.f32 %v5043, %v666
    %v5079 = vmul.f32 %v5045, %v667
    %v5080 = vmul.f32 %v5047, %v668
    %v5081 = vmul.f32 %v5049, %v669
    %v5082 = vmul.f32 %v5066, %v670
    %5083 = vrot.lane.b32.xlu0 %v4896, 64
    %v5084 = vpop.permute.xlu0 %5083
    %5085 = vrot.lane.b32.xlu0 %v4897, 64
    %v5086 = vpop.permute.xlu0 %5085
    %5087 = vrot.lane.b32.xlu0 %v4898, 64
    %v5088 = vpop.permute.xlu0 %5087
    %5089 = vrot.lane.b32.xlu0 %v4899, 64
    %v5090 = vpop.permute.xlu0 %5089
    %5091 = vrot.lane.b32.xlu0 %v4900, 64
    %v5092 = vpop.permute.xlu0 %5091
    %5093 = vrot.lane.b32.xlu0 %v4901, 64
    %v5094 = vpop.permute.xlu0 %5093
    %5095 = vrot.lane.b32.xlu0 %v4902, 64
    %v5096 = vpop.permute.xlu0 %5095
    %5097 = vrot.lane.b32.xlu0 %v4903, 64
    %v5098 = vpop.permute.xlu0 %5097
    %5099 = vrot.lane.b32.xlu0 %v4904, 64
    %v5100 = vpop.permute.xlu0 %5099
    %5101 = vrot.lane.b32.xlu0 %v4905, 64
    %v5102 = vpop.permute.xlu0 %5101
    %5103 = vrot.lane.b32.xlu0 %v4906, 64
    %v5104 = vpop.permute.xlu0 %5103
    %5105 = vrot.lane.b32.xlu0 %v4907, 64
    %v5106 = vpop.permute.xlu0 %5105
    %5107 = vrot.lane.b32.xlu0 %v4908, 64
    %v5108 = vpop.permute.xlu0 %5107
    %5109 = vrot.lane.b32.xlu0 %v4909, 64
    %v5110 = vpop.permute.xlu0 %5109
    %5111 = vrot.lane.b32.xlu0 %v4910, 64
    %v5112 = vpop.permute.xlu0 %5111
    %5113 = vrot.lane.b32.xlu0 %v4911, 64
    %v5114 = vpop.permute.xlu0 %5113
    %v5131 = vsel %vm890, %v5003, %v5084
    %v5132 = vsel %vm890, %v5004, %v5086
    %v5133 = vsel %vm890, %v5005, %v5088
    %v5134 = vsel %vm890, %v5006, %v5090
    %v5135 = vsel %vm890, %v5007, %v5092
    %v5136 = vsel %vm890, %v5008, %v5094
    %v5137 = vsel %vm890, %v5009, %v5096
    %v5138 = vsel %vm890, %v5010, %v5098
    %v5139 = vsel %vm890, %v5011, %v5100
    %v5140 = vsel %vm890, %v5012, %v5102
    %v5141 = vsel %vm890, %v5013, %v5104
    %v5142 = vsel %vm890, %v5014, %v5106
    %v5143 = vsel %vm890, %v5015, %v5108
    %v5144 = vsel %vm890, %v5016, %v5110
    %v5145 = vsel %vm890, %v5017, %v5112
    %v5146 = vsel %vm890, %v5018, %v5114
    %v5147 = vpack.c.bf16 %v5132, %v5131
    %v5148 = vpack.c.bf16 %v5068, %v5067
    %v5149 = vpack.c.bf16 %v5134, %v5133
    %v5150 = vpack.c.bf16 %v5070, %v5069
    %v5151 = vpack.c.bf16 %v5136, %v5135
    %v5152 = vpack.c.bf16 %v5072, %v5071
    %v5153 = vpack.c.bf16 %v5138, %v5137
    %v5154 = vpack.c.bf16 %v5074, %v5073
    %v5155 = vpack.c.bf16 %v5140, %v5139
    %v5156 = vpack.c.bf16 %v5076, %v5075
    %v5157 = vpack.c.bf16 %v5142, %v5141
    %v5158 = vpack.c.bf16 %v5078, %v5077
    %v5159 = vpack.c.bf16 %v5144, %v5143
    %v5160 = vpack.c.bf16 %v5080, %v5079
    %v5161 = vpack.c.bf16 %v5146, %v5145
    %v5162 = vpack.c.bf16 %v5082, %v5081
    %v5164 = vperm.slane %v4938, 0
    %v5190 = vunpack.c.l.b16 %v4913
    %v5191 = vunpack.c.l.b16 %v4914
    %v5192 = vunpack.c.l.b16 %v4915
    %v5193 = vunpack.c.l.b16 %v4916
    %v5194 = vunpack.c.l.b16 %v4917
    %v5195 = vunpack.c.l.b16 %v4918
    %v5196 = vunpack.c.l.b16 %v4919
    %v5197 = vunpack.c.l.b16 %v4920
    %v5198 = vunpack.c.l.b16 %v4921
    %v5199 = vunpack.c.l.b16 %v4922
    %v5200 = vunpack.c.l.b16 %v4923
    %v5201 = vunpack.c.l.b16 %v4924
    %v5202 = vunpack.c.l.b16 %v4925
    %v5203 = vunpack.c.l.b16 %v4926
    %v5204 = vunpack.c.l.b16 %v4927
    %v5205 = vunpack.c.l.b16 %v4928
    %v5206 = vunpack.c.l.b16 %v4929
    %v5207 = vunpack.c.l.b16 %v4930
    %v5208 = vunpack.c.l.b16 %v4931
    %v5209 = vunpack.c.l.b16 %v4932
    %v5210 = vunpack.c.l.b16 %v4933
    %v5211 = vunpack.c.l.b16 %v4934
    %v5212 = vunpack.c.l.b16 %v4935
    %v5213 = vunpack.c.l.b16 %v4936
    %v5214 = vpack.c.b16 %v5191, %v5190
    %v5215 = vpack.c.b16 %v5193, %v5192
    %v5216 = vpack.c.b16 %v5195, %v5194
    %v5217 = vpack.c.b16 %v5197, %v5196
    %v5218 = vpack.c.b16 %v5199, %v5198
    %v5219 = vpack.c.b16 %v5201, %v5200
    %v5220 = vpack.c.b16 %v5203, %v5202
    %v5221 = vpack.c.b16 %v5205, %v5204
    %v5222 = vpack.c.b16 %v5207, %v5206
    %v5223 = vpack.c.b16 %v5209, %v5208
    %v5224 = vpack.c.b16 %v5211, %v5210
    %v5225 = vpack.c.b16 %v5213, %v5212
    %v5239 = vsel %vm890, %v5148, 0
    %v5242 = vsel %vm890, %v5150, 0
    %v5245 = vsel %vm890, %v5152, 0
    %v5248 = vsel %vm890, %v5154, 0
    %v5251 = vsel %vm890, %v5156, 0
    %v5254 = vsel %vm890, %v5158, 0
    %v5257 = vsel %vm890, %v5160, 0
    %v5260 = vsel %vm890, %v5162, 0
    %5262 = vmatpush.bf16.msra.mxu0 %v5221
    %5263 = vmatpush.bf16.msra.mxu0 %v5220
    %5264 = vmatpush.bf16.msra.mxu0 %v5219
    %5265 = vmatpush.bf16.msra.mxu0 %v5218
    %5266 = vmatpush.bf16.msra.mxu0 %v5217
    %5267 = vmatpush.bf16.msra.mxu0 %v5216
    %5268 = vmatpush.bf16.msra.mxu0 %v5215
    %5269 = vmatpush.bf16.msra.mxu0 %v5214
    %5270 = vmatmul.bf16.gmra.mxu0 %v5147
    %v5271 = vpop.f32.mrf.mxu0
    %v5272 = vadd.f32 %v5164, %v5271
    %v5273 = vpop.f32.mrf.mxu0
    %v5274 = vadd.f32 %v5164, %v5273
    %5275 = vmatmul.bf16.gmra.mxu0 %v5149
    %v5276 = vpop.f32.mrf.mxu0
    %v5277 = vadd.f32 %v5164, %v5276
    %v5278 = vpop.f32.mrf.mxu0
    %v5279 = vadd.f32 %v5164, %v5278
    %5280 = vmatmul.bf16.gmra.mxu0 %v5151
    %v5281 = vpop.f32.mrf.mxu0
    %v5282 = vadd.f32 %v5164, %v5281
    %v5283 = vpop.f32.mrf.mxu0
    %v5284 = vadd.f32 %v5164, %v5283
    %5285 = vmatmul.bf16.gmra.mxu0 %v5153
    %v5286 = vpop.f32.mrf.mxu0
    %v5287 = vadd.f32 %v5164, %v5286
    %v5288 = vpop.f32.mrf.mxu0
    %v5289 = vadd.f32 %v5164, %v5288
    %5290 = vmatmul.bf16.gmra.mxu0 %v5155
    %v5291 = vpop.f32.mrf.mxu0
    %v5292 = vadd.f32 %v5164, %v5291
    %v5293 = vpop.f32.mrf.mxu0
    %v5294 = vadd.f32 %v5164, %v5293
    %5295 = vmatmul.bf16.gmra.mxu0 %v5157
    %v5296 = vpop.f32.mrf.mxu0
    %v5297 = vadd.f32 %v5164, %v5296
    %v5298 = vpop.f32.mrf.mxu0
    %v5299 = vadd.f32 %v5164, %v5298
    %5300 = vmatmul.bf16.gmra.mxu0 %v5159
    %v5301 = vpop.f32.mrf.mxu0
    %v5302 = vadd.f32 %v5164, %v5301
    %v5303 = vpop.f32.mrf.mxu0
    %v5304 = vadd.f32 %v5164, %v5303
    %5305 = vmatmul.bf16.gmra.mxu0 %v5161
    %v5306 = vpop.f32.mrf.mxu0
    %v5307 = vadd.f32 %v5164, %v5306
    %v5308 = vpop.f32.mrf.mxu0
    %v5309 = vadd.f32 %v5164, %v5308
    %5310 = vdwg.mxu0
    %5311 = vmatpush.bf16.msra.mxu0 0
    %5312 = vmatpush.bf16.msra.mxu0 0
    %5313 = vmatpush.bf16.msra.mxu0 0
    %5314 = vmatpush.bf16.msra.mxu0 0
    %5315 = vmatpush.bf16.msra.mxu0 %v5225
    %5316 = vmatpush.bf16.msra.mxu0 %v5224
    %5317 = vmatpush.bf16.msra.mxu0 %v5223
    %5318 = vmatpush.bf16.msra.mxu0 %v5222
    %5319 = vmatmul.bf16.gmra.mxu0 %v5239
    %v5320 = vpop.f32.mrf.mxu0
    %v5321 = vadd.f32 %v5272, %v5320
    %v5322 = vpop.f32.mrf.mxu0
    %v5323 = vadd.f32 %v5274, %v5322
    %5324 = vmatmul.bf16.gmra.mxu0 %v5242
    %v5325 = vpop.f32.mrf.mxu0
    %v5326 = vadd.f32 %v5277, %v5325
    %v5327 = vpop.f32.mrf.mxu0
    %v5328 = vadd.f32 %v5279, %v5327
    %5329 = vmatmul.bf16.gmra.mxu0 %v5245
    %v5330 = vpop.f32.mrf.mxu0
    %v5331 = vadd.f32 %v5282, %v5330
    %v5332 = vpop.f32.mrf.mxu0
    %v5333 = vadd.f32 %v5284, %v5332
    %5334 = vmatmul.bf16.gmra.mxu0 %v5248
    %v5335 = vpop.f32.mrf.mxu0
    %v5336 = vadd.f32 %v5287, %v5335
    %v5337 = vpop.f32.mrf.mxu0
    %v5338 = vadd.f32 %v5289, %v5337
    %5339 = vmatmul.bf16.gmra.mxu0 %v5251
    %v5340 = vpop.f32.mrf.mxu0
    %v5341 = vadd.f32 %v5292, %v5340
    %v5342 = vpop.f32.mrf.mxu0
    %v5343 = vadd.f32 %v5294, %v5342
    %5344 = vmatmul.bf16.gmra.mxu0 %v5254
    %v5345 = vpop.f32.mrf.mxu0
    %v5346 = vadd.f32 %v5297, %v5345
    %v5347 = vpop.f32.mrf.mxu0
    %v5348 = vadd.f32 %v5299, %v5347
    %5349 = vmatmul.bf16.gmra.mxu0 %v5257
    %v5350 = vpop.f32.mrf.mxu0
    %v5351 = vadd.f32 %v5302, %v5350
    %v5352 = vpop.f32.mrf.mxu0
    %v5353 = vadd.f32 %v5304, %v5352
    %5354 = vmatmul.bf16.gmra.mxu0 %v5260
    %v5355 = vpop.f32.mrf.mxu0
    %v5356 = vadd.f32 %v5307, %v5355
    %v5357 = vpop.f32.mrf.mxu0
    %v5358 = vadd.f32 %v5309, %v5357
    %5359 = vdwg.mxu0
    %v5360 = vadd.f32 %v5321, %v4432
    %v5361 = vadd.f32 %v5323, %v4433
    %v5362 = vadd.f32 %v5326, %v4434
    %v5363 = vadd.f32 %v5328, %v4435
    %v5364 = vadd.f32 %v5331, %v4436
    %v5365 = vadd.f32 %v5333, %v4437
    %v5366 = vadd.f32 %v5336, %v4438
    %v5367 = vadd.f32 %v5338, %v4439
    %v5368 = vadd.f32 %v5341, %v4440
    %v5369 = vadd.f32 %v5343, %v4441
    %v5370 = vadd.f32 %v5346, %v4442
    %v5371 = vadd.f32 %v5348, %v4443
    %v5372 = vadd.f32 %v5351, %v4444
    %v5373 = vadd.f32 %v5353, %v4445
    %v5374 = vadd.f32 %v5356, %v4446
    %v5375 = vadd.f32 %v5358, %v4447
    %v5376 = vmax.f32 %v5360, 0.0
    %v5377 = vmax.f32 %v5361, 0.0
    %v5378 = vmax.f32 %v5362, 0.0
    %v5379 = vmax.f32 %v5363, 0.0
    %v5380 = vmax.f32 %v5364, 0.0
    %v5381 = vmax.f32 %v5365, 0.0
    %v5382 = vmax.f32 %v5366, 0.0
    %v5383 = vmax.f32 %v5367, 0.0
    %v5384 = vmax.f32 %v5368, 0.0
    %v5385 = vmax.f32 %v5369, 0.0
    %v5386 = vmax.f32 %v5370, 0.0
    %v5387 = vmax.f32 %v5371, 0.0
    %v5388 = vmax.f32 %v5372, 0.0
    %v5389 = vmax.f32 %v5373, 0.0
    %v5390 = vmax.f32 %v5374, 0.0
    %v5391 = vmax.f32 %v5375, 0.0
    %v5392 = vsel %vm890, %v5376, 0.0
    %v5393 = vsel %vm890, %v5377, 0.0
    %v5394 = vadd.f32 %v5392, %v5393
    %v5395 = vrot.slane %v5394, 4
    %v5396 = vadd.f32 %v5394, %v5395
    %v5397 = vrot.slane %v5396, 2
    %v5398 = vadd.f32 %v5396, %v5397
    %v5399 = vrot.slane %v5398, 1
    %v5400 = vadd.f32 %v5398, %v5399
    %v5401 = vsel %vm890, %v5378, 0.0
    %v5402 = vsel %vm890, %v5379, 0.0
    %v5403 = vadd.f32 %v5401, %v5402
    %v5404 = vrot.slane %v5403, 4
    %v5405 = vadd.f32 %v5403, %v5404
    %v5406 = vrot.slane %v5405, 2
    %v5407 = vadd.f32 %v5405, %v5406
    %v5408 = vrot.slane %v5407, 1
    %v5409 = vadd.f32 %v5407, %v5408
    %v5410 = vsel %vm890, %v5380, 0.0
    %v5411 = vsel %vm890, %v5381, 0.0
    %v5412 = vadd.f32 %v5410, %v5411
    %v5413 = vrot.slane %v5412, 4
    %v5414 = vadd.f32 %v5412, %v5413
    %v5415 = vrot.slane %v5414, 2
    %v5416 = vadd.f32 %v5414, %v5415
    %v5417 = vrot.slane %v5416, 1
    %v5418 = vadd.f32 %v5416, %v5417
    %v5419 = vsel %vm890, %v5382, 0.0
    %v5420 = vsel %vm890, %v5383, 0.0
    %v5421 = vadd.f32 %v5419, %v5420
    %v5422 = vrot.slane %v5421, 4
    %v5423 = vadd.f32 %v5421, %v5422
    %v5424 = vrot.slane %v5423, 2
    %v5425 = vadd.f32 %v5423, %v5424
    %v5426 = vrot.slane %v5425, 1
    %v5427 = vadd.f32 %v5425, %v5426
    %v5428 = vsel %vm890, %v5384, 0.0
    %v5429 = vsel %vm890, %v5385, 0.0
    %v5430 = vadd.f32 %v5428, %v5429
    %v5431 = vrot.slane %v5430, 4
    %v5432 = vadd.f32 %v5430, %v5431
    %v5433 = vrot.slane %v5432, 2
    %v5434 = vadd.f32 %v5432, %v5433
    %v5435 = vrot.slane %v5434, 1
    %v5436 = vadd.f32 %v5434, %v5435
    %v5437 = vsel %vm890, %v5386, 0.0
    %v5438 = vsel %vm890, %v5387, 0.0
    %v5439 = vadd.f32 %v5437, %v5438
    %v5440 = vrot.slane %v5439, 4
    %v5441 = vadd.f32 %v5439, %v5440
    %v5442 = vrot.slane %v5441, 2
    %v5443 = vadd.f32 %v5441, %v5442
    %v5444 = vrot.slane %v5443, 1
    %v5445 = vadd.f32 %v5443, %v5444
    %v5446 = vsel %vm890, %v5388, 0.0
    %v5447 = vsel %vm890, %v5389, 0.0
    %v5448 = vadd.f32 %v5446, %v5447
    %v5449 = vrot.slane %v5448, 4
    %v5450 = vadd.f32 %v5448, %v5449
    %v5451 = vrot.slane %v5450, 2
    %v5452 = vadd.f32 %v5450, %v5451
    %v5453 = vrot.slane %v5452, 1
    %v5454 = vadd.f32 %v5452, %v5453
    %v5455 = vsel %vm890, %v5390, 0.0
    %v5456 = vsel %vm890, %v5391, 0.0
    %v5457 = vadd.f32 %v5455, %v5456
    %v5458 = vrot.slane %v5457, 4
    %v5459 = vadd.f32 %v5457, %v5458
    %v5460 = vrot.slane %v5459, 2
    %v5461 = vadd.f32 %v5459, %v5460
    %v5462 = vrot.slane %v5461, 1
    %v5463 = vadd.f32 %v5461, %v5462
    %v5464 = vmul.f32 %v5400, 0.0625
    %v5465 = vmul.f32 %v5409, 0.0625
    %v5466 = vmul.f32 %v5418, 0.0625
    %v5467 = vmul.f32 %v5427, 0.0625
    %v5468 = vmul.f32 %v5436, 0.0625
    %v5469 = vmul.f32 %v5445, 0.0625
    %v5470 = vmul.f32 %v5454, 0.0625
    %v5471 = vmul.f32 %v5463, 0.0625
    %vm5480 = vcmask 1041409
    %v5481 = vsel %vm5480, %v5465, %v5464
    %vm5482 = vcmask 1042434
    %v5483 = vsel %vm5482, %v5466, %v5481
    %vm5484 = vcmask 1043459
    %v5485 = vsel %vm5484, %v5467, %v5483
    %vm5486 = vcmask 1044484
    %v5487 = vsel %vm5486, %v5468, %v5485
    %vm5488 = vcmask 1045509
    %v5489 = vsel %vm5488, %v5469, %v5487
    %vm5490 = vcmask 1046534
    %v5491 = vsel %vm5490, %v5470, %v5489
    %vm5492 = vcmask 1047559
    %v5493 = vsel %vm5492, %v5471, %v5491
    %5495 = vst.msk [vmem:[#allocation2] sm:$0xff] %vm890, %v5493
    // Predicated region
    $region22: #{tpu_custom_call.1} parent=1 // pred_check
      _
    $region23: #{tpu_custom_call.1} parent=1 // pred_check_branch
      %5497 = sbr.rel (0) target = $region25
    $region24: #{tpu_custom_call.1} parent=1 // pred_region
      %5499 = vsyncadd [#allocation3], 0
      %s5501 = sshll.u32 [#allocation2], 4
      %s5502 = int_to_ptr.vmem [resolvable:$true] %s5501
      %s5503 = sshll.u32 %s5, 4
      %s5504 = int_to_ptr.hbm [resolvable:$true] %s5503
      %5506 = dma.vmem_to_hbm [thread:$0]  %s5502, 128, %s5504, [#allocation3]
    $region25: #{tpu_custom_call.1} parent=1 // pred_fallthru
      _
    // Predicated region
    $region26: #{tpu_custom_call.1} parent=1 // pred_check
      _
    $region27: #{tpu_custom_call.1} parent=1 // pred_check_branch
      %5508 = sbr.rel (0) target = $region29
    $region28: #{tpu_custom_call.1} parent=1 // pred_region
      %5510 = dma.done [#allocation3], 128
    $region29: #{tpu_custom_call.1} parent=1 // pred_fallthru
      _
    %5511 = vsyncpa [#allocation3], 1

</llo_original>
